<compile_context>
chip_gen: v7x
topology: tpu7x:2x2x1
jax: 0.10.0
libtpu: 0.0.40
codegen_flags: <defaults>
</compile_context>

<pallas_src>
import jax
import jax.numpy as jnp
from jax.experimental import pallas as pl
from jax.experimental.pallas import tpu as pltpu


def _round_up(x, m):
    return ((x + m - 1) // m) * m


def _vmem_budget():
    """Generation-aware VMEM sizing: (pipeline working-set budget, scoped limit).

    128-MiB-VMEM parts (v5e/v6e): ~64 MiB working set, 100 MiB scoped limit.
    64-MiB parts (v7x) / unknown: 24 MiB working set, 48 MiB scoped limit.
    """
    try:
        cap = int(pltpu.get_tpu_info().vmem_capacity_bytes)
    except Exception:
        cap = 64 * 1024 * 1024
    if cap >= 100 * 1024 * 1024:
        return 64 * 1024 * 1024, 100 * 1024 * 1024
    return 24 * 1024 * 1024, 48 * 1024 * 1024


def _pick_tiles(n, f_pad, budget_bytes):
    """Pick (TM, TK, N_pad): balanced power-of-two dst/src tiles whose
    double-buffered pipeline working set fits the VMEM budget.

    Working-set accounting (review fix): the (TM, 1) inv-degree block lane-pads
    to (TM, 128) in VMEM; adjacency is int8, XW is bf16; base and out tiles are
    f32 and double-buffered. TM/TK start at 128, so the int8 (32,128) and bf16
    (16,128) minimum tilings are always satisfied (no TM=8/16 fallbacks).
    """
    n128 = _round_up(n, 128)

    def working_set(tm, tk):
        return (2 * tm * tk * 1            # int8 adjacency tile   (x2 pipeline buffers)
                + 2 * tk * f_pad * 2       # bf16 XW tile          (x2)
                + 2 * tm * 128 * 4         # (TM,1) inv-degree tile lane-pads to 128
                + 2 * tm * f_pad * 4       # f32 base tile         (x2)
                + 2 * tm * f_pad * 4)      # f32 out tile          (x2)

    # Keep >= 2 dst tiles whenever possible so v7x's 2nd TensorCore has work
    # (the dst axis is the "parallel" one). Cheap on single-TC parts.
    tm_cap = n128 // 2 if n128 >= 256 else n128

    # Grow TM / TK together (double the smaller, ties -> TK) until neither the
    # budget nor the array extent allows another doubling.
    tm, tk = 128, 128
    while True:
        can_tk = tk * 2 <= n128 and working_set(tm, tk * 2) <= budget_bytes
        can_tm = tm * 2 <= tm_cap and working_set(tm * 2, tk) <= budget_bytes
        if can_tk and (tk <= tm or not can_tm):
            tk *= 2
        elif can_tm:
            tm *= 2
        else:
            break

    n_pad = _round_up(n, max(tm, tk))      # power-of-two tiles -> divides both
    return tm, tk, n_pad


def _rgcn_kernel(a_ref, xw_ref, inv_ref, base_ref, out_ref):
    """grid = (dst_tiles [parallel], relations, src_tiles) [reductions, innermost]."""
    r = pl.program_id(1)
    k = pl.program_id(2)

    @pl.when(jnp.logical_and(r == 0, k == 0))
    def _():
        # Self-loop + bias slab initializes the accumulator; out_ref is resident
        # across the (r, k) reduction axes (its index_map is constant in both).
        out_ref[...] = base_ref[...]

    # int8 {0,1} adjacency tile -> bf16 (exact), so the dot is a native
    # bf16 x bf16 MXU matmul with f32 accumulation.
    a = a_ref[...].astype(jnp.bfloat16)
    msg = jnp.dot(a, xw_ref[...], preferred_element_type=jnp.float32)
    # norm='right': scale the lane-dense (TM, F_pad) partial by dst inverse
    # in-degree (linear, so per-K-chunk scaling is exact).
    out_ref[...] += msg * inv_ref[...]

    @pl.when(jnp.logical_and(r == pl.num_programs(1) - 1,
                             k == pl.num_programs(2) - 1))
    def _():
        out_ref[...] = jnp.maximum(out_ref[...], 0.0)     # ReLU activation


def rel_graph_conv_layer(adj, x, weight, w_self, bias):
    """adj: (R, N, N) with {0,1} values (any dtype); x: (N, F_in);
    weight: (R, F_in, F_out); w_self: (F_in, F_out); bias: (F_out,).
    Returns (N, F_out) float32."""
    R, N, _ = adj.shape
    F_out = weight.shape[2]

    F_pad = _round_up(F_out, 128)                 # lane-dense output stores
    budget, vmem_limit = _vmem_budget()
    TM, TK, N_pad = _pick_tiles(N, F_pad, budget)

    # ---- plain-JAX parameter / feature glue ----
    # Inverse in-degree per (relation, dst), clamped to >= 1, computed from the
    # ORIGINAL adjacency with an f32 accumulator (no padded f32 copy made).
    deg = jnp.maximum(jnp.sum(adj, axis=-1, keepdims=True, dtype=jnp.float32), 1.0)
    inv_deg = jnp.pad(1.0 / deg, ((0, 0), (0, N_pad - N), (0, 0)))   # (R, N_pad, 1)

    # Cast adjacency to the narrow streaming dtype FIRST, then pad that copy.
    adj_i8 = jnp.pad(adj.astype(jnp.int8), ((0, 0), (0, N_pad - N), (0, N_pad - N)))

    x_p = jnp.pad(x.astype(jnp.float32), ((0, N_pad - N), (0, 0)))

    # One lane-dense matmul for all relation weights + the self-loop weight:
    #   XW = X @ [W_1 | ... | W_R | W_self]  -> (N_pad, (R+1)*F_pad)
    hi = jax.lax.Precision.HIGHEST
    w_all = jnp.concatenate([weight, w_self[None]], axis=0)          # (R+1, F_in, F_out)
    w_all = jnp.pad(w_all, ((0, 0), (0, 0), (0, F_pad - F_out)))
    w_flat = jnp.transpose(w_all, (1, 0, 2)).reshape(-1, (R + 1) * F_pad)
    xw_all = jnp.dot(x_p, w_flat, precision=hi)
    xw_all = jnp.transpose(xw_all.reshape(N_pad, R + 1, F_pad), (1, 0, 2))
    xw_rel = xw_all[:R].astype(jnp.bfloat16)                         # (R, N_pad, F_pad), bf16 MXU operand
    base = (xw_all[R] + jnp.pad(bias, (0, F_pad - F_out))[None, :]   # self-loop + bias
            ).astype(jnp.float32)                                    # (N_pad, F_pad)

    grid = (N_pad // TM, R, N_pad // TK)
    out = pl.pallas_call(
        _rgcn_kernel,
        out_shape=jax.ShapeDtypeStruct((N_pad, F_pad), jnp.float32),
        grid_spec=pltpu.PrefetchScalarGridSpec(
            num_scalar_prefetch=0,
            grid=grid,
            in_specs=[
                pl.BlockSpec((pl.Squeezed(), TM, TK), lambda i, r, k: (r, i, k)),     # A_r dst x src tile (int8)
                pl.BlockSpec((pl.Squeezed(), TK, F_pad), lambda i, r, k: (r, k, 0)),  # XW_r src tile (bf16)
                pl.BlockSpec((pl.Squeezed(), TM, 1), lambda i, r, k: (r, i, 0)),      # inv in-degree tile
                pl.BlockSpec((TM, F_pad), lambda i, r, k: (i, 0)),                    # self-loop + bias tile
            ],
            out_specs=pl.BlockSpec((TM, F_pad), lambda i, r, k: (i, 0)),              # accumulator, resident over (r, k)
        ),
        compiler_params=pltpu.CompilerParams(
            dimension_semantics=("parallel", "arbitrary", "arbitrary"),  # dst parallel; r, k reductions
            vmem_limit_bytes=vmem_limit,                                 # generation-aware scoped limit
        ),
    )(adj_i8, xw_rel, inv_deg, base)

    return out[:N, :F_out]


def _xavier_uniform(key, shape, gain):
    fan_in, fan_out = shape[-2], shape[-1]
    limit = gain * jnp.sqrt(6.0 / (fan_in + fan_out))
    return jax.random.uniform(key, shape, jnp.float32, -limit, limit)


if __name__ == "__main__":
    # 3 relations, 1000 nodes (pads to 1024 -> two 512-row dst tiles, one 1024 src tile),
    # 64 -> 32 features, 2 bases.
    NUM_RELS = 3
    NUM_BASES = 2                       # num_bases < num_rels -> basis decomposition
    N = 1000
    F_IN = 64
    F_OUT = 32
    relu_gain = jnp.sqrt(2.0)           # nn.init.calculate_gain('relu')

    key = jax.random.PRNGKey(0)
    k_adj, k_x, k_basis, k_coef, k_self = jax.random.split(key, 5)

    # Dense binary adjacency per relation (dst x src), ~5% density, stored int8.
    adj = (jax.random.uniform(k_adj, (NUM_RELS, N, N)) < 0.05).astype(jnp.int8)
    x = jax.random.normal(k_x, (N, F_IN), jnp.float32)

    # Parameters (deterministic init, mirroring module __init__ shapes).
    basis = _xavier_uniform(k_basis, (NUM_BASES, F_IN, F_OUT), relu_gain)   # WeightBasis bases
    coef = jax.random.normal(k_coef, (NUM_RELS, NUM_BASES), jnp.float32)    # WeightBasis coefficients
    weight = jnp.einsum("rb,bio->rio", coef, basis)                         # W_r (glue, plain JAX)
    w_self = _xavier_uniform(k_self, (F_IN, F_OUT), relu_gain)              # self_loop_weight
    bias = jnp.zeros((F_OUT,), jnp.float32)                                 # nn.init.zeros_

    out = jax.block_until_ready(rel_graph_conv_layer(adj, x, weight, w_self, bias))

    # Pure-JAX reference (full f32 precision).
    hi = jax.lax.Precision.HIGHEST
    adj_f = adj.astype(jnp.float32)
    deg = jnp.maximum(adj_f.sum(-1, keepdims=True), 1.0)
    msg = jnp.einsum("rij,jf->rif", adj_f / deg, x, precision=hi)
    ref = jnp.einsum("rif,rfo->io", msg, weight, precision=hi)
    ref = jnp.maximum(ref + jnp.dot(x, w_self, precision=hi) + bias, 0.0)

    assert out.shape == (N, F_OUT)
    max_err = float(jnp.max(jnp.abs(out - ref)))
    # bf16 XW slab -> per-element rounding ~0.2-0.4%, largely averaged out by the
    # degree-normalized neighbor sum; self-loop/bias path stays f32.
    assert jnp.allclose(out, ref, atol=5e-3, rtol=5e-3), f"mismatch vs reference, max_err={max_err}"

    print("KERNEL_OK")
</pallas_src>

<mosaic_0001>
module attributes {stable_mosaic.version = 11 : i64} {
  func.func @_rgcn_kernel(%arg0: i32, %arg1: i32, %arg2: i32, %arg3: memref<1x512x1024xi8, #tpu.memory_space<vmem>>, %arg4: memref<1x1024x128xbf16, #tpu.memory_space<vmem>>, %arg5: memref<1x512x1xf32, #tpu.memory_space<vmem>>, %arg6: memref<512x128xf32, #tpu.memory_space<vmem>>, %arg7: memref<512x128xf32, #tpu.memory_space<vmem>>) attributes {dimension_semantics = [#tpu.dimension_semantics<parallel>, #tpu.dimension_semantics<arbitrary>, #tpu.dimension_semantics<arbitrary>], iteration_bounds = array<i64: 2, 3, 1>, scalar_prefetch = 0 : i64, scratch_operands = 0 : i64, tpu.core_type = #tpu.core_type<tc>, window_params = [{transform_indices = @transform_0, window_bounds = array<i64: 1, 512, 1024>}, {transform_indices = @transform_1, window_bounds = array<i64: 1, 1024, 128>}, {transform_indices = @transform_2, window_bounds = array<i64: 1, 512, 1>}, {transform_indices = @transform_3, window_bounds = array<i64: 512, 128>}, {transform_indices = @transform_4, window_bounds = array<i64: 512, 128>}]} {
    %c0_i32 = arith.constant 0 : i32
    %0 = arith.cmpi eq, %arg1, %c0_i32 : i32
    %c0_i32_0 = arith.constant 0 : i32
    %1 = arith.cmpi eq, %arg2, %c0_i32_0 : i32
    %2 = arith.andi %0, %1 : i1
    %3 = arith.extui %2 : i1 to i32
    %c0_i32_1 = arith.constant 0 : i32
    %4 = arith.cmpi ne, %3, %c0_i32_1 : i32
    scf.if %4 {
      %c0_16 = arith.constant 0 : index
      %c0_17 = arith.constant 0 : index
      %23 = vector.load %arg6[%c0_16, %c0_17] : memref<512x128xf32, #tpu.memory_space<vmem>>, vector<512x128xf32>
      %c0_18 = arith.constant 0 : index
      %c0_19 = arith.constant 0 : index
      %24 = vector.load %arg7[%c0_18, %c0_19] : memref<512x128xf32, #tpu.memory_space<vmem>>, vector<512x128xf32>
      tpu.vector_store %arg7[%c0_18, %c0_19], %23 {strides = array<i32>} : memref<512x128xf32, #tpu.memory_space<vmem>>, vector<512x128xf32>,
    } else {
    }
    %c0 = arith.constant 0 : index
    %c0_2 = arith.constant 0 : index
    %c0_3 = arith.constant 0 : index
    %5 = vector.load %arg3[%c0, %c0_2, %c0_3] : memref<1x512x1024xi8, #tpu.memory_space<vmem>>, vector<1x512x1024xi8>
    %6 = vector.shape_cast %5 : vector<1x512x1024xi8> to vector<512x1024xi8>
    %7 = arith.sitofp %6 : vector<512x1024xi8> to vector<512x1024xbf16>
    %c0_4 = arith.constant 0 : index
    %c0_5 = arith.constant 0 : index
    %c0_6 = arith.constant 0 : index
    %8 = vector.load %arg4[%c0_4, %c0_5, %c0_6] : memref<1x1024x128xbf16, #tpu.memory_space<vmem>>, vector<1x1024x128xbf16>
    %9 = vector.shape_cast %8 : vector<1x1024x128xbf16> to vector<1024x128xbf16>
    %cst = arith.constant dense<0.000000e+00> : vector<512x128xf32>
    %10 = tpu.matmul %7, %9, %cst {dimension_numbers = #tpu.dot_dimension_numbers<[1], [0], [0], [1], [0, 0, 1, 1], [], []>} : vector<512x1024xbf16>, vector<1024x128xbf16>, vector<512x128xf32> -> vector<512x128xf32>
    %c0_7 = arith.constant 0 : index
    %c0_8 = arith.constant 0 : index
    %11 = vector.load %arg7[%c0_7, %c0_8] : memref<512x128xf32, #tpu.memory_space<vmem>>, vector<512x128xf32>
    %c0_9 = arith.constant 0 : index
    %c0_10 = arith.constant 0 : index
    %c0_11 = arith.constant 0 : index
    %12 = vector.load %arg5[%c0_9, %c0_10, %c0_11] : memref<1x512x1xf32, #tpu.memory_space<vmem>>, vector<1x512x1xf32>
    %13 = vector.shape_cast %12 : vector<1x512x1xf32> to vector<512x1xf32>
    %14 = vector.broadcast %13 : vector<512x1xf32> to vector<512x128xf32>
    %15 = arith.mulf %10, %14 : vector<512x128xf32>
    %16 = arith.addf %11, %15 : vector<512x128xf32>
    %c0_12 = arith.constant 0 : index
    %c0_13 = arith.constant 0 : index
    %17 = vector.load %arg7[%c0_12, %c0_13] : memref<512x128xf32, #tpu.memory_space<vmem>>, vector<512x128xf32>
    tpu.vector_store %arg7[%c0_12, %c0_13], %16 {strides = array<i32>} : memref<512x128xf32, #tpu.memory_space<vmem>>, vector<512x128xf32>,
    %c2_i32 = arith.constant 2 : i32
    %18 = arith.cmpi eq, %arg1, %c2_i32 : i32
    %c0_i32_14 = arith.constant 0 : i32
    %19 = arith.cmpi eq, %arg2, %c0_i32_14 : i32
    %20 = arith.andi %18, %19 : i1
    %21 = arith.extui %20 : i1 to i32
    %c0_i32_15 = arith.constant 0 : i32
    %22 = arith.cmpi ne, %21, %c0_i32_15 : i32
    scf.if %22 {
      %c0_16 = arith.constant 0 : index
      %c0_17 = arith.constant 0 : index
      %23 = vector.load %arg7[%c0_16, %c0_17] : memref<512x128xf32, #tpu.memory_space<vmem>>, vector<512x128xf32>
      %cst_18 = arith.constant 0.000000e+00 : f32
      %24 = vector.broadcast %cst_18 : f32 to vector<512x128xf32>
      %25 = arith.maximumf %23, %24 : vector<512x128xf32>
      %c0_19 = arith.constant 0 : index
      %c0_20 = arith.constant 0 : index
      %26 = vector.load %arg7[%c0_19, %c0_20] : memref<512x128xf32, #tpu.memory_space<vmem>>, vector<512x128xf32>
      tpu.vector_store %arg7[%c0_19, %c0_20], %25 {strides = array<i32>} : memref<512x128xf32, #tpu.memory_space<vmem>>, vector<512x128xf32>,
    } else {
    }
    return
  }
  func.func @transform_0(%arg0: i32, %arg1: i32, %arg2: i32) -> (i32, i32, i32) {
    %c0_i32 = arith.constant 0 : i32
    return %arg1, %arg0, %arg2 : i32, i32, i32
  }
  func.func @transform_1(%arg0: i32, %arg1: i32, %arg2: i32) -> (i32, i32, i32) {
    %c0_i32 = arith.constant 0 : i32
    %c0_i32_0 = arith.constant 0 : i32
    return %arg1, %arg2, %c0_i32 : i32, i32, i32
  }
  func.func @transform_2(%arg0: i32, %arg1: i32, %arg2: i32) -> (i32, i32, i32) {
    %c0_i32 = arith.constant 0 : i32
    %c0_i32_0 = arith.constant 0 : i32
    return %arg1, %arg0, %c0_i32 : i32, i32, i32
  }
  func.func @transform_3(%arg0: i32, %arg1: i32, %arg2: i32) -> (i32, i32) {
    %c0_i32 = arith.constant 0 : i32
    %c0_i32_0 = arith.constant 0 : i32
    return %arg0, %c0_i32 : i32, i32
  }
  func.func @transform_4(%arg0: i32, %arg1: i32, %arg2: i32) -> (i32, i32) {
    %c0_i32 = arith.constant 0 : i32
    %c0_i32_0 = arith.constant 0 : i32
    return %arg0, %c0_i32 : i32, i32
  }
}

</mosaic_0001>

<llo_original>
// kernel: tpu_custom_call.1
$region0: #{tpu_custom_call.1}
  #allocation0 [shape = 'u32[]', space=smem, size = 0x4, offset = 0x4, fixed_abs, tag = 'smem constant byte address 0x4 - core index']
  #allocation1 [shape = 'u32[144,128]{1,0:T(1,128)}', space=vmem, size = 0x12000, scoped, tag = 'internal scratch']
  %s0 = inlined_call_operand.hbm [shape: s8[3,1024,1024], index: 0, kind: input, shape index: {}]
  %s1 = inlined_call_operand.hbm [shape: bf16[3,1024,128], index: 1, kind: input, shape index: {}]
  %s2 = inlined_call_operand.vmem [shape: f32[3,1024,1], index: 2, kind: input, shape index: {}]
  %s3 = inlined_call_operand.hbm [shape: f32[1024,128], index: 3, kind: input, shape index: {}]
  %s4 = inlined_call_operand.hbm [shape: f32[1024,128], index: 4, kind: output, shape index: {}]
  %s5 = sld [smem:[#allocation0]]
  $region69: #{tpu_custom_call.1} parent=0
    _
  %s7 = ssub.s32 1, %s5
  %s8 = scalar_select 0, %s7, %s5
  $region1: #{tpu_custom_call.1} parent=0
    #allocation2 [shape = 'u8[1048576]{0}', space=vmem, size = 0x100000, scoped, tag = 'input window, operand 0']
    #allocation3 [shape = 's32[2]{0}', space=sflag, size = 0x8, scoped, tag = 'scoped memory for tpu_custom_call.1']
    #allocation4 [shape = 's32[2]{0}', space=sflag, size = 0x8, scoped, tag = 'scoped memory for tpu_custom_call.1']
    #allocation5 [shape = 'u8[524288]{0}', space=vmem, size = 0x80000, scoped, tag = 'input window, operand 1']
    #allocation6 [shape = 's32[2]{0}', space=sflag, size = 0x8, scoped, tag = 'scoped memory for tpu_custom_call.1']
    #allocation7 [shape = 'u8[524288]{0}', space=vmem, size = 0x80000, scoped, tag = 'input window, operand 3']
    #allocation8 [shape = 'u8[524288]{0}', space=vmem, size = 0x80000, scoped, tag = 'output window, operand 0']
    %9 = vsyncpa [#allocation3], 0
    %s10 = scalar_lea.sflag [#allocation3], 1
    %11 = vsyncpa %s10, 0
    %12 = vsyncpa [#allocation6], 0
    %s13 = scalar_lea.sflag [#allocation6], 1
    %14 = vsyncpa %s13, 0
    %15 = vsyncpa [#allocation4], 0
    %s16 = scalar_lea.sflag [#allocation4], 1
    %17 = vsyncpa %s16, 0
    loop: start=0, step=1, limit=8
    $region2: #{tpu_custom_call.1} parent=1 // loop_pre_header
      _
    $region3: #{tpu_custom_call.1} parent=1 // loop_header
      %s19 = sphi 0, %s23
      %p20 = scmp.ge.s32.totalorder %s19, 8
      %s26 = sphi 0, %s45
      %s27 = sphi 0, %s41
      %s28 = sphi 0, %s37
      %s29 = sphi 0, %s26
      %s30 = sphi 0, %s27
      %s31 = sphi 0, %s28
      %s32 = sphi 0, %s29
      %s33 = sphi 0, %s30
      %s34 = sphi 0, %s31
      %s52 = sphi 0, %s54
      %s55 = sphi 0, %s52
      %s56 = sphi 0, %s55
      %s72 = sphi 0, %s56
      %s80 = sphi 0, %s82
      %s83 = sphi 0, %s80
      %s84 = sphi 0, %s83
      %s100 = sphi 0, %s84
      %s108 = sphi 0, %s110
      %s111 = sphi 0, %s108
      %s112 = sphi 0, %s111
      %s128 = sphi 0, %s112
      %s134 = sphi 0, %s136
      %s137 = sphi 0, %s134
      %s138 = sphi 0, %s137
      %s154 = sphi 0, %s138
      %s160 = sphi 0, %s162
      %s163 = sphi 0, %s160
      %s164 = sphi 0, %s163
      %s180 = sphi 0, %s164
    $region4: #{tpu_custom_call.1} parent=1 // loop_header_branch
      %22 = sbr.rel (%p20) target = $region8
    $region5: #{tpu_custom_call.1} parent=1 // loop_body
      %s24 = ssub.s32 %s19, 1
      %s25 = ssub.s32 %s19, 2
      %s35 = sadd.s32 1, %s28
      %p36 = scmp.ge.s32.totalorder %s35, 1
      %s37 = scalar_select %p36, 0, %s35
      %s38 = sadd.s32 1, %s27
      %s39 = scalar_select %p36, %s38, %s27
      %p40 = scmp.ge.s32.totalorder %s39, 3
      %s41 = scalar_select %p40, 0, %s39
      %s42 = sadd.s32 1, %s26
      %s43 = scalar_select %p40, %s42, %s26
      %p44 = scmp.ge.s32.totalorder %s43, 2
      %s45 = scalar_select %p44, 0, %s43
      %s46 = ssub.s32 %s27, %s41
      %s47 = ssub.s32 %s26, %s45
      %s48 = sor.u32 %s46, %s47
      %s49 = ssub.s32 %s28, %s37
      %s50 = sor.u32 %s48, %s49
      %p51 = scmp.eq.s32.totalorder %s50, 0
      %s53 = sadd.s32 %s52, 1
      %s54 = scalar_select %p51, %s52, %s53
      %p57 = pneg %p51
      %p58 = scmp.eq.s32.totalorder %s19, 5
      %p59 = por %p57, %p58
      %p60 = scmp.ne.s32.totalorder %s52, %s55
      %p61 = scmp.eq.s32.totalorder %s19, 0
      %p62 = por %p60, %p61
      %p63 = scmp.ne.s32.totalorder %s52, %s55
      %p64 = scmp.eq.s32.totalorder %s24, 5
      %p65 = por %p63, %p64
      %p66 = scmp.ne.s32.totalorder %s55, %s56
      %p67 = scmp.eq.s32.totalorder %s24, 0
      %p68 = por %p66, %p67
      %p69 = scmp.ne.s32.totalorder %s55, %s56
      %p70 = scmp.eq.s32.totalorder %s25, 5
      %p71 = por %p69, %p70
      %p73 = scmp.ne.s32.totalorder %s56, %s72
      %p74 = scmp.eq.s32.totalorder %s25, 0
      %p75 = por %p73, %p74
      %s76 = ssub.s32 %s27, %s41
      %s77 = ssub.s32 %s28, %s37
      %s78 = sor.u32 %s76, %s77
      %p79 = scmp.eq.s32.totalorder %s78, 0
      %s81 = sadd.s32 %s80, 1
      %s82 = scalar_select %p79, %s80, %s81
      %p85 = pneg %p79
      %p86 = scmp.eq.s32.totalorder %s19, 5
      %p87 = por %p85, %p86
      %p88 = scmp.ne.s32.totalorder %s80, %s83
      %p89 = scmp.eq.s32.totalorder %s19, 0
      %p90 = por %p88, %p89
      %p91 = scmp.ne.s32.totalorder %s80, %s83
      %p92 = scmp.eq.s32.totalorder %s24, 5
      %p93 = por %p91, %p92
      %p94 = scmp.ne.s32.totalorder %s83, %s84
      %p95 = scmp.eq.s32.totalorder %s24, 0
      %p96 = por %p94, %p95
      %p97 = scmp.ne.s32.totalorder %s83, %s84
      %p98 = scmp.eq.s32.totalorder %s25, 5
      %p99 = por %p97, %p98
      %p101 = scmp.ne.s32.totalorder %s84, %s100
      %p102 = scmp.eq.s32.totalorder %s25, 0
      %p103 = por %p101, %p102
      %s104 = ssub.s32 %s27, %s41
      %s105 = ssub.s32 %s26, %s45
      %s106 = sor.u32 %s104, %s105
      %p107 = scmp.eq.s32.totalorder %s106, 0
      %s109 = sadd.s32 %s108, 1
      %s110 = scalar_select %p107, %s108, %s109
      %p113 = pneg %p107
      %p114 = scmp.eq.s32.totalorder %s19, 5
      %p115 = por %p113, %p114
      %p116 = scmp.ne.s32.totalorder %s108, %s111
      %p117 = scmp.eq.s32.totalorder %s19, 0
      %p118 = por %p116, %p117
      %p119 = scmp.ne.s32.totalorder %s108, %s111
      %p120 = scmp.eq.s32.totalorder %s24, 5
      %p121 = por %p119, %p120
      %p122 = scmp.ne.s32.totalorder %s111, %s112
      %p123 = scmp.eq.s32.totalorder %s24, 0
      %p124 = por %p122, %p123
      %p125 = scmp.ne.s32.totalorder %s111, %s112
      %p126 = scmp.eq.s32.totalorder %s25, 5
      %p127 = por %p125, %p126
      %p129 = scmp.ne.s32.totalorder %s112, %s128
      %p130 = scmp.eq.s32.totalorder %s25, 0
      %p131 = por %p129, %p130
      %s132 = ssub.s32 %s26, %s45
      %p133 = scmp.eq.s32.totalorder %s132, 0
      %s135 = sadd.s32 %s134, 1
      %s136 = scalar_select %p133, %s134, %s135
      %p139 = pneg %p133
      %p140 = scmp.eq.s32.totalorder %s19, 5
      %p141 = por %p139, %p140
      %p142 = scmp.ne.s32.totalorder %s134, %s137
      %p143 = scmp.eq.s32.totalorder %s19, 0
      %p144 = por %p142, %p143
      %p145 = scmp.ne.s32.totalorder %s134, %s137
      %p146 = scmp.eq.s32.totalorder %s24, 5
      %p147 = por %p145, %p146
      %p148 = scmp.ne.s32.totalorder %s137, %s138
      %p149 = scmp.eq.s32.totalorder %s24, 0
      %p150 = por %p148, %p149
      %p151 = scmp.ne.s32.totalorder %s137, %s138
      %p152 = scmp.eq.s32.totalorder %s25, 5
      %p153 = por %p151, %p152
      %p155 = scmp.ne.s32.totalorder %s138, %s154
      %p156 = scmp.eq.s32.totalorder %s25, 0
      %p157 = por %p155, %p156
      %s158 = ssub.s32 %s26, %s45
      %p159 = scmp.eq.s32.totalorder %s158, 0
      %s161 = sadd.s32 %s160, 1
      %s162 = scalar_select %p159, %s160, %s161
      %p165 = pneg %p159
      %p166 = scmp.eq.s32.totalorder %s19, 5
      %p167 = por %p165, %p166
      %p168 = scmp.ne.s32.totalorder %s160, %s163
      %p169 = scmp.eq.s32.totalorder %s19, 0
      %p170 = por %p168, %p169
      %p171 = scmp.ne.s32.totalorder %s160, %s163
      %p172 = scmp.eq.s32.totalorder %s24, 5
      %p173 = por %p171, %p172
      %p174 = scmp.ne.s32.totalorder %s163, %s164
      %p175 = scmp.eq.s32.totalorder %s24, 0
      %p176 = por %p174, %p175
      %p177 = scmp.ne.s32.totalorder %s163, %s164
      %p178 = scmp.eq.s32.totalorder %s25, 5
      %p179 = por %p177, %p178
      %p181 = scmp.ne.s32.totalorder %s164, %s180
      %p182 = scmp.eq.s32.totalorder %s25, 0
      %p183 = por %p181, %p182
      %p184 = scmp.le.s32.totalorder 1, %s19
      %p185 = scmp.lt.s32.totalorder %s19, 7
      %p186 = pnand %p184, %p185
      %p187 = pneg %p186
      // Predicated region
      $region9: #{tpu_custom_call.1} parent=5 // pred_check
        _
      $region10: #{tpu_custom_call.1} parent=5 // pred_check_branch
        %189 = sbr.rel (%p186) target = $region12
      $region11: #{tpu_custom_call.1} parent=5 // pred_region
        %s190 = ssub.s32 %s19, 1
      $region12: #{tpu_custom_call.1} parent=5 // pred_fallthru
        _
      %p191 = scmp.lt.s32.totalorder %s19, 6
      // Predicated region
      $region13: #{tpu_custom_call.1} parent=5 // pred_check
        %p192 = pneg %p191
      $region14: #{tpu_custom_call.1} parent=5 // pred_check_branch
        %194 = sbr.rel (%p192) target = $region16
      $region15: #{tpu_custom_call.1} parent=5 // pred_region
        // Predicated region
        $region17: #{tpu_custom_call.1} parent=15 // pred_check
          %p195 = pneg %p62
        $region18: #{tpu_custom_call.1} parent=15 // pred_check_branch
          %197 = sbr.rel (%p195) target = $region20
        $region19: #{tpu_custom_call.1} parent=15 // pred_region
          %s198 = sand.u32 %s52, 1
          %s199 = scalar_lea.sflag [#allocation3], %s198
          %s200 = sand.u32 %s52, 1
          %s201 = smul.addr %s200, 1024
          %s202 = scalar_lea.vmem [#allocation2], %s201
          %s203 = smul.u32 16, %s26
          %s204 = smul.u32 8, %s28
          %s206 = ssub.s32 16384, 16384
          %207 = vsyncadd %s199, %s206
          %s208 = smul.addr %s203, 8
          %s209 = sadd.s32 %s204, %s208
          %s210 = smul.addr %s27, 256
          %s211 = sadd.s32 %s209, %s210
          %s212 = smul.addr %s211, 128
          %s213 = scalar_lea.hbm %s0, %s212
          %s214 = sshll.u32 %s202, 4
          %s215 = int_to_ptr.vmem [resolvable:$true] %s214
          %220 = dma.hbm_to_vmem [thread:$0]  %s213, 16384, %s215, %s199, 1024, 1024, 64
        $region20: #{tpu_custom_call.1} parent=15 // pred_fallthru
          _
        // Predicated region
        $region21: #{tpu_custom_call.1} parent=15 // pred_check
          %p221 = pneg %p90
        $region22: #{tpu_custom_call.1} parent=15 // pred_check_branch
          %223 = sbr.rel (%p221) target = $region24
        $region23: #{tpu_custom_call.1} parent=15 // pred_region
          %s224 = sand.u32 %s19, 1
          %s225 = scalar_lea.sflag [#allocation6], %s224
          %s226 = sand.u32 %s80, 1
          %s227 = smul.addr %s226, 512
          %s228 = scalar_lea.vmem [#allocation5], %s227
          %s229 = smul.u32 128, %s28
          %s231 = ssub.s32 8192, 8192
          %232 = vsyncadd %s225, %s231
          %s233 = smul.addr %s27, 128
          %s234 = sadd.s32 %s229, %s233
          %s235 = smul.addr %s234, 64
          %s236 = scalar_lea.hbm %s1, %s235
          %s237 = sshll.u32 %s228, 4
          %s238 = int_to_ptr.vmem [resolvable:$true] %s237
          %243 = dma.hbm_to_vmem [thread:$0]  %s236, 8192, %s238, %s225, 64, 64, 4
        $region24: #{tpu_custom_call.1} parent=15 // pred_fallthru
          _
        // Predicated region
        $region25: #{tpu_custom_call.1} parent=15 // pred_check
          %p244 = pneg %p118
        $region26: #{tpu_custom_call.1} parent=15 // pred_check_branch
          %246 = sbr.rel (%p244) target = $region28
        $region27: #{tpu_custom_call.1} parent=15 // pred_region
          %s247 = smul.u32 64, %s26
          %p248 = scmp.lt.s32.totalorder %s27, 2
          %s249 = scalar_select %p248, %s27, 2
          %p250 = scmp.lt.s32.totalorder %s247, 127
          %s251 = scalar_select %p250, %s247, 127
          %s252 = smul.addr %s249, 128
          %s253 = sadd.s32 %s251, %s252
          %s254 = smul.addr %s253, 8
          %s255 = scalar_lea.vmem %s2, %s254
          %s256 = smul.u32 64, %s26
        $region28: #{tpu_custom_call.1} parent=15 // pred_fallthru
          _
        // Predicated region
        $region29: #{tpu_custom_call.1} parent=15 // pred_check
          %p257 = pneg %p144
        $region30: #{tpu_custom_call.1} parent=15 // pred_check_branch
          %259 = sbr.rel (%p257) target = $region32
        $region31: #{tpu_custom_call.1} parent=15 // pred_region
          %s260 = sand.u32 %s19, 1
          %s261 = scalar_lea.sflag [#allocation6], %s260
          %s262 = sand.u32 %s134, 1
          %s263 = smul.addr %s262, 512
          %s264 = scalar_lea.vmem [#allocation7], %s263
          %s265 = smul.u32 64, %s26
          %s267 = ssub.s32 8192, 8192
          %268 = vsyncadd %s261, %s267
          %s269 = smul.addr %s265, 128
          %s270 = scalar_lea.hbm %s3, %s269
          %s271 = sshll.u32 %s264, 4
          %s272 = int_to_ptr.vmem [resolvable:$true] %s271
          %277 = dma.hbm_to_vmem [thread:$0]  %s270, 8192, %s272, %s261, 128, 128, 8
        $region32: #{tpu_custom_call.1} parent=15 // pred_fallthru
          _
      $region16: #{tpu_custom_call.1} parent=5 // pred_fallthru
        _
      %p278 = scmp.le.s32.totalorder 1, %s19
      %p279 = scmp.lt.s32.totalorder %s19, 7
      %p280 = pnand %p278, %p279
      %p281 = pneg %p280
      // Predicated region
      $region33: #{tpu_custom_call.1} parent=5 // pred_check
        _
      $region34: #{tpu_custom_call.1} parent=5 // pred_check_branch
        %283 = sbr.rel (%p280) target = $region36
      $region35: #{tpu_custom_call.1} parent=5 // pred_region
        %s284 = ssub.s32 %s19, 1
        %s285 = sand.u32 %s55, 1
        %s286 = scalar_lea.sflag [#allocation3], %s285
        %s287 = sand.u32 %s55, 1
        %s288 = smul.addr %s287, 1024
        %s289 = scalar_lea.vmem [#allocation2], %s288
        // Predicated region
        $region37: #{tpu_custom_call.1} parent=35 // pred_check
          %p290 = pneg %p68
        $region38: #{tpu_custom_call.1} parent=35 // pred_check_branch
          %292 = sbr.rel (%p290) target = $region40
        $region39: #{tpu_custom_call.1} parent=35 // pred_region
          %293 = dma.done %s286, 16384
        $region40: #{tpu_custom_call.1} parent=35 // pred_fallthru
          _
        %s294 = sand.u32 %s24, 1
        %s295 = scalar_lea.sflag [#allocation6], %s294
        %s296 = sand.u32 %s83, 1
        %s297 = smul.addr %s296, 512
        %s298 = scalar_lea.vmem [#allocation5], %s297
        // Predicated region
        $region41: #{tpu_custom_call.1} parent=35 // pred_check
          %p299 = pneg %p96
        $region42: #{tpu_custom_call.1} parent=35 // pred_check_branch
          %301 = sbr.rel (%p299) target = $region44
        $region43: #{tpu_custom_call.1} parent=35 // pred_region
          %302 = dma.done %s295, 8192
        $region44: #{tpu_custom_call.1} parent=35 // pred_fallthru
          _
        %s303 = sand.u32 %s24, 1
        %s304 = scalar_lea.sflag [#allocation6], %s303
        %s305 = sand.u32 %s137, 1
        %s306 = smul.addr %s305, 512
        %s307 = scalar_lea.vmem [#allocation7], %s306
        // Predicated region
        $region45: #{tpu_custom_call.1} parent=35 // pred_check
          %p308 = pneg %p150
        $region46: #{tpu_custom_call.1} parent=35 // pred_check_branch
          %310 = sbr.rel (%p308) target = $region48
        $region47: #{tpu_custom_call.1} parent=35 // pred_region
          %311 = dma.done %s304, 8192
        $region48: #{tpu_custom_call.1} parent=35 // pred_fallthru
          _
        %s312 = sand.u32 %s55, 1
        %s313 = scalar_lea.sflag [#allocation3], %s312
        %s314 = sand.u32 %s55, 1
        %s315 = smul.addr %s314, 1024
        %s316 = scalar_lea.vmem [#allocation2], %s315
        %p317 = pneg %p68
        %p318 = pneg %p65
        %s319 = sand.u32 %s24, 1
        %s320 = scalar_lea.sflag [#allocation6], %s319
        %s321 = sand.u32 %s83, 1
        %s322 = smul.addr %s321, 512
        %s323 = scalar_lea.vmem [#allocation5], %s322
        %p324 = pneg %p96
        %p325 = pneg %p93
        %s326 = smul.u32 64, %s29
        %p327 = scmp.lt.s32.totalorder %s30, 2
        %s328 = scalar_select %p327, %s30, 2
        %p329 = scmp.lt.s32.totalorder %s326, 127
        %s330 = scalar_select %p329, %s326, 127
        %s331 = smul.addr %s328, 128
        %s332 = sadd.s32 %s330, %s331
        %s333 = smul.addr %s332, 8
        %s334 = scalar_lea.vmem %s2, %s333
        %p335 = pneg %p124
        %p336 = pneg %p121
        %s337 = sand.u32 %s24, 1
        %s338 = scalar_lea.sflag [#allocation6], %s337
        %s339 = sand.u32 %s137, 1
        %s340 = smul.addr %s339, 512
        %s341 = scalar_lea.vmem [#allocation7], %s340
        %p342 = pneg %p150
        %p343 = pneg %p147
        %p344 = pneg %p176
        %p345 = pneg %p173
        %s346 = sand.u32 %s163, 1
        %s347 = scalar_lea.sflag [#allocation4], %s346
        %s348 = sand.u32 %s163, 1
        %s349 = smul.addr %s348, 512
        %s350 = scalar_lea.vmem [#allocation8], %s349
        %s351 = smul.u32 16, %s29
        %s352 = smul.u32 8, %s31
        %s353 = smul.u32 128, %s31
        %s354 = smul.u32 64, %s29
        %p355 = scmp.lt.s32.totalorder %s30, 2
        %s356 = scalar_select %p355, %s30, 2
        %p357 = scmp.lt.s32.totalorder %s354, 127
        %s358 = scalar_select %p357, %s354, 127
        %s359 = smul.addr %s356, 128
        %s360 = sadd.s32 %s358, %s359
        %s361 = smul.addr %s360, 8
        %s362 = scalar_lea.vmem %s2, %s361
        %s363 = smul.u32 64, %s29
        %s364 = smul.u32 64, %s29
        %s365 = smul.u32 64, %s29
        %p367 = scmp.eq.s32.totalorder %s30, 0
        %p368 = scmp.eq.s32.totalorder %s31, 0
        %p369 = pnand %p367, %p368
        %p370 = pneg %p369
        // Predicated region
        $region49: #{tpu_custom_call.1} parent=35 // pred_check
          _
        $region50: #{tpu_custom_call.1} parent=35 // pred_check_branch
          %372 = sbr.rel (%p369) target = $region52
        $region51: #{tpu_custom_call.1} parent=35 // pred_region
          %v373 = vld [vmem:[%s307] sm:$0xff]
          %v374 = vld [vmem:[%s307 + $0x8] sm:$0xff]
          %v375 = vld [vmem:[%s307 + $0x10] sm:$0xff]
          %v376 = vld [vmem:[%s307 + $0x18] sm:$0xff]
          %v377 = vld [vmem:[%s307 + $0x20] sm:$0xff]
          %v378 = vld [vmem:[%s307 + $0x28] sm:$0xff]
          %v379 = vld [vmem:[%s307 + $0x30] sm:$0xff]
          %v380 = vld [vmem:[%s307 + $0x38] sm:$0xff]
          %v381 = vld [vmem:[%s307 + $0x40] sm:$0xff]
          %v382 = vld [vmem:[%s307 + $0x48] sm:$0xff]
          %v383 = vld [vmem:[%s307 + $0x50] sm:$0xff]
          %v384 = vld [vmem:[%s307 + $0x58] sm:$0xff]
          %v385 = vld [vmem:[%s307 + $0x60] sm:$0xff]
          %v386 = vld [vmem:[%s307 + $0x68] sm:$0xff]
          %v387 = vld [vmem:[%s307 + $0x70] sm:$0xff]
          %v388 = vld [vmem:[%s307 + $0x78] sm:$0xff]
          %v389 = vld [vmem:[%s307 + $0x80] sm:$0xff]
          %v390 = vld [vmem:[%s307 + $0x88] sm:$0xff]
          %v391 = vld [vmem:[%s307 + $0x90] sm:$0xff]
          %v392 = vld [vmem:[%s307 + $0x98] sm:$0xff]
          %v393 = vld [vmem:[%s307 + $0xa0] sm:$0xff]
          %v394 = vld [vmem:[%s307 + $0xa8] sm:$0xff]
          %v395 = vld [vmem:[%s307 + $0xb0] sm:$0xff]
          %v396 = vld [vmem:[%s307 + $0xb8] sm:$0xff]
          %v397 = vld [vmem:[%s307 + $0xc0] sm:$0xff]
          %v398 = vld [vmem:[%s307 + $0xc8] sm:$0xff]
          %v399 = vld [vmem:[%s307 + $0xd0] sm:$0xff]
          %v400 = vld [vmem:[%s307 + $0xd8] sm:$0xff]
          %v401 = vld [vmem:[%s307 + $0xe0] sm:$0xff]
          %v402 = vld [vmem:[%s307 + $0xe8] sm:$0xff]
          %v403 = vld [vmem:[%s307 + $0xf0] sm:$0xff]
          %v404 = vld [vmem:[%s307 + $0xf8] sm:$0xff]
          %v405 = vld [vmem:[%s307 + $0x100] sm:$0xff]
          %v406 = vld [vmem:[%s307 + $0x108] sm:$0xff]
          %v407 = vld [vmem:[%s307 + $0x110] sm:$0xff]
          %v408 = vld [vmem:[%s307 + $0x118] sm:$0xff]
          %v409 = vld [vmem:[%s307 + $0x120] sm:$0xff]
          %v410 = vld [vmem:[%s307 + $0x128] sm:$0xff]
          %v411 = vld [vmem:[%s307 + $0x130] sm:$0xff]
          %v412 = vld [vmem:[%s307 + $0x138] sm:$0xff]
          %v413 = vld [vmem:[%s307 + $0x140] sm:$0xff]
          %v414 = vld [vmem:[%s307 + $0x148] sm:$0xff]
          %v415 = vld [vmem:[%s307 + $0x150] sm:$0xff]
          %v416 = vld [vmem:[%s307 + $0x158] sm:$0xff]
          %v417 = vld [vmem:[%s307 + $0x160] sm:$0xff]
          %v418 = vld [vmem:[%s307 + $0x168] sm:$0xff]
          %v419 = vld [vmem:[%s307 + $0x170] sm:$0xff]
          %v420 = vld [vmem:[%s307 + $0x178] sm:$0xff]
          %v421 = vld [vmem:[%s307 + $0x180] sm:$0xff]
          %v422 = vld [vmem:[%s307 + $0x188] sm:$0xff]
          %v423 = vld [vmem:[%s307 + $0x190] sm:$0xff]
          %v424 = vld [vmem:[%s307 + $0x198] sm:$0xff]
          %v425 = vld [vmem:[%s307 + $0x1a0] sm:$0xff]
          %v426 = vld [vmem:[%s307 + $0x1a8] sm:$0xff]
          %v427 = vld [vmem:[%s307 + $0x1b0] sm:$0xff]
          %v428 = vld [vmem:[%s307 + $0x1b8] sm:$0xff]
          %v429 = vld [vmem:[%s307 + $0x1c0] sm:$0xff]
          %v430 = vld [vmem:[%s307 + $0x1c8] sm:$0xff]
          %v431 = vld [vmem:[%s307 + $0x1d0] sm:$0xff]
          %v432 = vld [vmem:[%s307 + $0x1d8] sm:$0xff]
          %v433 = vld [vmem:[%s307 + $0x1e0] sm:$0xff]
          %v434 = vld [vmem:[%s307 + $0x1e8] sm:$0xff]
          %v435 = vld [vmem:[%s307 + $0x1f0] sm:$0xff]
          %v436 = vld [vmem:[%s307 + $0x1f8] sm:$0xff]
          %437 = vst [vmem:[%s350] sm:$0xff] %v373
          %438 = vst [vmem:[%s350 + $0x8] sm:$0xff] %v374
          %439 = vst [vmem:[%s350 + $0x10] sm:$0xff] %v375
          %440 = vst [vmem:[%s350 + $0x18] sm:$0xff] %v376
          %441 = vst [vmem:[%s350 + $0x20] sm:$0xff] %v377
          %442 = vst [vmem:[%s350 + $0x28] sm:$0xff] %v378
          %443 = vst [vmem:[%s350 + $0x30] sm:$0xff] %v379
          %444 = vst [vmem:[%s350 + $0x38] sm:$0xff] %v380
          %445 = vst [vmem:[%s350 + $0x40] sm:$0xff] %v381
          %446 = vst [vmem:[%s350 + $0x48] sm:$0xff] %v382
          %447 = vst [vmem:[%s350 + $0x50] sm:$0xff] %v383
          %448 = vst [vmem:[%s350 + $0x58] sm:$0xff] %v384
          %449 = vst [vmem:[%s350 + $0x60] sm:$0xff] %v385
          %450 = vst [vmem:[%s350 + $0x68] sm:$0xff] %v386
          %451 = vst [vmem:[%s350 + $0x70] sm:$0xff] %v387
          %452 = vst [vmem:[%s350 + $0x78] sm:$0xff] %v388
          %453 = vst [vmem:[%s350 + $0x80] sm:$0xff] %v389
          %454 = vst [vmem:[%s350 + $0x88] sm:$0xff] %v390
          %455 = vst [vmem:[%s350 + $0x90] sm:$0xff] %v391
          %456 = vst [vmem:[%s350 + $0x98] sm:$0xff] %v392
          %457 = vst [vmem:[%s350 + $0xa0] sm:$0xff] %v393
          %458 = vst [vmem:[%s350 + $0xa8] sm:$0xff] %v394
          %459 = vst [vmem:[%s350 + $0xb0] sm:$0xff] %v395
          %460 = vst [vmem:[%s350 + $0xb8] sm:$0xff] %v396
          %461 = vst [vmem:[%s350 + $0xc0] sm:$0xff] %v397
          %462 = vst [vmem:[%s350 + $0xc8] sm:$0xff] %v398
          %463 = vst [vmem:[%s350 + $0xd0] sm:$0xff] %v399
          %464 = vst [vmem:[%s350 + $0xd8] sm:$0xff] %v400
          %465 = vst [vmem:[%s350 + $0xe0] sm:$0xff] %v401
          %466 = vst [vmem:[%s350 + $0xe8] sm:$0xff] %v402
          %467 = vst [vmem:[%s350 + $0xf0] sm:$0xff] %v403
          %468 = vst [vmem:[%s350 + $0xf8] sm:$0xff] %v404
          %469 = vst [vmem:[%s350 + $0x100] sm:$0xff] %v405
          %470 = vst [vmem:[%s350 + $0x108] sm:$0xff] %v406
          %471 = vst [vmem:[%s350 + $0x110] sm:$0xff] %v407
          %472 = vst [vmem:[%s350 + $0x118] sm:$0xff] %v408
          %473 = vst [vmem:[%s350 + $0x120] sm:$0xff] %v409
          %474 = vst [vmem:[%s350 + $0x128] sm:$0xff] %v410
          %475 = vst [vmem:[%s350 + $0x130] sm:$0xff] %v411
          %476 = vst [vmem:[%s350 + $0x138] sm:$0xff] %v412
          %477 = vst [vmem:[%s350 + $0x140] sm:$0xff] %v413
          %478 = vst [vmem:[%s350 + $0x148] sm:$0xff] %v414
          %479 = vst [vmem:[%s350 + $0x150] sm:$0xff] %v415
          %480 = vst [vmem:[%s350 + $0x158] sm:$0xff] %v416
          %481 = vst [vmem:[%s350 + $0x160] sm:$0xff] %v417
          %482 = vst [vmem:[%s350 + $0x168] sm:$0xff] %v418
          %483 = vst [vmem:[%s350 + $0x170] sm:$0xff] %v419
          %484 = vst [vmem:[%s350 + $0x178] sm:$0xff] %v420
          %485 = vst [vmem:[%s350 + $0x180] sm:$0xff] %v421
          %486 = vst [vmem:[%s350 + $0x188] sm:$0xff] %v422
          %487 = vst [vmem:[%s350 + $0x190] sm:$0xff] %v423
          %488 = vst [vmem:[%s350 + $0x198] sm:$0xff] %v424
          %489 = vst [vmem:[%s350 + $0x1a0] sm:$0xff] %v425
          %490 = vst [vmem:[%s350 + $0x1a8] sm:$0xff] %v426
          %491 = vst [vmem:[%s350 + $0x1b0] sm:$0xff] %v427
          %492 = vst [vmem:[%s350 + $0x1b8] sm:$0xff] %v428
          %493 = vst [vmem:[%s350 + $0x1c0] sm:$0xff] %v429
          %494 = vst [vmem:[%s350 + $0x1c8] sm:$0xff] %v430
          %495 = vst [vmem:[%s350 + $0x1d0] sm:$0xff] %v431
          %496 = vst [vmem:[%s350 + $0x1d8] sm:$0xff] %v432
          %497 = vst [vmem:[%s350 + $0x1e0] sm:$0xff] %v433
          %498 = vst [vmem:[%s350 + $0x1e8] sm:$0xff] %v434
          %499 = vst [vmem:[%s350 + $0x1f0] sm:$0xff] %v435
          %500 = vst [vmem:[%s350 + $0x1f8] sm:$0xff] %v436
        $region52: #{tpu_custom_call.1} parent=35 // pred_fallthru
          _
        %v501 = vld [vmem:[%s289] sm:$0xff]
        %v502 = vld [vmem:[%s289 + $0x8] sm:$0xff]
        %v503 = vld [vmem:[%s289 + $0x10] sm:$0xff]
        %v504 = vld [vmem:[%s289 + $0x18] sm:$0xff]
        %v505 = vld [vmem:[%s289 + $0x20] sm:$0xff]
        %v506 = vld [vmem:[%s289 + $0x28] sm:$0xff]
        %v507 = vld [vmem:[%s289 + $0x30] sm:$0xff]
        %v508 = vld [vmem:[%s289 + $0x38] sm:$0xff]
        %v509 = vld [vmem:[%s289 + $0x40] sm:$0xff]
        %v510 = vld [vmem:[%s289 + $0x48] sm:$0xff]
        %v511 = vld [vmem:[%s289 + $0x50] sm:$0xff]
        %v512 = vld [vmem:[%s289 + $0x58] sm:$0xff]
        %v513 = vld [vmem:[%s289 + $0x60] sm:$0xff]
        %v514 = vld [vmem:[%s289 + $0x68] sm:$0xff]
        %v515 = vld [vmem:[%s289 + $0x70] sm:$0xff]
        %v516 = vld [vmem:[%s289 + $0x78] sm:$0xff]
        %v517 = vld [vmem:[%s289 + $0x80] sm:$0xff]
        %v518 = vld [vmem:[%s289 + $0x88] sm:$0xff]
        %v519 = vld [vmem:[%s289 + $0x90] sm:$0xff]
        %v520 = vld [vmem:[%s289 + $0x98] sm:$0xff]
        %v521 = vld [vmem:[%s289 + $0xa0] sm:$0xff]
        %v522 = vld [vmem:[%s289 + $0xa8] sm:$0xff]
        %v523 = vld [vmem:[%s289 + $0xb0] sm:$0xff]
        %v524 = vld [vmem:[%s289 + $0xb8] sm:$0xff]
        %v525 = vld [vmem:[%s289 + $0xc0] sm:$0xff]
        %v526 = vld [vmem:[%s289 + $0xc8] sm:$0xff]
        %v527 = vld [vmem:[%s289 + $0xd0] sm:$0xff]
        %v528 = vld [vmem:[%s289 + $0xd8] sm:$0xff]
        %v529 = vld [vmem:[%s289 + $0xe0] sm:$0xff]
        %v530 = vld [vmem:[%s289 + $0xe8] sm:$0xff]
        %v531 = vld [vmem:[%s289 + $0xf0] sm:$0xff]
        %v532 = vld [vmem:[%s289 + $0xf8] sm:$0xff]
        %v533 = vld [vmem:[%s289 + $0x100] sm:$0xff]
        %v534 = vld [vmem:[%s289 + $0x108] sm:$0xff]
        %v535 = vld [vmem:[%s289 + $0x110] sm:$0xff]
        %v536 = vld [vmem:[%s289 + $0x118] sm:$0xff]
        %v537 = vld [vmem:[%s289 + $0x120] sm:$0xff]
        %v538 = vld [vmem:[%s289 + $0x128] sm:$0xff]
        %v539 = vld [vmem:[%s289 + $0x130] sm:$0xff]
        %v540 = vld [vmem:[%s289 + $0x138] sm:$0xff]
        %v541 = vld [vmem:[%s289 + $0x140] sm:$0xff]
        %v542 = vld [vmem:[%s289 + $0x148] sm:$0xff]
        %v543 = vld [vmem:[%s289 + $0x150] sm:$0xff]
        %v544 = vld [vmem:[%s289 + $0x158] sm:$0xff]
        %v545 = vld [vmem:[%s289 + $0x160] sm:$0xff]
        %v546 = vld [vmem:[%s289 + $0x168] sm:$0xff]
        %v547 = vld [vmem:[%s289 + $0x170] sm:$0xff]
        %v548 = vld [vmem:[%s289 + $0x178] sm:$0xff]
        %v549 = vld [vmem:[%s289 + $0x180] sm:$0xff]
        %v550 = vld [vmem:[%s289 + $0x188] sm:$0xff]
        %v551 = vld [vmem:[%s289 + $0x190] sm:$0xff]
        %v552 = vld [vmem:[%s289 + $0x198] sm:$0xff]
        %v553 = vld [vmem:[%s289 + $0x1a0] sm:$0xff]
        %v554 = vld [vmem:[%s289 + $0x1a8] sm:$0xff]
        %v555 = vld [vmem:[%s289 + $0x1b0] sm:$0xff]
        %v556 = vld [vmem:[%s289 + $0x1b8] sm:$0xff]
        %v557 = vld [vmem:[%s289 + $0x1c0] sm:$0xff]
        %v558 = vld [vmem:[%s289 + $0x1c8] sm:$0xff]
        %v559 = vld [vmem:[%s289 + $0x1d0] sm:$0xff]
        %v560 = vld [vmem:[%s289 + $0x1d8] sm:$0xff]
        %v561 = vld [vmem:[%s289 + $0x1e0] sm:$0xff]
        %v562 = vld [vmem:[%s289 + $0x1e8] sm:$0xff]
        %v563 = vld [vmem:[%s289 + $0x1f0] sm:$0xff]
        %v564 = vld [vmem:[%s289 + $0x1f8] sm:$0xff]
        %v565 = vld [vmem:[%s289 + $0x200] sm:$0xff]
        %v566 = vld [vmem:[%s289 + $0x208] sm:$0xff]
        %v567 = vld [vmem:[%s289 + $0x210] sm:$0xff]
        %v568 = vld [vmem:[%s289 + $0x218] sm:$0xff]
        %v569 = vld [vmem:[%s289 + $0x220] sm:$0xff]
        %v570 = vld [vmem:[%s289 + $0x228] sm:$0xff]
        %v571 = vld [vmem:[%s289 + $0x230] sm:$0xff]
        %v572 = vld [vmem:[%s289 + $0x238] sm:$0xff]
        %v573 = vld [vmem:[%s289 + $0x240] sm:$0xff]
        %v574 = vld [vmem:[%s289 + $0x248] sm:$0xff]
        %v575 = vld [vmem:[%s289 + $0x250] sm:$0xff]
        %v576 = vld [vmem:[%s289 + $0x258] sm:$0xff]
        %v577 = vld [vmem:[%s289 + $0x260] sm:$0xff]
        %v578 = vld [vmem:[%s289 + $0x268] sm:$0xff]
        %v579 = vld [vmem:[%s289 + $0x270] sm:$0xff]
        %v580 = vld [vmem:[%s289 + $0x278] sm:$0xff]
        %v581 = vld [vmem:[%s289 + $0x280] sm:$0xff]
        %v582 = vld [vmem:[%s289 + $0x288] sm:$0xff]
        %v583 = vld [vmem:[%s289 + $0x290] sm:$0xff]
        %v584 = vld [vmem:[%s289 + $0x298] sm:$0xff]
        %v585 = vld [vmem:[%s289 + $0x2a0] sm:$0xff]
        %v586 = vld [vmem:[%s289 + $0x2a8] sm:$0xff]
        %v587 = vld [vmem:[%s289 + $0x2b0] sm:$0xff]
        %v588 = vld [vmem:[%s289 + $0x2b8] sm:$0xff]
        %v589 = vld [vmem:[%s289 + $0x2c0] sm:$0xff]
        %v590 = vld [vmem:[%s289 + $0x2c8] sm:$0xff]
        %v591 = vld [vmem:[%s289 + $0x2d0] sm:$0xff]
        %v592 = vld [vmem:[%s289 + $0x2d8] sm:$0xff]
        %v593 = vld [vmem:[%s289 + $0x2e0] sm:$0xff]
        %v594 = vld [vmem:[%s289 + $0x2e8] sm:$0xff]
        %v595 = vld [vmem:[%s289 + $0x2f0] sm:$0xff]
        %v596 = vld [vmem:[%s289 + $0x2f8] sm:$0xff]
        %v597 = vld [vmem:[%s289 + $0x300] sm:$0xff]
        %v598 = vld [vmem:[%s289 + $0x308] sm:$0xff]
        %v599 = vld [vmem:[%s289 + $0x310] sm:$0xff]
        %v600 = vld [vmem:[%s289 + $0x318] sm:$0xff]
        %v601 = vld [vmem:[%s289 + $0x320] sm:$0xff]
        %v602 = vld [vmem:[%s289 + $0x328] sm:$0xff]
        %v603 = vld [vmem:[%s289 + $0x330] sm:$0xff]
        %v604 = vld [vmem:[%s289 + $0x338] sm:$0xff]
        %v605 = vld [vmem:[%s289 + $0x340] sm:$0xff]
        %v606 = vld [vmem:[%s289 + $0x348] sm:$0xff]
        %v607 = vld [vmem:[%s289 + $0x350] sm:$0xff]
        %v608 = vld [vmem:[%s289 + $0x358] sm:$0xff]
        %v609 = vld [vmem:[%s289 + $0x360] sm:$0xff]
        %v610 = vld [vmem:[%s289 + $0x368] sm:$0xff]
        %v611 = vld [vmem:[%s289 + $0x370] sm:$0xff]
        %v612 = vld [vmem:[%s289 + $0x378] sm:$0xff]
        %v613 = vld [vmem:[%s289 + $0x380] sm:$0xff]
        %v614 = vld [vmem:[%s289 + $0x388] sm:$0xff]
        %v615 = vld [vmem:[%s289 + $0x390] sm:$0xff]
        %v616 = vld [vmem:[%s289 + $0x398] sm:$0xff]
        %v617 = vld [vmem:[%s289 + $0x3a0] sm:$0xff]
        %v618 = vld [vmem:[%s289 + $0x3a8] sm:$0xff]
        %v619 = vld [vmem:[%s289 + $0x3b0] sm:$0xff]
        %v620 = vld [vmem:[%s289 + $0x3b8] sm:$0xff]
        %v621 = vld [vmem:[%s289 + $0x3c0] sm:$0xff]
        %v622 = vld [vmem:[%s289 + $0x3c8] sm:$0xff]
        %v623 = vld [vmem:[%s289 + $0x3d0] sm:$0xff]
        %v624 = vld [vmem:[%s289 + $0x3d8] sm:$0xff]
        %v625 = vld [vmem:[%s289 + $0x3e0] sm:$0xff]
        %v626 = vld [vmem:[%s289 + $0x3e8] sm:$0xff]
        %v627 = vld [vmem:[%s289 + $0x3f0] sm:$0xff]
        %v628 = vld [vmem:[%s289 + $0x3f8] sm:$0xff]
        %v629 = vunpack.c.l.s8.bf16 %v501
        %v630 = vunpack.c.l.s8.bf16 %v502
        %v631 = vunpack.c.l.s8.bf16 %v503
        %v632 = vunpack.c.l.s8.bf16 %v504
        %v633 = vunpack.c.l.s8.bf16 %v505
        %v634 = vunpack.c.l.s8.bf16 %v506
        %v635 = vunpack.c.l.s8.bf16 %v507
        %v636 = vunpack.c.l.s8.bf16 %v508
        %v637 = vunpack.c.h.s8.bf16 %v501
        %v638 = vunpack.c.h.s8.bf16 %v502
        %v639 = vunpack.c.h.s8.bf16 %v503
        %v640 = vunpack.c.h.s8.bf16 %v504
        %v641 = vunpack.c.h.s8.bf16 %v505
        %v642 = vunpack.c.h.s8.bf16 %v506
        %v643 = vunpack.c.h.s8.bf16 %v507
        %v644 = vunpack.c.h.s8.bf16 %v508
        %v645 = vunpack.c.l.s8.bf16 %v509
        %v646 = vunpack.c.l.s8.bf16 %v510
        %v647 = vunpack.c.l.s8.bf16 %v511
        %v648 = vunpack.c.l.s8.bf16 %v512
        %v649 = vunpack.c.l.s8.bf16 %v513
        %v650 = vunpack.c.l.s8.bf16 %v514
        %v651 = vunpack.c.l.s8.bf16 %v515
        %v652 = vunpack.c.l.s8.bf16 %v516
        %v653 = vunpack.c.h.s8.bf16 %v509
        %v654 = vunpack.c.h.s8.bf16 %v510
        %v655 = vunpack.c.h.s8.bf16 %v511
        %v656 = vunpack.c.h.s8.bf16 %v512
        %v657 = vunpack.c.h.s8.bf16 %v513
        %v658 = vunpack.c.h.s8.bf16 %v514
        %v659 = vunpack.c.h.s8.bf16 %v515
        %v660 = vunpack.c.h.s8.bf16 %v516
        %v661 = vunpack.c.l.s8.bf16 %v517
        %v662 = vunpack.c.l.s8.bf16 %v518
        %v663 = vunpack.c.l.s8.bf16 %v519
        %v664 = vunpack.c.l.s8.bf16 %v520
        %v665 = vunpack.c.l.s8.bf16 %v521
        %v666 = vunpack.c.l.s8.bf16 %v522
        %v667 = vunpack.c.l.s8.bf16 %v523
        %v668 = vunpack.c.l.s8.bf16 %v524
        %v669 = vunpack.c.h.s8.bf16 %v517
        %v670 = vunpack.c.h.s8.bf16 %v518
        %v671 = vunpack.c.h.s8.bf16 %v519
        %v672 = vunpack.c.h.s8.bf16 %v520
        %v673 = vunpack.c.h.s8.bf16 %v521
        %v674 = vunpack.c.h.s8.bf16 %v522
        %v675 = vunpack.c.h.s8.bf16 %v523
        %v676 = vunpack.c.h.s8.bf16 %v524
        %v677 = vunpack.c.l.s8.bf16 %v525
        %v678 = vunpack.c.l.s8.bf16 %v526
        %v679 = vunpack.c.l.s8.bf16 %v527
        %v680 = vunpack.c.l.s8.bf16 %v528
        %v681 = vunpack.c.l.s8.bf16 %v529
        %v682 = vunpack.c.l.s8.bf16 %v530
        %v683 = vunpack.c.l.s8.bf16 %v531
        %v684 = vunpack.c.l.s8.bf16 %v532
        %v685 = vunpack.c.h.s8.bf16 %v525
        %v686 = vunpack.c.h.s8.bf16 %v526
        %v687 = vunpack.c.h.s8.bf16 %v527
        %v688 = vunpack.c.h.s8.bf16 %v528
        %v689 = vunpack.c.h.s8.bf16 %v529
        %v690 = vunpack.c.h.s8.bf16 %v530
        %v691 = vunpack.c.h.s8.bf16 %v531
        %v692 = vunpack.c.h.s8.bf16 %v532
        %v693 = vunpack.c.l.s8.bf16 %v533
        %v694 = vunpack.c.l.s8.bf16 %v534
        %v695 = vunpack.c.l.s8.bf16 %v535
        %v696 = vunpack.c.l.s8.bf16 %v536
        %v697 = vunpack.c.l.s8.bf16 %v537
        %v698 = vunpack.c.l.s8.bf16 %v538
        %v699 = vunpack.c.l.s8.bf16 %v539
        %v700 = vunpack.c.l.s8.bf16 %v540
        %v701 = vunpack.c.h.s8.bf16 %v533
        %v702 = vunpack.c.h.s8.bf16 %v534
        %v703 = vunpack.c.h.s8.bf16 %v535
        %v704 = vunpack.c.h.s8.bf16 %v536
        %v705 = vunpack.c.h.s8.bf16 %v537
        %v706 = vunpack.c.h.s8.bf16 %v538
        %v707 = vunpack.c.h.s8.bf16 %v539
        %v708 = vunpack.c.h.s8.bf16 %v540
        %v709 = vunpack.c.l.s8.bf16 %v541
        %v710 = vunpack.c.l.s8.bf16 %v542
        %v711 = vunpack.c.l.s8.bf16 %v543
        %v712 = vunpack.c.l.s8.bf16 %v544
        %v713 = vunpack.c.l.s8.bf16 %v545
        %v714 = vunpack.c.l.s8.bf16 %v546
        %v715 = vunpack.c.l.s8.bf16 %v547
        %v716 = vunpack.c.l.s8.bf16 %v548
        %v717 = vunpack.c.h.s8.bf16 %v541
        %v718 = vunpack.c.h.s8.bf16 %v542
        %v719 = vunpack.c.h.s8.bf16 %v543
        %v720 = vunpack.c.h.s8.bf16 %v544
        %v721 = vunpack.c.h.s8.bf16 %v545
        %v722 = vunpack.c.h.s8.bf16 %v546
        %v723 = vunpack.c.h.s8.bf16 %v547
        %v724 = vunpack.c.h.s8.bf16 %v548
        %v725 = vunpack.c.l.s8.bf16 %v549
        %v726 = vunpack.c.l.s8.bf16 %v550
        %v727 = vunpack.c.l.s8.bf16 %v551
        %v728 = vunpack.c.l.s8.bf16 %v552
        %v729 = vunpack.c.l.s8.bf16 %v553
        %v730 = vunpack.c.l.s8.bf16 %v554
        %v731 = vunpack.c.l.s8.bf16 %v555
        %v732 = vunpack.c.l.s8.bf16 %v556
        %v733 = vunpack.c.h.s8.bf16 %v549
        %v734 = vunpack.c.h.s8.bf16 %v550
        %v735 = vunpack.c.h.s8.bf16 %v551
        %v736 = vunpack.c.h.s8.bf16 %v552
        %v737 = vunpack.c.h.s8.bf16 %v553
        %v738 = vunpack.c.h.s8.bf16 %v554
        %v739 = vunpack.c.h.s8.bf16 %v555
        %v740 = vunpack.c.h.s8.bf16 %v556
        %v741 = vunpack.c.l.s8.bf16 %v557
        %v742 = vunpack.c.l.s8.bf16 %v558
        %v743 = vunpack.c.l.s8.bf16 %v559
        %v744 = vunpack.c.l.s8.bf16 %v560
        %v745 = vunpack.c.l.s8.bf16 %v561
        %v746 = vunpack.c.l.s8.bf16 %v562
        %v747 = vunpack.c.l.s8.bf16 %v563
        %v748 = vunpack.c.l.s8.bf16 %v564
        %v749 = vunpack.c.h.s8.bf16 %v557
        %v750 = vunpack.c.h.s8.bf16 %v558
        %v751 = vunpack.c.h.s8.bf16 %v559
        %v752 = vunpack.c.h.s8.bf16 %v560
        %v753 = vunpack.c.h.s8.bf16 %v561
        %v754 = vunpack.c.h.s8.bf16 %v562
        %v755 = vunpack.c.h.s8.bf16 %v563
        %v756 = vunpack.c.h.s8.bf16 %v564
        %v757 = vunpack.c.l.s8.bf16 %v565
        %v758 = vunpack.c.l.s8.bf16 %v566
        %v759 = vunpack.c.l.s8.bf16 %v567
        %v760 = vunpack.c.l.s8.bf16 %v568
        %v761 = vunpack.c.l.s8.bf16 %v569
        %v762 = vunpack.c.l.s8.bf16 %v570
        %v763 = vunpack.c.l.s8.bf16 %v571
        %v764 = vunpack.c.l.s8.bf16 %v572
        %v765 = vunpack.c.h.s8.bf16 %v565
        %v766 = vunpack.c.h.s8.bf16 %v566
        %v767 = vunpack.c.h.s8.bf16 %v567
        %v768 = vunpack.c.h.s8.bf16 %v568
        %v769 = vunpack.c.h.s8.bf16 %v569
        %v770 = vunpack.c.h.s8.bf16 %v570
        %v771 = vunpack.c.h.s8.bf16 %v571
        %v772 = vunpack.c.h.s8.bf16 %v572
        %v773 = vunpack.c.l.s8.bf16 %v573
        %v774 = vunpack.c.l.s8.bf16 %v574
        %v775 = vunpack.c.l.s8.bf16 %v575
        %v776 = vunpack.c.l.s8.bf16 %v576
        %v777 = vunpack.c.l.s8.bf16 %v577
        %v778 = vunpack.c.l.s8.bf16 %v578
        %v779 = vunpack.c.l.s8.bf16 %v579
        %v780 = vunpack.c.l.s8.bf16 %v580
        %v781 = vunpack.c.h.s8.bf16 %v573
        %v782 = vunpack.c.h.s8.bf16 %v574
        %v783 = vunpack.c.h.s8.bf16 %v575
        %v784 = vunpack.c.h.s8.bf16 %v576
        %v785 = vunpack.c.h.s8.bf16 %v577
        %v786 = vunpack.c.h.s8.bf16 %v578
        %v787 = vunpack.c.h.s8.bf16 %v579
        %v788 = vunpack.c.h.s8.bf16 %v580
        %v789 = vunpack.c.l.s8.bf16 %v581
        %v790 = vunpack.c.l.s8.bf16 %v582
        %v791 = vunpack.c.l.s8.bf16 %v583
        %v792 = vunpack.c.l.s8.bf16 %v584
        %v793 = vunpack.c.l.s8.bf16 %v585
        %v794 = vunpack.c.l.s8.bf16 %v586
        %v795 = vunpack.c.l.s8.bf16 %v587
        %v796 = vunpack.c.l.s8.bf16 %v588
        %v797 = vunpack.c.h.s8.bf16 %v581
        %v798 = vunpack.c.h.s8.bf16 %v582
        %v799 = vunpack.c.h.s8.bf16 %v583
        %v800 = vunpack.c.h.s8.bf16 %v584
        %v801 = vunpack.c.h.s8.bf16 %v585
        %v802 = vunpack.c.h.s8.bf16 %v586
        %v803 = vunpack.c.h.s8.bf16 %v587
        %v804 = vunpack.c.h.s8.bf16 %v588
        %v805 = vunpack.c.l.s8.bf16 %v589
        %v806 = vunpack.c.l.s8.bf16 %v590
        %v807 = vunpack.c.l.s8.bf16 %v591
        %v808 = vunpack.c.l.s8.bf16 %v592
        %v809 = vunpack.c.l.s8.bf16 %v593
        %v810 = vunpack.c.l.s8.bf16 %v594
        %v811 = vunpack.c.l.s8.bf16 %v595
        %v812 = vunpack.c.l.s8.bf16 %v596
        %v813 = vunpack.c.h.s8.bf16 %v589
        %v814 = vunpack.c.h.s8.bf16 %v590
        %v815 = vunpack.c.h.s8.bf16 %v591
        %v816 = vunpack.c.h.s8.bf16 %v592
        %v817 = vunpack.c.h.s8.bf16 %v593
        %v818 = vunpack.c.h.s8.bf16 %v594
        %v819 = vunpack.c.h.s8.bf16 %v595
        %v820 = vunpack.c.h.s8.bf16 %v596
        %v821 = vunpack.c.l.s8.bf16 %v597
        %v822 = vunpack.c.l.s8.bf16 %v598
        %v823 = vunpack.c.l.s8.bf16 %v599
        %v824 = vunpack.c.l.s8.bf16 %v600
        %v825 = vunpack.c.l.s8.bf16 %v601
        %v826 = vunpack.c.l.s8.bf16 %v602
        %v827 = vunpack.c.l.s8.bf16 %v603
        %v828 = vunpack.c.l.s8.bf16 %v604
        %v829 = vunpack.c.h.s8.bf16 %v597
        %v830 = vunpack.c.h.s8.bf16 %v598
        %v831 = vunpack.c.h.s8.bf16 %v599
        %v832 = vunpack.c.h.s8.bf16 %v600
        %v833 = vunpack.c.h.s8.bf16 %v601
        %v834 = vunpack.c.h.s8.bf16 %v602
        %v835 = vunpack.c.h.s8.bf16 %v603
        %v836 = vunpack.c.h.s8.bf16 %v604
        %v837 = vunpack.c.l.s8.bf16 %v605
        %v838 = vunpack.c.l.s8.bf16 %v606
        %v839 = vunpack.c.l.s8.bf16 %v607
        %v840 = vunpack.c.l.s8.bf16 %v608
        %v841 = vunpack.c.l.s8.bf16 %v609
        %v842 = vunpack.c.l.s8.bf16 %v610
        %v843 = vunpack.c.l.s8.bf16 %v611
        %v844 = vunpack.c.l.s8.bf16 %v612
        %v845 = vunpack.c.h.s8.bf16 %v605
        %v846 = vunpack.c.h.s8.bf16 %v606
        %v847 = vunpack.c.h.s8.bf16 %v607
        %v848 = vunpack.c.h.s8.bf16 %v608
        %v849 = vunpack.c.h.s8.bf16 %v609
        %v850 = vunpack.c.h.s8.bf16 %v610
        %v851 = vunpack.c.h.s8.bf16 %v611
        %v852 = vunpack.c.h.s8.bf16 %v612
        %v853 = vunpack.c.l.s8.bf16 %v613
        %v854 = vunpack.c.l.s8.bf16 %v614
        %v855 = vunpack.c.l.s8.bf16 %v615
        %v856 = vunpack.c.l.s8.bf16 %v616
        %v857 = vunpack.c.l.s8.bf16 %v617
        %v858 = vunpack.c.l.s8.bf16 %v618
        %v859 = vunpack.c.l.s8.bf16 %v619
        %v860 = vunpack.c.l.s8.bf16 %v620
        %v861 = vunpack.c.h.s8.bf16 %v613
        %v862 = vunpack.c.h.s8.bf16 %v614
        %v863 = vunpack.c.h.s8.bf16 %v615
        %v864 = vunpack.c.h.s8.bf16 %v616
        %v865 = vunpack.c.h.s8.bf16 %v617
        %v866 = vunpack.c.h.s8.bf16 %v618
        %v867 = vunpack.c.h.s8.bf16 %v619
        %v868 = vunpack.c.h.s8.bf16 %v620
        %v869 = vunpack.c.l.s8.bf16 %v621
        %v870 = vunpack.c.l.s8.bf16 %v622
        %v871 = vunpack.c.l.s8.bf16 %v623
        %v872 = vunpack.c.l.s8.bf16 %v624
        %v873 = vunpack.c.l.s8.bf16 %v625
        %v874 = vunpack.c.l.s8.bf16 %v626
        %v875 = vunpack.c.l.s8.bf16 %v627
        %v876 = vunpack.c.l.s8.bf16 %v628
        %v877 = vunpack.c.h.s8.bf16 %v621
        %v878 = vunpack.c.h.s8.bf16 %v622
        %v879 = vunpack.c.h.s8.bf16 %v623
        %v880 = vunpack.c.h.s8.bf16 %v624
        %v881 = vunpack.c.h.s8.bf16 %v625
        %v882 = vunpack.c.h.s8.bf16 %v626
        %v883 = vunpack.c.h.s8.bf16 %v627
        %v884 = vunpack.c.h.s8.bf16 %v628
        %v885 = vld [vmem:[%s298] sm:$0xf]
        %v886 = vld [vmem:[%s298 + $0x4] sm:$0xf]
        %v887 = vld [vmem:[%s298 + $0x8] sm:$0xf]
        %v888 = vld [vmem:[%s298 + $0xc] sm:$0xf]
        %v889 = vld [vmem:[%s298 + $0x10] sm:$0xf]
        %v890 = vld [vmem:[%s298 + $0x14] sm:$0xf]
        %v891 = vld [vmem:[%s298 + $0x18] sm:$0xf]
        %v892 = vld [vmem:[%s298 + $0x1c] sm:$0xf]
        %v893 = vld [vmem:[%s298 + $0x20] sm:$0xf]
        %v894 = vld [vmem:[%s298 + $0x24] sm:$0xf]
        %v895 = vld [vmem:[%s298 + $0x28] sm:$0xf]
        %v896 = vld [vmem:[%s298 + $0x2c] sm:$0xf]
        %v897 = vld [vmem:[%s298 + $0x30] sm:$0xf]
        %v898 = vld [vmem:[%s298 + $0x34] sm:$0xf]
        %v899 = vld [vmem:[%s298 + $0x38] sm:$0xf]
        %v900 = vld [vmem:[%s298 + $0x3c] sm:$0xf]
        %v901 = vld [vmem:[%s298 + $0x40] sm:$0xf]
        %v902 = vld [vmem:[%s298 + $0x44] sm:$0xf]
        %v903 = vld [vmem:[%s298 + $0x48] sm:$0xf]
        %v904 = vld [vmem:[%s298 + $0x4c] sm:$0xf]
        %v905 = vld [vmem:[%s298 + $0x50] sm:$0xf]
        %v906 = vld [vmem:[%s298 + $0x54] sm:$0xf]
        %v907 = vld [vmem:[%s298 + $0x58] sm:$0xf]
        %v908 = vld [vmem:[%s298 + $0x5c] sm:$0xf]
        %v909 = vld [vmem:[%s298 + $0x60] sm:$0xf]
        %v910 = vld [vmem:[%s298 + $0x64] sm:$0xf]
        %v911 = vld [vmem:[%s298 + $0x68] sm:$0xf]
        %v912 = vld [vmem:[%s298 + $0x6c] sm:$0xf]
        %v913 = vld [vmem:[%s298 + $0x70] sm:$0xf]
        %v914 = vld [vmem:[%s298 + $0x74] sm:$0xf]
        %v915 = vld [vmem:[%s298 + $0x78] sm:$0xf]
        %v916 = vld [vmem:[%s298 + $0x7c] sm:$0xf]
        %v917 = vld [vmem:[%s298 + $0x80] sm:$0xf]
        %v918 = vld [vmem:[%s298 + $0x84] sm:$0xf]
        %v919 = vld [vmem:[%s298 + $0x88] sm:$0xf]
        %v920 = vld [vmem:[%s298 + $0x8c] sm:$0xf]
        %v921 = vld [vmem:[%s298 + $0x90] sm:$0xf]
        %v922 = vld [vmem:[%s298 + $0x94] sm:$0xf]
        %v923 = vld [vmem:[%s298 + $0x98] sm:$0xf]
        %v924 = vld [vmem:[%s298 + $0x9c] sm:$0xf]
        %v925 = vld [vmem:[%s298 + $0xa0] sm:$0xf]
        %v926 = vld [vmem:[%s298 + $0xa4] sm:$0xf]
        %v927 = vld [vmem:[%s298 + $0xa8] sm:$0xf]
        %v928 = vld [vmem:[%s298 + $0xac] sm:$0xf]
        %v929 = vld [vmem:[%s298 + $0xb0] sm:$0xf]
        %v930 = vld [vmem:[%s298 + $0xb4] sm:$0xf]
        %v931 = vld [vmem:[%s298 + $0xb8] sm:$0xf]
        %v932 = vld [vmem:[%s298 + $0xbc] sm:$0xf]
        %v933 = vld [vmem:[%s298 + $0xc0] sm:$0xf]
        %v934 = vld [vmem:[%s298 + $0xc4] sm:$0xf]
        %v935 = vld [vmem:[%s298 + $0xc8] sm:$0xf]
        %v936 = vld [vmem:[%s298 + $0xcc] sm:$0xf]
        %v937 = vld [vmem:[%s298 + $0xd0] sm:$0xf]
        %v938 = vld [vmem:[%s298 + $0xd4] sm:$0xf]
        %v939 = vld [vmem:[%s298 + $0xd8] sm:$0xf]
        %v940 = vld [vmem:[%s298 + $0xdc] sm:$0xf]
        %v941 = vld [vmem:[%s298 + $0xe0] sm:$0xf]
        %v942 = vld [vmem:[%s298 + $0xe4] sm:$0xf]
        %v943 = vld [vmem:[%s298 + $0xe8] sm:$0xf]
        %v944 = vld [vmem:[%s298 + $0xec] sm:$0xf]
        %v945 = vld [vmem:[%s298 + $0xf0] sm:$0xf]
        %v946 = vld [vmem:[%s298 + $0xf4] sm:$0xf]
        %v947 = vld [vmem:[%s298 + $0xf8] sm:$0xf]
        %v948 = vld [vmem:[%s298 + $0xfc] sm:$0xf]
        %v949 = vld [vmem:[%s298 + $0x100] sm:$0xf]
        %v950 = vld [vmem:[%s298 + $0x104] sm:$0xf]
        %v951 = vld [vmem:[%s298 + $0x108] sm:$0xf]
        %v952 = vld [vmem:[%s298 + $0x10c] sm:$0xf]
        %v953 = vld [vmem:[%s298 + $0x110] sm:$0xf]
        %v954 = vld [vmem:[%s298 + $0x114] sm:$0xf]
        %v955 = vld [vmem:[%s298 + $0x118] sm:$0xf]
        %v956 = vld [vmem:[%s298 + $0x11c] sm:$0xf]
        %v957 = vld [vmem:[%s298 + $0x120] sm:$0xf]
        %v958 = vld [vmem:[%s298 + $0x124] sm:$0xf]
        %v959 = vld [vmem:[%s298 + $0x128] sm:$0xf]
        %v960 = vld [vmem:[%s298 + $0x12c] sm:$0xf]
        %v961 = vld [vmem:[%s298 + $0x130] sm:$0xf]
        %v962 = vld [vmem:[%s298 + $0x134] sm:$0xf]
        %v963 = vld [vmem:[%s298 + $0x138] sm:$0xf]
        %v964 = vld [vmem:[%s298 + $0x13c] sm:$0xf]
        %v965 = vld [vmem:[%s298 + $0x140] sm:$0xf]
        %v966 = vld [vmem:[%s298 + $0x144] sm:$0xf]
        %v967 = vld [vmem:[%s298 + $0x148] sm:$0xf]
        %v968 = vld [vmem:[%s298 + $0x14c] sm:$0xf]
        %v969 = vld [vmem:[%s298 + $0x150] sm:$0xf]
        %v970 = vld [vmem:[%s298 + $0x154] sm:$0xf]
        %v971 = vld [vmem:[%s298 + $0x158] sm:$0xf]
        %v972 = vld [vmem:[%s298 + $0x15c] sm:$0xf]
        %v973 = vld [vmem:[%s298 + $0x160] sm:$0xf]
        %v974 = vld [vmem:[%s298 + $0x164] sm:$0xf]
        %v975 = vld [vmem:[%s298 + $0x168] sm:$0xf]
        %v976 = vld [vmem:[%s298 + $0x16c] sm:$0xf]
        %v977 = vld [vmem:[%s298 + $0x170] sm:$0xf]
        %v978 = vld [vmem:[%s298 + $0x174] sm:$0xf]
        %v979 = vld [vmem:[%s298 + $0x178] sm:$0xf]
        %v980 = vld [vmem:[%s298 + $0x17c] sm:$0xf]
        %v981 = vld [vmem:[%s298 + $0x180] sm:$0xf]
        %v982 = vld [vmem:[%s298 + $0x184] sm:$0xf]
        %v983 = vld [vmem:[%s298 + $0x188] sm:$0xf]
        %v984 = vld [vmem:[%s298 + $0x18c] sm:$0xf]
        %v985 = vld [vmem:[%s298 + $0x190] sm:$0xf]
        %v986 = vld [vmem:[%s298 + $0x194] sm:$0xf]
        %v987 = vld [vmem:[%s298 + $0x198] sm:$0xf]
        %v988 = vld [vmem:[%s298 + $0x19c] sm:$0xf]
        %v989 = vld [vmem:[%s298 + $0x1a0] sm:$0xf]
        %v990 = vld [vmem:[%s298 + $0x1a4] sm:$0xf]
        %v991 = vld [vmem:[%s298 + $0x1a8] sm:$0xf]
        %v992 = vld [vmem:[%s298 + $0x1ac] sm:$0xf]
        %v993 = vld [vmem:[%s298 + $0x1b0] sm:$0xf]
        %v994 = vld [vmem:[%s298 + $0x1b4] sm:$0xf]
        %v995 = vld [vmem:[%s298 + $0x1b8] sm:$0xf]
        %v996 = vld [vmem:[%s298 + $0x1bc] sm:$0xf]
        %v997 = vld [vmem:[%s298 + $0x1c0] sm:$0xf]
        %v998 = vld [vmem:[%s298 + $0x1c4] sm:$0xf]
        %v999 = vld [vmem:[%s298 + $0x1c8] sm:$0xf]
        %v1000 = vld [vmem:[%s298 + $0x1cc] sm:$0xf]
        %v1001 = vld [vmem:[%s298 + $0x1d0] sm:$0xf]
        %v1002 = vld [vmem:[%s298 + $0x1d4] sm:$0xf]
        %v1003 = vld [vmem:[%s298 + $0x1d8] sm:$0xf]
        %v1004 = vld [vmem:[%s298 + $0x1dc] sm:$0xf]
        %v1005 = vld [vmem:[%s298 + $0x1e0] sm:$0xf]
        %v1006 = vld [vmem:[%s298 + $0x1e4] sm:$0xf]
        %v1007 = vld [vmem:[%s298 + $0x1e8] sm:$0xf]
        %v1008 = vld [vmem:[%s298 + $0x1ec] sm:$0xf]
        %v1009 = vld [vmem:[%s298 + $0x1f0] sm:$0xf]
        %v1010 = vld [vmem:[%s298 + $0x1f4] sm:$0xf]
        %v1011 = vld [vmem:[%s298 + $0x1f8] sm:$0xf]
        %v1012 = vld [vmem:[%s298 + $0x1fc] sm:$0xf]
        %v1141 = vunpack.c.l.b16 %v885
        %v1142 = vunpack.c.l.b16 %v886
        %v1143 = vunpack.c.l.b16 %v887
        %v1144 = vunpack.c.l.b16 %v888
        %v1145 = vunpack.c.l.b16 %v889
        %v1146 = vunpack.c.l.b16 %v890
        %v1147 = vunpack.c.l.b16 %v891
        %v1148 = vunpack.c.l.b16 %v892
        %v1149 = vunpack.c.l.b16 %v893
        %v1150 = vunpack.c.l.b16 %v894
        %v1151 = vunpack.c.l.b16 %v895
        %v1152 = vunpack.c.l.b16 %v896
        %v1153 = vunpack.c.l.b16 %v897
        %v1154 = vunpack.c.l.b16 %v898
        %v1155 = vunpack.c.l.b16 %v899
        %v1156 = vunpack.c.l.b16 %v900
        %v1157 = vunpack.c.l.b16 %v901
        %v1158 = vunpack.c.l.b16 %v902
        %v1159 = vunpack.c.l.b16 %v903
        %v1160 = vunpack.c.l.b16 %v904
        %v1161 = vunpack.c.l.b16 %v905
        %v1162 = vunpack.c.l.b16 %v906
        %v1163 = vunpack.c.l.b16 %v907
        %v1164 = vunpack.c.l.b16 %v908
        %v1165 = vunpack.c.l.b16 %v909
        %v1166 = vunpack.c.l.b16 %v910
        %v1167 = vunpack.c.l.b16 %v911
        %v1168 = vunpack.c.l.b16 %v912
        %v1169 = vunpack.c.l.b16 %v913
        %v1170 = vunpack.c.l.b16 %v914
        %v1171 = vunpack.c.l.b16 %v915
        %v1172 = vunpack.c.l.b16 %v916
        %v1173 = vunpack.c.l.b16 %v917
        %v1174 = vunpack.c.l.b16 %v918
        %v1175 = vunpack.c.l.b16 %v919
        %v1176 = vunpack.c.l.b16 %v920
        %v1177 = vunpack.c.l.b16 %v921
        %v1178 = vunpack.c.l.b16 %v922
        %v1179 = vunpack.c.l.b16 %v923
        %v1180 = vunpack.c.l.b16 %v924
        %v1181 = vunpack.c.l.b16 %v925
        %v1182 = vunpack.c.l.b16 %v926
        %v1183 = vunpack.c.l.b16 %v927
        %v1184 = vunpack.c.l.b16 %v928
        %v1185 = vunpack.c.l.b16 %v929
        %v1186 = vunpack.c.l.b16 %v930
        %v1187 = vunpack.c.l.b16 %v931
        %v1188 = vunpack.c.l.b16 %v932
        %v1189 = vunpack.c.l.b16 %v933
        %v1190 = vunpack.c.l.b16 %v934
        %v1191 = vunpack.c.l.b16 %v935
        %v1192 = vunpack.c.l.b16 %v936
        %v1193 = vunpack.c.l.b16 %v937
        %v1194 = vunpack.c.l.b16 %v938
        %v1195 = vunpack.c.l.b16 %v939
        %v1196 = vunpack.c.l.b16 %v940
        %v1197 = vunpack.c.l.b16 %v941
        %v1198 = vunpack.c.l.b16 %v942
        %v1199 = vunpack.c.l.b16 %v943
        %v1200 = vunpack.c.l.b16 %v944
        %v1201 = vunpack.c.l.b16 %v945
        %v1202 = vunpack.c.l.b16 %v946
        %v1203 = vunpack.c.l.b16 %v947
        %v1204 = vunpack.c.l.b16 %v948
        %v1205 = vunpack.c.l.b16 %v949
        %v1206 = vunpack.c.l.b16 %v950
        %v1207 = vunpack.c.l.b16 %v951
        %v1208 = vunpack.c.l.b16 %v952
        %v1209 = vunpack.c.l.b16 %v953
        %v1210 = vunpack.c.l.b16 %v954
        %v1211 = vunpack.c.l.b16 %v955
        %v1212 = vunpack.c.l.b16 %v956
        %v1213 = vunpack.c.l.b16 %v957
        %v1214 = vunpack.c.l.b16 %v958
        %v1215 = vunpack.c.l.b16 %v959
        %v1216 = vunpack.c.l.b16 %v960
        %v1217 = vunpack.c.l.b16 %v961
        %v1218 = vunpack.c.l.b16 %v962
        %v1219 = vunpack.c.l.b16 %v963
        %v1220 = vunpack.c.l.b16 %v964
        %v1221 = vunpack.c.l.b16 %v965
        %v1222 = vunpack.c.l.b16 %v966
        %v1223 = vunpack.c.l.b16 %v967
        %v1224 = vunpack.c.l.b16 %v968
        %v1225 = vunpack.c.l.b16 %v969
        %v1226 = vunpack.c.l.b16 %v970
        %v1227 = vunpack.c.l.b16 %v971
        %v1228 = vunpack.c.l.b16 %v972
        %v1229 = vunpack.c.l.b16 %v973
        %v1230 = vunpack.c.l.b16 %v974
        %v1231 = vunpack.c.l.b16 %v975
        %v1232 = vunpack.c.l.b16 %v976
        %v1233 = vunpack.c.l.b16 %v977
        %v1234 = vunpack.c.l.b16 %v978
        %v1235 = vunpack.c.l.b16 %v979
        %v1236 = vunpack.c.l.b16 %v980
        %v1237 = vunpack.c.l.b16 %v981
        %v1238 = vunpack.c.l.b16 %v982
        %v1239 = vunpack.c.l.b16 %v983
        %v1240 = vunpack.c.l.b16 %v984
        %v1241 = vunpack.c.l.b16 %v985
        %v1242 = vunpack.c.l.b16 %v986
        %v1243 = vunpack.c.l.b16 %v987
        %v1244 = vunpack.c.l.b16 %v988
        %v1245 = vunpack.c.l.b16 %v989
        %v1246 = vunpack.c.l.b16 %v990
        %v1247 = vunpack.c.l.b16 %v991
        %v1248 = vunpack.c.l.b16 %v992
        %v1249 = vunpack.c.l.b16 %v993
        %v1250 = vunpack.c.l.b16 %v994
        %v1251 = vunpack.c.l.b16 %v995
        %v1252 = vunpack.c.l.b16 %v996
        %v1253 = vunpack.c.l.b16 %v997
        %v1254 = vunpack.c.l.b16 %v998
        %v1255 = vunpack.c.l.b16 %v999
        %v1256 = vunpack.c.l.b16 %v1000
        %v1257 = vunpack.c.l.b16 %v1001
        %v1258 = vunpack.c.l.b16 %v1002
        %v1259 = vunpack.c.l.b16 %v1003
        %v1260 = vunpack.c.l.b16 %v1004
        %v1261 = vunpack.c.l.b16 %v1005
        %v1262 = vunpack.c.l.b16 %v1006
        %v1263 = vunpack.c.l.b16 %v1007
        %v1264 = vunpack.c.l.b16 %v1008
        %v1265 = vunpack.c.l.b16 %v1009
        %v1266 = vunpack.c.l.b16 %v1010
        %v1267 = vunpack.c.l.b16 %v1011
        %v1268 = vunpack.c.l.b16 %v1012
        %v1269 = vpack.c.b16 %v1142, %v1141
        %v1270 = vpack.c.b16 %v1144, %v1143
        %v1271 = vpack.c.b16 %v1146, %v1145
        %v1272 = vpack.c.b16 %v1148, %v1147
        %v1273 = vpack.c.b16 %v1150, %v1149
        %v1274 = vpack.c.b16 %v1152, %v1151
        %v1275 = vpack.c.b16 %v1154, %v1153
        %v1276 = vpack.c.b16 %v1156, %v1155
        %v1277 = vpack.c.b16 %v1158, %v1157
        %v1278 = vpack.c.b16 %v1160, %v1159
        %v1279 = vpack.c.b16 %v1162, %v1161
        %v1280 = vpack.c.b16 %v1164, %v1163
        %v1281 = vpack.c.b16 %v1166, %v1165
        %v1282 = vpack.c.b16 %v1168, %v1167
        %v1283 = vpack.c.b16 %v1170, %v1169
        %v1284 = vpack.c.b16 %v1172, %v1171
        %v1285 = vpack.c.b16 %v1174, %v1173
        %v1286 = vpack.c.b16 %v1176, %v1175
        %v1287 = vpack.c.b16 %v1178, %v1177
        %v1288 = vpack.c.b16 %v1180, %v1179
        %v1289 = vpack.c.b16 %v1182, %v1181
        %v1290 = vpack.c.b16 %v1184, %v1183
        %v1291 = vpack.c.b16 %v1186, %v1185
        %v1292 = vpack.c.b16 %v1188, %v1187
        %v1293 = vpack.c.b16 %v1190, %v1189
        %v1294 = vpack.c.b16 %v1192, %v1191
        %v1295 = vpack.c.b16 %v1194, %v1193
        %v1296 = vpack.c.b16 %v1196, %v1195
        %v1297 = vpack.c.b16 %v1198, %v1197
        %v1298 = vpack.c.b16 %v1200, %v1199
        %v1299 = vpack.c.b16 %v1202, %v1201
        %v1300 = vpack.c.b16 %v1204, %v1203
        %v1301 = vpack.c.b16 %v1206, %v1205
        %v1302 = vpack.c.b16 %v1208, %v1207
        %v1303 = vpack.c.b16 %v1210, %v1209
        %v1304 = vpack.c.b16 %v1212, %v1211
        %v1305 = vpack.c.b16 %v1214, %v1213
        %v1306 = vpack.c.b16 %v1216, %v1215
        %v1307 = vpack.c.b16 %v1218, %v1217
        %v1308 = vpack.c.b16 %v1220, %v1219
        %v1309 = vpack.c.b16 %v1222, %v1221
        %v1310 = vpack.c.b16 %v1224, %v1223
        %v1311 = vpack.c.b16 %v1226, %v1225
        %v1312 = vpack.c.b16 %v1228, %v1227
        %v1313 = vpack.c.b16 %v1230, %v1229
        %v1314 = vpack.c.b16 %v1232, %v1231
        %v1315 = vpack.c.b16 %v1234, %v1233
        %v1316 = vpack.c.b16 %v1236, %v1235
        %v1317 = vpack.c.b16 %v1238, %v1237
        %v1318 = vpack.c.b16 %v1240, %v1239
        %v1319 = vpack.c.b16 %v1242, %v1241
        %v1320 = vpack.c.b16 %v1244, %v1243
        %v1321 = vpack.c.b16 %v1246, %v1245
        %v1322 = vpack.c.b16 %v1248, %v1247
        %v1323 = vpack.c.b16 %v1250, %v1249
        %v1324 = vpack.c.b16 %v1252, %v1251
        %v1325 = vpack.c.b16 %v1254, %v1253
        %v1326 = vpack.c.b16 %v1256, %v1255
        %v1327 = vpack.c.b16 %v1258, %v1257
        %v1328 = vpack.c.b16 %v1260, %v1259
        %v1329 = vpack.c.b16 %v1262, %v1261
        %v1330 = vpack.c.b16 %v1264, %v1263
        %v1331 = vpack.c.b16 %v1266, %v1265
        %v1332 = vpack.c.b16 %v1268, %v1267
        %1397 = vmatprep.subr.bf16.mxu0 0
        %1398 = vmatpush1.bf16.msra.mxu0 %v1269
        %1399 = vmatprep.subr.bf16.mxu0 0
        %1400 = vmatpush1.bf16.msra.mxu0 %v1270
        %1401 = vmatprep.subr.bf16.mxu0 0
        %1402 = vmatpush1.bf16.msra.mxu0 %v1271
        %1403 = vmatprep.subr.bf16.mxu0 0
        %1404 = vmatpush1.bf16.msra.mxu0 %v1272
        %1405 = vmatprep.subr.bf16.mxu0 0
        %1406 = vmatpush1.bf16.msra.mxu0 %v1273
        %1407 = vmatprep.subr.bf16.mxu0 0
        %1408 = vmatpush1.bf16.msra.mxu0 %v1274
        %1409 = vmatprep.subr.bf16.mxu0 0
        %1410 = vmatpush1.bf16.msra.mxu0 %v1275
        %1411 = vmatprep.subr.bf16.mxu0 0
        %1412 = vmatpush1.bf16.msra.mxu0 %v1276
        %1413 = vmatprep.subr.bf16.mxu0 0
        %1414 = vmatpush1.bf16.msra.mxu0 %v1277
        %1415 = vmatprep.subr.bf16.mxu0 0
        %1416 = vmatpush1.bf16.msra.mxu0 %v1278
        %1417 = vmatprep.subr.bf16.mxu0 0
        %1418 = vmatpush1.bf16.msra.mxu0 %v1279
        %1419 = vmatprep.subr.bf16.mxu0 0
        %1420 = vmatpush1.bf16.msra.mxu0 %v1280
        %1421 = vmatprep.subr.bf16.mxu0 0
        %1422 = vmatpush1.bf16.msra.mxu0 %v1281
        %1423 = vmatprep.subr.bf16.mxu0 0
        %1424 = vmatpush1.bf16.msra.mxu0 %v1282
        %1425 = vmatprep.subr.bf16.mxu0 0
        %1426 = vmatpush1.bf16.msra.mxu0 %v1283
        %1427 = vmatprep.subr.bf16.mxu0 0
        %1428 = vmatpush1.bf16.msra.mxu0 %v1284
        %1429 = vmatprep.mubr.bf16.mxu0 %v630
        %1430 = vmatmul.mubr.bf16.gmra.mrb[0].mxu0 %v629
        %v1431 = vpop.f32.mrb[0].mxu0
        %v1432 = vadd.f32 0.0, %v1431
        %v1433 = vpop.f32.mrb[0].mxu0
        %v1434 = vpop.f32.mrb[0].mxu0
        %v1435 = vadd.f32 0.0, %v1434
        %v1436 = vpop.f32.mrb[0].mxu0
        %1437 = vmatprep.mubr.bf16.mxu0 %v638
        %1438 = vmatmul.mubr.bf16.gmra.mrb[0].mxu0 %v637
        %v1439 = vpop.f32.mrb[0].mxu0
        %v1440 = vadd.f32 0.0, %v1439
        %v1441 = vpop.f32.mrb[0].mxu0
        %v1442 = vpop.f32.mrb[0].mxu0
        %v1443 = vadd.f32 0.0, %v1442
        %v1444 = vpop.f32.mrb[0].mxu0
        %1445 = vmatprep.mubr.bf16.mxu0 %v646
        %1446 = vmatmul.mubr.bf16.gmra.mrb[0].mxu0 %v645
        %v1447 = vpop.f32.mrb[0].mxu0
        %v1448 = vadd.f32 0.0, %v1447
        %v1449 = vpop.f32.mrb[0].mxu0
        %v1450 = vpop.f32.mrb[0].mxu0
        %v1451 = vadd.f32 0.0, %v1450
        %v1452 = vpop.f32.mrb[0].mxu0
        %1453 = vmatprep.mubr.bf16.mxu0 %v654
        %1454 = vmatmul.mubr.bf16.gmra.mrb[0].mxu0 %v653
        %v1455 = vpop.f32.mrb[0].mxu0
        %v1456 = vadd.f32 0.0, %v1455
        %v1457 = vpop.f32.mrb[0].mxu0
        %v1458 = vpop.f32.mrb[0].mxu0
        %v1459 = vadd.f32 0.0, %v1458
        %v1460 = vpop.f32.mrb[0].mxu0
        %1461 = vmatprep.mubr.bf16.mxu0 %v662
        %1462 = vmatmul.mubr.bf16.gmra.mrb[0].mxu0 %v661
        %v1463 = vpop.f32.mrb[0].mxu0
        %v1464 = vadd.f32 0.0, %v1463
        %v1465 = vpop.f32.mrb[0].mxu0
        %v1466 = vpop.f32.mrb[0].mxu0
        %v1467 = vadd.f32 0.0, %v1466
        %v1468 = vpop.f32.mrb[0].mxu0
        %1469 = vmatprep.mubr.bf16.mxu0 %v670
        %1470 = vmatmul.mubr.bf16.gmra.mrb[0].mxu0 %v669
        %v1471 = vpop.f32.mrb[0].mxu0
        %v1472 = vadd.f32 0.0, %v1471
        %v1473 = vpop.f32.mrb[0].mxu0
        %v1474 = vpop.f32.mrb[0].mxu0
        %v1475 = vadd.f32 0.0, %v1474
        %v1476 = vpop.f32.mrb[0].mxu0
        %1477 = vmatprep.mubr.bf16.mxu0 %v678
        %1478 = vmatmul.mubr.bf16.gmra.mrb[0].mxu0 %v677
        %v1479 = vpop.f32.mrb[0].mxu0
        %v1480 = vadd.f32 0.0, %v1479
        %v1481 = vpop.f32.mrb[0].mxu0
        %v1482 = vpop.f32.mrb[0].mxu0
        %v1483 = vadd.f32 0.0, %v1482
        %v1484 = vpop.f32.mrb[0].mxu0
        %1485 = vmatprep.mubr.bf16.mxu0 %v686
        %1486 = vmatmul.mubr.bf16.gmra.mrb[0].mxu0 %v685
        %v1487 = vpop.f32.mrb[0].mxu0
        %v1488 = vadd.f32 0.0, %v1487
        %v1489 = vpop.f32.mrb[0].mxu0
        %v1490 = vpop.f32.mrb[0].mxu0
        %v1491 = vadd.f32 0.0, %v1490
        %v1492 = vpop.f32.mrb[0].mxu0
        %1493 = vmatprep.mubr.bf16.mxu0 %v694
        %1494 = vmatmul.mubr.bf16.gmra.mrb[0].mxu0 %v693
        %v1495 = vpop.f32.mrb[0].mxu0
        %v1496 = vadd.f32 0.0, %v1495
        %v1497 = vpop.f32.mrb[0].mxu0
        %v1498 = vpop.f32.mrb[0].mxu0
        %v1499 = vadd.f32 0.0, %v1498
        %v1500 = vpop.f32.mrb[0].mxu0
        %1501 = vmatprep.mubr.bf16.mxu0 %v702
        %1502 = vmatmul.mubr.bf16.gmra.mrb[0].mxu0 %v701
        %v1503 = vpop.f32.mrb[0].mxu0
        %v1504 = vadd.f32 0.0, %v1503
        %v1505 = vpop.f32.mrb[0].mxu0
        %v1506 = vpop.f32.mrb[0].mxu0
        %v1507 = vadd.f32 0.0, %v1506
        %v1508 = vpop.f32.mrb[0].mxu0
        %1509 = vmatprep.mubr.bf16.mxu0 %v710
        %1510 = vmatmul.mubr.bf16.gmra.mrb[0].mxu0 %v709
        %v1511 = vpop.f32.mrb[0].mxu0
        %v1512 = vadd.f32 0.0, %v1511
        %v1513 = vpop.f32.mrb[0].mxu0
        %v1514 = vpop.f32.mrb[0].mxu0
        %v1515 = vadd.f32 0.0, %v1514
        %v1516 = vpop.f32.mrb[0].mxu0
        %1517 = vmatprep.mubr.bf16.mxu0 %v718
        %1518 = vmatmul.mubr.bf16.gmra.mrb[0].mxu0 %v717
        %v1519 = vpop.f32.mrb[0].mxu0
        %v1520 = vadd.f32 0.0, %v1519
        %v1521 = vpop.f32.mrb[0].mxu0
        %v1522 = vpop.f32.mrb[0].mxu0
        %v1523 = vadd.f32 0.0, %v1522
        %v1524 = vpop.f32.mrb[0].mxu0
        %1525 = vmatprep.mubr.bf16.mxu0 %v726
        %1526 = vmatmul.mubr.bf16.gmra.mrb[0].mxu0 %v725
        %v1527 = vpop.f32.mrb[0].mxu0
        %v1528 = vadd.f32 0.0, %v1527
        %v1529 = vpop.f32.mrb[0].mxu0
        %v1530 = vpop.f32.mrb[0].mxu0
        %v1531 = vadd.f32 0.0, %v1530
        %v1532 = vpop.f32.mrb[0].mxu0
        %1533 = vmatprep.mubr.bf16.mxu0 %v734
        %1534 = vmatmul.mubr.bf16.gmra.mrb[0].mxu0 %v733
        %v1535 = vpop.f32.mrb[0].mxu0
        %v1536 = vadd.f32 0.0, %v1535
        %v1537 = vpop.f32.mrb[0].mxu0
        %v1538 = vpop.f32.mrb[0].mxu0
        %v1539 = vadd.f32 0.0, %v1538
        %v1540 = vpop.f32.mrb[0].mxu0
        %1541 = vmatprep.mubr.bf16.mxu0 %v742
        %1542 = vmatmul.mubr.bf16.gmra.mrb[0].mxu0 %v741
        %v1543 = vpop.f32.mrb[0].mxu0
        %v1544 = vadd.f32 0.0, %v1543
        %v1545 = vpop.f32.mrb[0].mxu0
        %v1546 = vpop.f32.mrb[0].mxu0
        %v1547 = vadd.f32 0.0, %v1546
        %v1548 = vpop.f32.mrb[0].mxu0
        %1549 = vmatprep.mubr.bf16.mxu0 %v750
        %1550 = vmatmul.mubr.bf16.gmra.mrb[0].mxu0 %v749
        %v1551 = vpop.f32.mrb[0].mxu0
        %v1552 = vadd.f32 0.0, %v1551
        %v1553 = vpop.f32.mrb[0].mxu0
        %v1554 = vpop.f32.mrb[0].mxu0
        %v1555 = vadd.f32 0.0, %v1554
        %v1556 = vpop.f32.mrb[0].mxu0
        %1557 = vmatprep.mubr.bf16.mxu0 %v758
        %1558 = vmatmul.mubr.bf16.gmra.mrb[0].mxu0 %v757
        %v1559 = vpop.f32.mrb[0].mxu0
        %v1560 = vadd.f32 0.0, %v1559
        %v1561 = vpop.f32.mrb[0].mxu0
        %v1562 = vpop.f32.mrb[0].mxu0
        %v1563 = vadd.f32 0.0, %v1562
        %v1564 = vpop.f32.mrb[0].mxu0
        %1565 = vmatprep.mubr.bf16.mxu0 %v766
        %1566 = vmatmul.mubr.bf16.gmra.mrb[0].mxu0 %v765
        %v1567 = vpop.f32.mrb[0].mxu0
        %v1568 = vadd.f32 0.0, %v1567
        %v1569 = vpop.f32.mrb[0].mxu0
        %v1570 = vpop.f32.mrb[0].mxu0
        %v1571 = vadd.f32 0.0, %v1570
        %v1572 = vpop.f32.mrb[0].mxu0
        %1573 = vmatprep.mubr.bf16.mxu0 %v774
        %1574 = vmatmul.mubr.bf16.gmra.mrb[0].mxu0 %v773
        %v1575 = vpop.f32.mrb[0].mxu0
        %v1576 = vadd.f32 0.0, %v1575
        %v1577 = vpop.f32.mrb[0].mxu0
        %v1578 = vpop.f32.mrb[0].mxu0
        %v1579 = vadd.f32 0.0, %v1578
        %v1580 = vpop.f32.mrb[0].mxu0
        %1581 = vmatprep.mubr.bf16.mxu0 %v782
        %1582 = vmatmul.mubr.bf16.gmra.mrb[0].mxu0 %v781
        %v1583 = vpop.f32.mrb[0].mxu0
        %v1584 = vadd.f32 0.0, %v1583
        %v1585 = vpop.f32.mrb[0].mxu0
        %v1586 = vpop.f32.mrb[0].mxu0
        %v1587 = vadd.f32 0.0, %v1586
        %v1588 = vpop.f32.mrb[0].mxu0
        %1589 = vmatprep.mubr.bf16.mxu0 %v790
        %1590 = vmatmul.mubr.bf16.gmra.mrb[0].mxu0 %v789
        %v1591 = vpop.f32.mrb[0].mxu0
        %v1592 = vadd.f32 0.0, %v1591
        %v1593 = vpop.f32.mrb[0].mxu0
        %v1594 = vpop.f32.mrb[0].mxu0
        %v1595 = vadd.f32 0.0, %v1594
        %v1596 = vpop.f32.mrb[0].mxu0
        %1597 = vmatprep.mubr.bf16.mxu0 %v798
        %1598 = vmatmul.mubr.bf16.gmra.mrb[0].mxu0 %v797
        %v1599 = vpop.f32.mrb[0].mxu0
        %v1600 = vadd.f32 0.0, %v1599
        %v1601 = vpop.f32.mrb[0].mxu0
        %v1602 = vpop.f32.mrb[0].mxu0
        %v1603 = vadd.f32 0.0, %v1602
        %v1604 = vpop.f32.mrb[0].mxu0
        %1605 = vmatprep.mubr.bf16.mxu0 %v806
        %1606 = vmatmul.mubr.bf16.gmra.mrb[0].mxu0 %v805
        %v1607 = vpop.f32.mrb[0].mxu0
        %v1608 = vadd.f32 0.0, %v1607
        %v1609 = vpop.f32.mrb[0].mxu0
        %v1610 = vpop.f32.mrb[0].mxu0
        %v1611 = vadd.f32 0.0, %v1610
        %v1612 = vpop.f32.mrb[0].mxu0
        %1613 = vmatprep.mubr.bf16.mxu0 %v814
        %1614 = vmatmul.mubr.bf16.gmra.mrb[0].mxu0 %v813
        %v1615 = vpop.f32.mrb[0].mxu0
        %v1616 = vadd.f32 0.0, %v1615
        %v1617 = vpop.f32.mrb[0].mxu0
        %v1618 = vpop.f32.mrb[0].mxu0
        %v1619 = vadd.f32 0.0, %v1618
        %v1620 = vpop.f32.mrb[0].mxu0
        %1621 = vmatprep.mubr.bf16.mxu0 %v822
        %1622 = vmatmul.mubr.bf16.gmra.mrb[0].mxu0 %v821
        %v1623 = vpop.f32.mrb[0].mxu0
        %v1624 = vadd.f32 0.0, %v1623
        %v1625 = vpop.f32.mrb[0].mxu0
        %v1626 = vpop.f32.mrb[0].mxu0
        %v1627 = vadd.f32 0.0, %v1626
        %v1628 = vpop.f32.mrb[0].mxu0
        %1629 = vmatprep.mubr.bf16.mxu0 %v830
        %1630 = vmatmul.mubr.bf16.gmra.mrb[0].mxu0 %v829
        %v1631 = vpop.f32.mrb[0].mxu0
        %v1632 = vadd.f32 0.0, %v1631
        %v1633 = vpop.f32.mrb[0].mxu0
        %v1634 = vpop.f32.mrb[0].mxu0
        %v1635 = vadd.f32 0.0, %v1634
        %v1636 = vpop.f32.mrb[0].mxu0
        %1637 = vmatprep.mubr.bf16.mxu0 %v838
        %1638 = vmatmul.mubr.bf16.gmra.mrb[0].mxu0 %v837
        %v1639 = vpop.f32.mrb[0].mxu0
        %v1640 = vadd.f32 0.0, %v1639
        %v1641 = vpop.f32.mrb[0].mxu0
        %v1642 = vpop.f32.mrb[0].mxu0
        %v1643 = vadd.f32 0.0, %v1642
        %v1644 = vpop.f32.mrb[0].mxu0
        %1645 = vmatprep.mubr.bf16.mxu0 %v846
        %1646 = vmatmul.mubr.bf16.gmra.mrb[0].mxu0 %v845
        %v1647 = vpop.f32.mrb[0].mxu0
        %v1648 = vadd.f32 0.0, %v1647
        %v1649 = vpop.f32.mrb[0].mxu0
        %v1650 = vpop.f32.mrb[0].mxu0
        %v1651 = vadd.f32 0.0, %v1650
        %v1652 = vpop.f32.mrb[0].mxu0
        %1653 = vmatprep.mubr.bf16.mxu0 %v854
        %1654 = vmatmul.mubr.bf16.gmra.mrb[0].mxu0 %v853
        %v1655 = vpop.f32.mrb[0].mxu0
        %v1656 = vadd.f32 0.0, %v1655
        %v1657 = vpop.f32.mrb[0].mxu0
        %v1658 = vpop.f32.mrb[0].mxu0
        %v1659 = vadd.f32 0.0, %v1658
        %v1660 = vpop.f32.mrb[0].mxu0
        %1661 = vmatprep.mubr.bf16.mxu0 %v862
        %1662 = vmatmul.mubr.bf16.gmra.mrb[0].mxu0 %v861
        %v1663 = vpop.f32.mrb[0].mxu0
        %v1664 = vadd.f32 0.0, %v1663
        %v1665 = vpop.f32.mrb[0].mxu0
        %v1666 = vpop.f32.mrb[0].mxu0
        %v1667 = vadd.f32 0.0, %v1666
        %v1668 = vpop.f32.mrb[0].mxu0
        %1669 = vmatprep.mubr.bf16.mxu0 %v870
        %1670 = vmatmul.mubr.bf16.gmra.mrb[0].mxu0 %v869
        %v1671 = vpop.f32.mrb[0].mxu0
        %v1672 = vadd.f32 0.0, %v1671
        %v1673 = vpop.f32.mrb[0].mxu0
        %v1674 = vpop.f32.mrb[0].mxu0
        %v1675 = vadd.f32 0.0, %v1674
        %v1676 = vpop.f32.mrb[0].mxu0
        %1677 = vmatprep.mubr.bf16.mxu0 %v878
        %1678 = vmatmul.mubr.bf16.gmra.mrb[0].mxu0 %v877
        %v1679 = vpop.f32.mrb[0].mxu0
        %v1680 = vadd.f32 0.0, %v1679
        %v1681 = vpop.f32.mrb[0].mxu0
        %v1682 = vpop.f32.mrb[0].mxu0
        %v1683 = vadd.f32 0.0, %v1682
        %v1684 = vpop.f32.mrb[0].mxu0
        %1685 = vdwg.mxu0
        %1686 = vmatprep.subr.bf16.mxu0 0
        %1687 = vmatpush1.bf16.msra.mxu0 %v1285
        %1688 = vmatprep.subr.bf16.mxu0 0
        %1689 = vmatpush1.bf16.msra.mxu0 %v1286
        %1690 = vmatprep.subr.bf16.mxu0 0
        %1691 = vmatpush1.bf16.msra.mxu0 %v1287
        %1692 = vmatprep.subr.bf16.mxu0 0
        %1693 = vmatpush1.bf16.msra.mxu0 %v1288
        %1694 = vmatprep.subr.bf16.mxu0 0
        %1695 = vmatpush1.bf16.msra.mxu0 %v1289
        %1696 = vmatprep.subr.bf16.mxu0 0
        %1697 = vmatpush1.bf16.msra.mxu0 %v1290
        %1698 = vmatprep.subr.bf16.mxu0 0
        %1699 = vmatpush1.bf16.msra.mxu0 %v1291
        %1700 = vmatprep.subr.bf16.mxu0 0
        %1701 = vmatpush1.bf16.msra.mxu0 %v1292
        %1702 = vmatprep.subr.bf16.mxu0 0
        %1703 = vmatpush1.bf16.msra.mxu0 %v1293
        %1704 = vmatprep.subr.bf16.mxu0 0
        %1705 = vmatpush1.bf16.msra.mxu0 %v1294
        %1706 = vmatprep.subr.bf16.mxu0 0
        %1707 = vmatpush1.bf16.msra.mxu0 %v1295
        %1708 = vmatprep.subr.bf16.mxu0 0
        %1709 = vmatpush1.bf16.msra.mxu0 %v1296
        %1710 = vmatprep.subr.bf16.mxu0 0
        %1711 = vmatpush1.bf16.msra.mxu0 %v1297
        %1712 = vmatprep.subr.bf16.mxu0 0
        %1713 = vmatpush1.bf16.msra.mxu0 %v1298
        %1714 = vmatprep.subr.bf16.mxu0 0
        %1715 = vmatpush1.bf16.msra.mxu0 %v1299
        %1716 = vmatprep.subr.bf16.mxu0 0
        %1717 = vmatpush1.bf16.msra.mxu0 %v1300
        %1718 = vmatprep.mubr.bf16.mxu0 %v632
        %1719 = vmatmul.mubr.bf16.gmra.mrb[0].mxu0 %v631
        %v1720 = vpop.f32.mrb[0].mxu0
        %v1721 = vadd.f32 %v1432, %v1720
        %v1722 = vpop.f32.mrb[0].mxu0
        %v1723 = vpop.f32.mrb[0].mxu0
        %v1724 = vadd.f32 %v1435, %v1723
        %v1725 = vpop.f32.mrb[0].mxu0
        %1726 = vmatprep.mubr.bf16.mxu0 %v640
        %1727 = vmatmul.mubr.bf16.gmra.mrb[0].mxu0 %v639
        %v1728 = vpop.f32.mrb[0].mxu0
        %v1729 = vadd.f32 %v1440, %v1728
        %v1730 = vpop.f32.mrb[0].mxu0
        %v1731 = vpop.f32.mrb[0].mxu0
        %v1732 = vadd.f32 %v1443, %v1731
        %v1733 = vpop.f32.mrb[0].mxu0
        %1734 = vmatprep.mubr.bf16.mxu0 %v648
        %1735 = vmatmul.mubr.bf16.gmra.mrb[0].mxu0 %v647
        %v1736 = vpop.f32.mrb[0].mxu0
        %v1737 = vadd.f32 %v1448, %v1736
        %v1738 = vpop.f32.mrb[0].mxu0
        %v1739 = vpop.f32.mrb[0].mxu0
        %v1740 = vadd.f32 %v1451, %v1739
        %v1741 = vpop.f32.mrb[0].mxu0
        %1742 = vmatprep.mubr.bf16.mxu0 %v656
        %1743 = vmatmul.mubr.bf16.gmra.mrb[0].mxu0 %v655
        %v1744 = vpop.f32.mrb[0].mxu0
        %v1745 = vadd.f32 %v1456, %v1744
        %v1746 = vpop.f32.mrb[0].mxu0
        %v1747 = vpop.f32.mrb[0].mxu0
        %v1748 = vadd.f32 %v1459, %v1747
        %v1749 = vpop.f32.mrb[0].mxu0
        %1750 = vmatprep.mubr.bf16.mxu0 %v664
        %1751 = vmatmul.mubr.bf16.gmra.mrb[0].mxu0 %v663
        %v1752 = vpop.f32.mrb[0].mxu0
        %v1753 = vadd.f32 %v1464, %v1752
        %v1754 = vpop.f32.mrb[0].mxu0
        %v1755 = vpop.f32.mrb[0].mxu0
        %v1756 = vadd.f32 %v1467, %v1755
        %v1757 = vpop.f32.mrb[0].mxu0
        %1758 = vmatprep.mubr.bf16.mxu0 %v672
        %1759 = vmatmul.mubr.bf16.gmra.mrb[0].mxu0 %v671
        %v1760 = vpop.f32.mrb[0].mxu0
        %v1761 = vadd.f32 %v1472, %v1760
        %v1762 = vpop.f32.mrb[0].mxu0
        %v1763 = vpop.f32.mrb[0].mxu0
        %v1764 = vadd.f32 %v1475, %v1763
        %v1765 = vpop.f32.mrb[0].mxu0
        %1766 = vmatprep.mubr.bf16.mxu0 %v680
        %1767 = vmatmul.mubr.bf16.gmra.mrb[0].mxu0 %v679
        %v1768 = vpop.f32.mrb[0].mxu0
        %v1769 = vadd.f32 %v1480, %v1768
        %v1770 = vpop.f32.mrb[0].mxu0
        %v1771 = vpop.f32.mrb[0].mxu0
        %v1772 = vadd.f32 %v1483, %v1771
        %v1773 = vpop.f32.mrb[0].mxu0
        %1774 = vmatprep.mubr.bf16.mxu0 %v688
        %1775 = vmatmul.mubr.bf16.gmra.mrb[0].mxu0 %v687
        %v1776 = vpop.f32.mrb[0].mxu0
        %v1777 = vadd.f32 %v1488, %v1776
        %v1778 = vpop.f32.mrb[0].mxu0
        %v1779 = vpop.f32.mrb[0].mxu0
        %v1780 = vadd.f32 %v1491, %v1779
        %v1781 = vpop.f32.mrb[0].mxu0
        %1782 = vmatprep.mubr.bf16.mxu0 %v696
        %1783 = vmatmul.mubr.bf16.gmra.mrb[0].mxu0 %v695
        %v1784 = vpop.f32.mrb[0].mxu0
        %v1785 = vadd.f32 %v1496, %v1784
        %v1786 = vpop.f32.mrb[0].mxu0
        %v1787 = vpop.f32.mrb[0].mxu0
        %v1788 = vadd.f32 %v1499, %v1787
        %v1789 = vpop.f32.mrb[0].mxu0
        %1790 = vmatprep.mubr.bf16.mxu0 %v704
        %1791 = vmatmul.mubr.bf16.gmra.mrb[0].mxu0 %v703
        %v1792 = vpop.f32.mrb[0].mxu0
        %v1793 = vadd.f32 %v1504, %v1792
        %v1794 = vpop.f32.mrb[0].mxu0
        %v1795 = vpop.f32.mrb[0].mxu0
        %v1796 = vadd.f32 %v1507, %v1795
        %v1797 = vpop.f32.mrb[0].mxu0
        %1798 = vmatprep.mubr.bf16.mxu0 %v712
        %1799 = vmatmul.mubr.bf16.gmra.mrb[0].mxu0 %v711
        %v1800 = vpop.f32.mrb[0].mxu0
        %v1801 = vadd.f32 %v1512, %v1800
        %v1802 = vpop.f32.mrb[0].mxu0
        %v1803 = vpop.f32.mrb[0].mxu0
        %v1804 = vadd.f32 %v1515, %v1803
        %v1805 = vpop.f32.mrb[0].mxu0
        %1806 = vmatprep.mubr.bf16.mxu0 %v720
        %1807 = vmatmul.mubr.bf16.gmra.mrb[0].mxu0 %v719
        %v1808 = vpop.f32.mrb[0].mxu0
        %v1809 = vadd.f32 %v1520, %v1808
        %v1810 = vpop.f32.mrb[0].mxu0
        %v1811 = vpop.f32.mrb[0].mxu0
        %v1812 = vadd.f32 %v1523, %v1811
        %v1813 = vpop.f32.mrb[0].mxu0
        %1814 = vmatprep.mubr.bf16.mxu0 %v728
        %1815 = vmatmul.mubr.bf16.gmra.mrb[0].mxu0 %v727
        %v1816 = vpop.f32.mrb[0].mxu0
        %v1817 = vadd.f32 %v1528, %v1816
        %v1818 = vpop.f32.mrb[0].mxu0
        %v1819 = vpop.f32.mrb[0].mxu0
        %v1820 = vadd.f32 %v1531, %v1819
        %v1821 = vpop.f32.mrb[0].mxu0
        %1822 = vmatprep.mubr.bf16.mxu0 %v736
        %1823 = vmatmul.mubr.bf16.gmra.mrb[0].mxu0 %v735
        %v1824 = vpop.f32.mrb[0].mxu0
        %v1825 = vadd.f32 %v1536, %v1824
        %v1826 = vpop.f32.mrb[0].mxu0
        %v1827 = vpop.f32.mrb[0].mxu0
        %v1828 = vadd.f32 %v1539, %v1827
        %v1829 = vpop.f32.mrb[0].mxu0
        %1830 = vmatprep.mubr.bf16.mxu0 %v744
        %1831 = vmatmul.mubr.bf16.gmra.mrb[0].mxu0 %v743
        %v1832 = vpop.f32.mrb[0].mxu0
        %v1833 = vadd.f32 %v1544, %v1832
        %v1834 = vpop.f32.mrb[0].mxu0
        %v1835 = vpop.f32.mrb[0].mxu0
        %v1836 = vadd.f32 %v1547, %v1835
        %v1837 = vpop.f32.mrb[0].mxu0
        %1838 = vmatprep.mubr.bf16.mxu0 %v752
        %1839 = vmatmul.mubr.bf16.gmra.mrb[0].mxu0 %v751
        %v1840 = vpop.f32.mrb[0].mxu0
        %v1841 = vadd.f32 %v1552, %v1840
        %v1842 = vpop.f32.mrb[0].mxu0
        %v1843 = vpop.f32.mrb[0].mxu0
        %v1844 = vadd.f32 %v1555, %v1843
        %v1845 = vpop.f32.mrb[0].mxu0
        %1846 = vmatprep.mubr.bf16.mxu0 %v760
        %1847 = vmatmul.mubr.bf16.gmra.mrb[0].mxu0 %v759
        %v1848 = vpop.f32.mrb[0].mxu0
        %v1849 = vadd.f32 %v1560, %v1848
        %v1850 = vpop.f32.mrb[0].mxu0
        %v1851 = vpop.f32.mrb[0].mxu0
        %v1852 = vadd.f32 %v1563, %v1851
        %v1853 = vpop.f32.mrb[0].mxu0
        %1854 = vmatprep.mubr.bf16.mxu0 %v768
        %1855 = vmatmul.mubr.bf16.gmra.mrb[0].mxu0 %v767
        %v1856 = vpop.f32.mrb[0].mxu0
        %v1857 = vadd.f32 %v1568, %v1856
        %v1858 = vpop.f32.mrb[0].mxu0
        %v1859 = vpop.f32.mrb[0].mxu0
        %v1860 = vadd.f32 %v1571, %v1859
        %v1861 = vpop.f32.mrb[0].mxu0
        %1862 = vmatprep.mubr.bf16.mxu0 %v776
        %1863 = vmatmul.mubr.bf16.gmra.mrb[0].mxu0 %v775
        %v1864 = vpop.f32.mrb[0].mxu0
        %v1865 = vadd.f32 %v1576, %v1864
        %v1866 = vpop.f32.mrb[0].mxu0
        %v1867 = vpop.f32.mrb[0].mxu0
        %v1868 = vadd.f32 %v1579, %v1867
        %v1869 = vpop.f32.mrb[0].mxu0
        %1870 = vmatprep.mubr.bf16.mxu0 %v784
        %1871 = vmatmul.mubr.bf16.gmra.mrb[0].mxu0 %v783
        %v1872 = vpop.f32.mrb[0].mxu0
        %v1873 = vadd.f32 %v1584, %v1872
        %v1874 = vpop.f32.mrb[0].mxu0
        %v1875 = vpop.f32.mrb[0].mxu0
        %v1876 = vadd.f32 %v1587, %v1875
        %v1877 = vpop.f32.mrb[0].mxu0
        %1878 = vmatprep.mubr.bf16.mxu0 %v792
        %1879 = vmatmul.mubr.bf16.gmra.mrb[0].mxu0 %v791
        %v1880 = vpop.f32.mrb[0].mxu0
        %v1881 = vadd.f32 %v1592, %v1880
        %v1882 = vpop.f32.mrb[0].mxu0
        %v1883 = vpop.f32.mrb[0].mxu0
        %v1884 = vadd.f32 %v1595, %v1883
        %v1885 = vpop.f32.mrb[0].mxu0
        %1886 = vmatprep.mubr.bf16.mxu0 %v800
        %1887 = vmatmul.mubr.bf16.gmra.mrb[0].mxu0 %v799
        %v1888 = vpop.f32.mrb[0].mxu0
        %v1889 = vadd.f32 %v1600, %v1888
        %v1890 = vpop.f32.mrb[0].mxu0
        %v1891 = vpop.f32.mrb[0].mxu0
        %v1892 = vadd.f32 %v1603, %v1891
        %v1893 = vpop.f32.mrb[0].mxu0
        %1894 = vmatprep.mubr.bf16.mxu0 %v808
        %1895 = vmatmul.mubr.bf16.gmra.mrb[0].mxu0 %v807
        %v1896 = vpop.f32.mrb[0].mxu0
        %v1897 = vadd.f32 %v1608, %v1896
        %v1898 = vpop.f32.mrb[0].mxu0
        %v1899 = vpop.f32.mrb[0].mxu0
        %v1900 = vadd.f32 %v1611, %v1899
        %v1901 = vpop.f32.mrb[0].mxu0
        %1902 = vmatprep.mubr.bf16.mxu0 %v816
        %1903 = vmatmul.mubr.bf16.gmra.mrb[0].mxu0 %v815
        %v1904 = vpop.f32.mrb[0].mxu0
        %v1905 = vadd.f32 %v1616, %v1904
        %v1906 = vpop.f32.mrb[0].mxu0
        %v1907 = vpop.f32.mrb[0].mxu0
        %v1908 = vadd.f32 %v1619, %v1907
        %v1909 = vpop.f32.mrb[0].mxu0
        %1910 = vmatprep.mubr.bf16.mxu0 %v824
        %1911 = vmatmul.mubr.bf16.gmra.mrb[0].mxu0 %v823
        %v1912 = vpop.f32.mrb[0].mxu0
        %v1913 = vadd.f32 %v1624, %v1912
        %v1914 = vpop.f32.mrb[0].mxu0
        %v1915 = vpop.f32.mrb[0].mxu0
        %v1916 = vadd.f32 %v1627, %v1915
        %v1917 = vpop.f32.mrb[0].mxu0
        %1918 = vmatprep.mubr.bf16.mxu0 %v832
        %1919 = vmatmul.mubr.bf16.gmra.mrb[0].mxu0 %v831
        %v1920 = vpop.f32.mrb[0].mxu0
        %v1921 = vadd.f32 %v1632, %v1920
        %v1922 = vpop.f32.mrb[0].mxu0
        %v1923 = vpop.f32.mrb[0].mxu0
        %v1924 = vadd.f32 %v1635, %v1923
        %v1925 = vpop.f32.mrb[0].mxu0
        %1926 = vmatprep.mubr.bf16.mxu0 %v840
        %1927 = vmatmul.mubr.bf16.gmra.mrb[0].mxu0 %v839
        %v1928 = vpop.f32.mrb[0].mxu0
        %v1929 = vadd.f32 %v1640, %v1928
        %v1930 = vpop.f32.mrb[0].mxu0
        %v1931 = vpop.f32.mrb[0].mxu0
        %v1932 = vadd.f32 %v1643, %v1931
        %v1933 = vpop.f32.mrb[0].mxu0
        %1934 = vmatprep.mubr.bf16.mxu0 %v848
        %1935 = vmatmul.mubr.bf16.gmra.mrb[0].mxu0 %v847
        %v1936 = vpop.f32.mrb[0].mxu0
        %v1937 = vadd.f32 %v1648, %v1936
        %v1938 = vpop.f32.mrb[0].mxu0
        %v1939 = vpop.f32.mrb[0].mxu0
        %v1940 = vadd.f32 %v1651, %v1939
        %v1941 = vpop.f32.mrb[0].mxu0
        %1942 = vmatprep.mubr.bf16.mxu0 %v856
        %1943 = vmatmul.mubr.bf16.gmra.mrb[0].mxu0 %v855
        %v1944 = vpop.f32.mrb[0].mxu0
        %v1945 = vadd.f32 %v1656, %v1944
        %v1946 = vpop.f32.mrb[0].mxu0
        %v1947 = vpop.f32.mrb[0].mxu0
        %v1948 = vadd.f32 %v1659, %v1947
        %v1949 = vpop.f32.mrb[0].mxu0
        %1950 = vmatprep.mubr.bf16.mxu0 %v864
        %1951 = vmatmul.mubr.bf16.gmra.mrb[0].mxu0 %v863
        %v1952 = vpop.f32.mrb[0].mxu0
        %v1953 = vadd.f32 %v1664, %v1952
        %v1954 = vpop.f32.mrb[0].mxu0
        %v1955 = vpop.f32.mrb[0].mxu0
        %v1956 = vadd.f32 %v1667, %v1955
        %v1957 = vpop.f32.mrb[0].mxu0
        %1958 = vmatprep.mubr.bf16.mxu0 %v872
        %1959 = vmatmul.mubr.bf16.gmra.mrb[0].mxu0 %v871
        %v1960 = vpop.f32.mrb[0].mxu0
        %v1961 = vadd.f32 %v1672, %v1960
        %v1962 = vpop.f32.mrb[0].mxu0
        %v1963 = vpop.f32.mrb[0].mxu0
        %v1964 = vadd.f32 %v1675, %v1963
        %v1965 = vpop.f32.mrb[0].mxu0
        %1966 = vmatprep.mubr.bf16.mxu0 %v880
        %1967 = vmatmul.mubr.bf16.gmra.mrb[0].mxu0 %v879
        %v1968 = vpop.f32.mrb[0].mxu0
        %v1969 = vadd.f32 %v1680, %v1968
        %v1970 = vpop.f32.mrb[0].mxu0
        %v1971 = vpop.f32.mrb[0].mxu0
        %v1972 = vadd.f32 %v1683, %v1971
        %v1973 = vpop.f32.mrb[0].mxu0
        %1974 = vdwg.mxu0
        %1975 = vmatprep.subr.bf16.mxu0 0
        %1976 = vmatpush1.bf16.msra.mxu0 %v1301
        %1977 = vmatprep.subr.bf16.mxu0 0
        %1978 = vmatpush1.bf16.msra.mxu0 %v1302
        %1979 = vmatprep.subr.bf16.mxu0 0
        %1980 = vmatpush1.bf16.msra.mxu0 %v1303
        %1981 = vmatprep.subr.bf16.mxu0 0
        %1982 = vmatpush1.bf16.msra.mxu0 %v1304
        %1983 = vmatprep.subr.bf16.mxu0 0
        %1984 = vmatpush1.bf16.msra.mxu0 %v1305
        %1985 = vmatprep.subr.bf16.mxu0 0
        %1986 = vmatpush1.bf16.msra.mxu0 %v1306
        %1987 = vmatprep.subr.bf16.mxu0 0
        %1988 = vmatpush1.bf16.msra.mxu0 %v1307
        %1989 = vmatprep.subr.bf16.mxu0 0
        %1990 = vmatpush1.bf16.msra.mxu0 %v1308
        %1991 = vmatprep.subr.bf16.mxu0 0
        %1992 = vmatpush1.bf16.msra.mxu0 %v1309
        %1993 = vmatprep.subr.bf16.mxu0 0
        %1994 = vmatpush1.bf16.msra.mxu0 %v1310
        %1995 = vmatprep.subr.bf16.mxu0 0
        %1996 = vmatpush1.bf16.msra.mxu0 %v1311
        %1997 = vmatprep.subr.bf16.mxu0 0
        %1998 = vmatpush1.bf16.msra.mxu0 %v1312
        %1999 = vmatprep.subr.bf16.mxu0 0
        %2000 = vmatpush1.bf16.msra.mxu0 %v1313
        %2001 = vmatprep.subr.bf16.mxu0 0
        %2002 = vmatpush1.bf16.msra.mxu0 %v1314
        %2003 = vmatprep.subr.bf16.mxu0 0
        %2004 = vmatpush1.bf16.msra.mxu0 %v1315
        %2005 = vmatprep.subr.bf16.mxu0 0
        %2006 = vmatpush1.bf16.msra.mxu0 %v1316
        %2007 = vmatprep.mubr.bf16.mxu0 %v634
        %2008 = vmatmul.mubr.bf16.gmra.mrb[0].mxu0 %v633
        %v2009 = vpop.f32.mrb[0].mxu0
        %v2010 = vadd.f32 %v1721, %v2009
        %v2011 = vpop.f32.mrb[0].mxu0
        %v2012 = vpop.f32.mrb[0].mxu0
        %v2013 = vadd.f32 %v1724, %v2012
        %v2014 = vpop.f32.mrb[0].mxu0
        %2015 = vmatprep.mubr.bf16.mxu0 %v642
        %2016 = vmatmul.mubr.bf16.gmra.mrb[0].mxu0 %v641
        %v2017 = vpop.f32.mrb[0].mxu0
        %v2018 = vadd.f32 %v1729, %v2017
        %v2019 = vpop.f32.mrb[0].mxu0
        %v2020 = vpop.f32.mrb[0].mxu0
        %v2021 = vadd.f32 %v1732, %v2020
        %v2022 = vpop.f32.mrb[0].mxu0
        %2023 = vmatprep.mubr.bf16.mxu0 %v650
        %2024 = vmatmul.mubr.bf16.gmra.mrb[0].mxu0 %v649
        %v2025 = vpop.f32.mrb[0].mxu0
        %v2026 = vadd.f32 %v1737, %v2025
        %v2027 = vpop.f32.mrb[0].mxu0
        %v2028 = vpop.f32.mrb[0].mxu0
        %v2029 = vadd.f32 %v1740, %v2028
        %v2030 = vpop.f32.mrb[0].mxu0
        %2031 = vmatprep.mubr.bf16.mxu0 %v658
        %2032 = vmatmul.mubr.bf16.gmra.mrb[0].mxu0 %v657
        %v2033 = vpop.f32.mrb[0].mxu0
        %v2034 = vadd.f32 %v1745, %v2033
        %v2035 = vpop.f32.mrb[0].mxu0
        %v2036 = vpop.f32.mrb[0].mxu0
        %v2037 = vadd.f32 %v1748, %v2036
        %v2038 = vpop.f32.mrb[0].mxu0
        %2039 = vmatprep.mubr.bf16.mxu0 %v666
        %2040 = vmatmul.mubr.bf16.gmra.mrb[0].mxu0 %v665
        %v2041 = vpop.f32.mrb[0].mxu0
        %v2042 = vadd.f32 %v1753, %v2041
        %v2043 = vpop.f32.mrb[0].mxu0
        %v2044 = vpop.f32.mrb[0].mxu0
        %v2045 = vadd.f32 %v1756, %v2044
        %v2046 = vpop.f32.mrb[0].mxu0
        %2047 = vmatprep.mubr.bf16.mxu0 %v674
        %2048 = vmatmul.mubr.bf16.gmra.mrb[0].mxu0 %v673
        %v2049 = vpop.f32.mrb[0].mxu0
        %v2050 = vadd.f32 %v1761, %v2049
        %v2051 = vpop.f32.mrb[0].mxu0
        %v2052 = vpop.f32.mrb[0].mxu0
        %v2053 = vadd.f32 %v1764, %v2052
        %v2054 = vpop.f32.mrb[0].mxu0
        %2055 = vmatprep.mubr.bf16.mxu0 %v682
        %2056 = vmatmul.mubr.bf16.gmra.mrb[0].mxu0 %v681
        %v2057 = vpop.f32.mrb[0].mxu0
        %v2058 = vadd.f32 %v1769, %v2057
        %v2059 = vpop.f32.mrb[0].mxu0
        %v2060 = vpop.f32.mrb[0].mxu0
        %v2061 = vadd.f32 %v1772, %v2060
        %v2062 = vpop.f32.mrb[0].mxu0
        %2063 = vmatprep.mubr.bf16.mxu0 %v690
        %2064 = vmatmul.mubr.bf16.gmra.mrb[0].mxu0 %v689
        %v2065 = vpop.f32.mrb[0].mxu0
        %v2066 = vadd.f32 %v1777, %v2065
        %v2067 = vpop.f32.mrb[0].mxu0
        %v2068 = vpop.f32.mrb[0].mxu0
        %v2069 = vadd.f32 %v1780, %v2068
        %v2070 = vpop.f32.mrb[0].mxu0
        %2071 = vmatprep.mubr.bf16.mxu0 %v698
        %2072 = vmatmul.mubr.bf16.gmra.mrb[0].mxu0 %v697
        %v2073 = vpop.f32.mrb[0].mxu0
        %v2074 = vadd.f32 %v1785, %v2073
        %v2075 = vpop.f32.mrb[0].mxu0
        %v2076 = vpop.f32.mrb[0].mxu0
        %v2077 = vadd.f32 %v1788, %v2076
        %v2078 = vpop.f32.mrb[0].mxu0
        %2079 = vmatprep.mubr.bf16.mxu0 %v706
        %2080 = vmatmul.mubr.bf16.gmra.mrb[0].mxu0 %v705
        %v2081 = vpop.f32.mrb[0].mxu0
        %v2082 = vadd.f32 %v1793, %v2081
        %v2083 = vpop.f32.mrb[0].mxu0
        %v2084 = vpop.f32.mrb[0].mxu0
        %v2085 = vadd.f32 %v1796, %v2084
        %v2086 = vpop.f32.mrb[0].mxu0
        %2087 = vmatprep.mubr.bf16.mxu0 %v714
        %2088 = vmatmul.mubr.bf16.gmra.mrb[0].mxu0 %v713
        %v2089 = vpop.f32.mrb[0].mxu0
        %v2090 = vadd.f32 %v1801, %v2089
        %v2091 = vpop.f32.mrb[0].mxu0
        %v2092 = vpop.f32.mrb[0].mxu0
        %v2093 = vadd.f32 %v1804, %v2092
        %v2094 = vpop.f32.mrb[0].mxu0
        %2095 = vmatprep.mubr.bf16.mxu0 %v722
        %2096 = vmatmul.mubr.bf16.gmra.mrb[0].mxu0 %v721
        %v2097 = vpop.f32.mrb[0].mxu0
        %v2098 = vadd.f32 %v1809, %v2097
        %v2099 = vpop.f32.mrb[0].mxu0
        %v2100 = vpop.f32.mrb[0].mxu0
        %v2101 = vadd.f32 %v1812, %v2100
        %v2102 = vpop.f32.mrb[0].mxu0
        %2103 = vmatprep.mubr.bf16.mxu0 %v730
        %2104 = vmatmul.mubr.bf16.gmra.mrb[0].mxu0 %v729
        %v2105 = vpop.f32.mrb[0].mxu0
        %v2106 = vadd.f32 %v1817, %v2105
        %v2107 = vpop.f32.mrb[0].mxu0
        %v2108 = vpop.f32.mrb[0].mxu0
        %v2109 = vadd.f32 %v1820, %v2108
        %v2110 = vpop.f32.mrb[0].mxu0
        %2111 = vmatprep.mubr.bf16.mxu0 %v738
        %2112 = vmatmul.mubr.bf16.gmra.mrb[0].mxu0 %v737
        %v2113 = vpop.f32.mrb[0].mxu0
        %v2114 = vadd.f32 %v1825, %v2113
        %v2115 = vpop.f32.mrb[0].mxu0
        %v2116 = vpop.f32.mrb[0].mxu0
        %v2117 = vadd.f32 %v1828, %v2116
        %v2118 = vpop.f32.mrb[0].mxu0
        %2119 = vmatprep.mubr.bf16.mxu0 %v746
        %2120 = vmatmul.mubr.bf16.gmra.mrb[0].mxu0 %v745
        %v2121 = vpop.f32.mrb[0].mxu0
        %v2122 = vadd.f32 %v1833, %v2121
        %v2123 = vpop.f32.mrb[0].mxu0
        %v2124 = vpop.f32.mrb[0].mxu0
        %v2125 = vadd.f32 %v1836, %v2124
        %v2126 = vpop.f32.mrb[0].mxu0
        %2127 = vmatprep.mubr.bf16.mxu0 %v754
        %2128 = vmatmul.mubr.bf16.gmra.mrb[0].mxu0 %v753
        %v2129 = vpop.f32.mrb[0].mxu0
        %v2130 = vadd.f32 %v1841, %v2129
        %v2131 = vpop.f32.mrb[0].mxu0
        %v2132 = vpop.f32.mrb[0].mxu0
        %v2133 = vadd.f32 %v1844, %v2132
        %v2134 = vpop.f32.mrb[0].mxu0
        %2135 = vmatprep.mubr.bf16.mxu0 %v762
        %2136 = vmatmul.mubr.bf16.gmra.mrb[0].mxu0 %v761
        %v2137 = vpop.f32.mrb[0].mxu0
        %v2138 = vadd.f32 %v1849, %v2137
        %v2139 = vpop.f32.mrb[0].mxu0
        %v2140 = vpop.f32.mrb[0].mxu0
        %v2141 = vadd.f32 %v1852, %v2140
        %v2142 = vpop.f32.mrb[0].mxu0
        %2143 = vmatprep.mubr.bf16.mxu0 %v770
        %2144 = vmatmul.mubr.bf16.gmra.mrb[0].mxu0 %v769
        %v2145 = vpop.f32.mrb[0].mxu0
        %v2146 = vadd.f32 %v1857, %v2145
        %v2147 = vpop.f32.mrb[0].mxu0
        %v2148 = vpop.f32.mrb[0].mxu0
        %v2149 = vadd.f32 %v1860, %v2148
        %v2150 = vpop.f32.mrb[0].mxu0
        %2151 = vmatprep.mubr.bf16.mxu0 %v778
        %2152 = vmatmul.mubr.bf16.gmra.mrb[0].mxu0 %v777
        %v2153 = vpop.f32.mrb[0].mxu0
        %v2154 = vadd.f32 %v1865, %v2153
        %v2155 = vpop.f32.mrb[0].mxu0
        %v2156 = vpop.f32.mrb[0].mxu0
        %v2157 = vadd.f32 %v1868, %v2156
        %v2158 = vpop.f32.mrb[0].mxu0
        %2159 = vmatprep.mubr.bf16.mxu0 %v786
        %2160 = vmatmul.mubr.bf16.gmra.mrb[0].mxu0 %v785
        %v2161 = vpop.f32.mrb[0].mxu0
        %v2162 = vadd.f32 %v1873, %v2161
        %v2163 = vpop.f32.mrb[0].mxu0
        %v2164 = vpop.f32.mrb[0].mxu0
        %v2165 = vadd.f32 %v1876, %v2164
        %v2166 = vpop.f32.mrb[0].mxu0
        %2167 = vmatprep.mubr.bf16.mxu0 %v794
        %2168 = vmatmul.mubr.bf16.gmra.mrb[0].mxu0 %v793
        %v2169 = vpop.f32.mrb[0].mxu0
        %v2170 = vadd.f32 %v1881, %v2169
        %v2171 = vpop.f32.mrb[0].mxu0
        %v2172 = vpop.f32.mrb[0].mxu0
        %v2173 = vadd.f32 %v1884, %v2172
        %v2174 = vpop.f32.mrb[0].mxu0
        %2175 = vmatprep.mubr.bf16.mxu0 %v802
        %2176 = vmatmul.mubr.bf16.gmra.mrb[0].mxu0 %v801
        %v2177 = vpop.f32.mrb[0].mxu0
        %v2178 = vadd.f32 %v1889, %v2177
        %v2179 = vpop.f32.mrb[0].mxu0
        %v2180 = vpop.f32.mrb[0].mxu0
        %v2181 = vadd.f32 %v1892, %v2180
        %v2182 = vpop.f32.mrb[0].mxu0
        %2183 = vmatprep.mubr.bf16.mxu0 %v810
        %2184 = vmatmul.mubr.bf16.gmra.mrb[0].mxu0 %v809
        %v2185 = vpop.f32.mrb[0].mxu0
        %v2186 = vadd.f32 %v1897, %v2185
        %v2187 = vpop.f32.mrb[0].mxu0
        %v2188 = vpop.f32.mrb[0].mxu0
        %v2189 = vadd.f32 %v1900, %v2188
        %v2190 = vpop.f32.mrb[0].mxu0
        %2191 = vmatprep.mubr.bf16.mxu0 %v818
        %2192 = vmatmul.mubr.bf16.gmra.mrb[0].mxu0 %v817
        %v2193 = vpop.f32.mrb[0].mxu0
        %v2194 = vadd.f32 %v1905, %v2193
        %v2195 = vpop.f32.mrb[0].mxu0
        %v2196 = vpop.f32.mrb[0].mxu0
        %v2197 = vadd.f32 %v1908, %v2196
        %v2198 = vpop.f32.mrb[0].mxu0
        %2199 = vmatprep.mubr.bf16.mxu0 %v826
        %2200 = vmatmul.mubr.bf16.gmra.mrb[0].mxu0 %v825
        %v2201 = vpop.f32.mrb[0].mxu0
        %v2202 = vadd.f32 %v1913, %v2201
        %v2203 = vpop.f32.mrb[0].mxu0
        %v2204 = vpop.f32.mrb[0].mxu0
        %v2205 = vadd.f32 %v1916, %v2204
        %v2206 = vpop.f32.mrb[0].mxu0
        %2207 = vmatprep.mubr.bf16.mxu0 %v834
        %2208 = vmatmul.mubr.bf16.gmra.mrb[0].mxu0 %v833
        %v2209 = vpop.f32.mrb[0].mxu0
        %v2210 = vadd.f32 %v1921, %v2209
        %v2211 = vpop.f32.mrb[0].mxu0
        %v2212 = vpop.f32.mrb[0].mxu0
        %v2213 = vadd.f32 %v1924, %v2212
        %v2214 = vpop.f32.mrb[0].mxu0
        %2215 = vmatprep.mubr.bf16.mxu0 %v842
        %2216 = vmatmul.mubr.bf16.gmra.mrb[0].mxu0 %v841
        %v2217 = vpop.f32.mrb[0].mxu0
        %v2218 = vadd.f32 %v1929, %v2217
        %v2219 = vpop.f32.mrb[0].mxu0
        %v2220 = vpop.f32.mrb[0].mxu0
        %v2221 = vadd.f32 %v1932, %v2220
        %v2222 = vpop.f32.mrb[0].mxu0
        %2223 = vmatprep.mubr.bf16.mxu0 %v850
        %2224 = vmatmul.mubr.bf16.gmra.mrb[0].mxu0 %v849
        %v2225 = vpop.f32.mrb[0].mxu0
        %v2226 = vadd.f32 %v1937, %v2225
        %v2227 = vpop.f32.mrb[0].mxu0
        %v2228 = vpop.f32.mrb[0].mxu0
        %v2229 = vadd.f32 %v1940, %v2228
        %v2230 = vpop.f32.mrb[0].mxu0
        %2231 = vmatprep.mubr.bf16.mxu0 %v858
        %2232 = vmatmul.mubr.bf16.gmra.mrb[0].mxu0 %v857
        %v2233 = vpop.f32.mrb[0].mxu0
        %v2234 = vadd.f32 %v1945, %v2233
        %v2235 = vpop.f32.mrb[0].mxu0
        %v2236 = vpop.f32.mrb[0].mxu0
        %v2237 = vadd.f32 %v1948, %v2236
        %v2238 = vpop.f32.mrb[0].mxu0
        %2239 = vmatprep.mubr.bf16.mxu0 %v866
        %2240 = vmatmul.mubr.bf16.gmra.mrb[0].mxu0 %v865
        %v2241 = vpop.f32.mrb[0].mxu0
        %v2242 = vadd.f32 %v1953, %v2241
        %v2243 = vpop.f32.mrb[0].mxu0
        %v2244 = vpop.f32.mrb[0].mxu0
        %v2245 = vadd.f32 %v1956, %v2244
        %v2246 = vpop.f32.mrb[0].mxu0
        %2247 = vmatprep.mubr.bf16.mxu0 %v874
        %2248 = vmatmul.mubr.bf16.gmra.mrb[0].mxu0 %v873
        %v2249 = vpop.f32.mrb[0].mxu0
        %v2250 = vadd.f32 %v1961, %v2249
        %v2251 = vpop.f32.mrb[0].mxu0
        %v2252 = vpop.f32.mrb[0].mxu0
        %v2253 = vadd.f32 %v1964, %v2252
        %v2254 = vpop.f32.mrb[0].mxu0
        %2255 = vmatprep.mubr.bf16.mxu0 %v882
        %2256 = vmatmul.mubr.bf16.gmra.mrb[0].mxu0 %v881
        %v2257 = vpop.f32.mrb[0].mxu0
        %v2258 = vadd.f32 %v1969, %v2257
        %v2259 = vpop.f32.mrb[0].mxu0
        %v2260 = vpop.f32.mrb[0].mxu0
        %v2261 = vadd.f32 %v1972, %v2260
        %v2262 = vpop.f32.mrb[0].mxu0
        %2263 = vdwg.mxu0
        %2264 = vmatprep.subr.bf16.mxu0 0
        %2265 = vmatpush1.bf16.msra.mxu0 %v1317
        %2266 = vmatprep.subr.bf16.mxu0 0
        %2267 = vmatpush1.bf16.msra.mxu0 %v1318
        %2268 = vmatprep.subr.bf16.mxu0 0
        %2269 = vmatpush1.bf16.msra.mxu0 %v1319
        %2270 = vmatprep.subr.bf16.mxu0 0
        %2271 = vmatpush1.bf16.msra.mxu0 %v1320
        %2272 = vmatprep.subr.bf16.mxu0 0
        %2273 = vmatpush1.bf16.msra.mxu0 %v1321
        %2274 = vmatprep.subr.bf16.mxu0 0
        %2275 = vmatpush1.bf16.msra.mxu0 %v1322
        %2276 = vmatprep.subr.bf16.mxu0 0
        %2277 = vmatpush1.bf16.msra.mxu0 %v1323
        %2278 = vmatprep.subr.bf16.mxu0 0
        %2279 = vmatpush1.bf16.msra.mxu0 %v1324
        %2280 = vmatprep.subr.bf16.mxu0 0
        %2281 = vmatpush1.bf16.msra.mxu0 %v1325
        %2282 = vmatprep.subr.bf16.mxu0 0
        %2283 = vmatpush1.bf16.msra.mxu0 %v1326
        %2284 = vmatprep.subr.bf16.mxu0 0
        %2285 = vmatpush1.bf16.msra.mxu0 %v1327
        %2286 = vmatprep.subr.bf16.mxu0 0
        %2287 = vmatpush1.bf16.msra.mxu0 %v1328
        %2288 = vmatprep.subr.bf16.mxu0 0
        %2289 = vmatpush1.bf16.msra.mxu0 %v1329
        %2290 = vmatprep.subr.bf16.mxu0 0
        %2291 = vmatpush1.bf16.msra.mxu0 %v1330
        %2292 = vmatprep.subr.bf16.mxu0 0
        %2293 = vmatpush1.bf16.msra.mxu0 %v1331
        %2294 = vmatprep.subr.bf16.mxu0 0
        %2295 = vmatpush1.bf16.msra.mxu0 %v1332
        %2296 = vmatprep.mubr.bf16.mxu0 %v636
        %2297 = vmatmul.mubr.bf16.gmra.mrb[0].mxu0 %v635
        %v2298 = vpop.f32.mrb[0].mxu0
        %v2299 = vadd.f32 %v2010, %v2298
        %v2300 = vpop.f32.mrb[0].mxu0
        %v2301 = vpop.f32.mrb[0].mxu0
        %v2302 = vadd.f32 %v2013, %v2301
        %v2303 = vpop.f32.mrb[0].mxu0
        %2304 = vmatprep.mubr.bf16.mxu0 %v644
        %2305 = vmatmul.mubr.bf16.gmra.mrb[0].mxu0 %v643
        %v2306 = vpop.f32.mrb[0].mxu0
        %v2307 = vadd.f32 %v2018, %v2306
        %v2308 = vpop.f32.mrb[0].mxu0
        %v2309 = vpop.f32.mrb[0].mxu0
        %v2310 = vadd.f32 %v2021, %v2309
        %v2311 = vpop.f32.mrb[0].mxu0
        %2312 = vmatprep.mubr.bf16.mxu0 %v652
        %2313 = vmatmul.mubr.bf16.gmra.mrb[0].mxu0 %v651
        %v2314 = vpop.f32.mrb[0].mxu0
        %v2315 = vadd.f32 %v2026, %v2314
        %v2316 = vpop.f32.mrb[0].mxu0
        %v2317 = vpop.f32.mrb[0].mxu0
        %v2318 = vadd.f32 %v2029, %v2317
        %v2319 = vpop.f32.mrb[0].mxu0
        %2320 = vmatprep.mubr.bf16.mxu0 %v660
        %2321 = vmatmul.mubr.bf16.gmra.mrb[0].mxu0 %v659
        %v2322 = vpop.f32.mrb[0].mxu0
        %v2323 = vadd.f32 %v2034, %v2322
        %v2324 = vpop.f32.mrb[0].mxu0
        %v2325 = vpop.f32.mrb[0].mxu0
        %v2326 = vadd.f32 %v2037, %v2325
        %v2327 = vpop.f32.mrb[0].mxu0
        %2328 = vmatprep.mubr.bf16.mxu0 %v668
        %2329 = vmatmul.mubr.bf16.gmra.mrb[0].mxu0 %v667
        %v2330 = vpop.f32.mrb[0].mxu0
        %v2331 = vadd.f32 %v2042, %v2330
        %v2332 = vpop.f32.mrb[0].mxu0
        %v2333 = vpop.f32.mrb[0].mxu0
        %v2334 = vadd.f32 %v2045, %v2333
        %v2335 = vpop.f32.mrb[0].mxu0
        %2336 = vmatprep.mubr.bf16.mxu0 %v676
        %2337 = vmatmul.mubr.bf16.gmra.mrb[0].mxu0 %v675
        %v2338 = vpop.f32.mrb[0].mxu0
        %v2339 = vadd.f32 %v2050, %v2338
        %v2340 = vpop.f32.mrb[0].mxu0
        %v2341 = vpop.f32.mrb[0].mxu0
        %v2342 = vadd.f32 %v2053, %v2341
        %v2343 = vpop.f32.mrb[0].mxu0
        %2344 = vmatprep.mubr.bf16.mxu0 %v684
        %2345 = vmatmul.mubr.bf16.gmra.mrb[0].mxu0 %v683
        %v2346 = vpop.f32.mrb[0].mxu0
        %v2347 = vadd.f32 %v2058, %v2346
        %v2348 = vpop.f32.mrb[0].mxu0
        %v2349 = vpop.f32.mrb[0].mxu0
        %v2350 = vadd.f32 %v2061, %v2349
        %v2351 = vpop.f32.mrb[0].mxu0
        %2352 = vmatprep.mubr.bf16.mxu0 %v692
        %2353 = vmatmul.mubr.bf16.gmra.mrb[0].mxu0 %v691
        %v2354 = vpop.f32.mrb[0].mxu0
        %v2355 = vadd.f32 %v2066, %v2354
        %v2356 = vpop.f32.mrb[0].mxu0
        %v2357 = vpop.f32.mrb[0].mxu0
        %v2358 = vadd.f32 %v2069, %v2357
        %v2359 = vpop.f32.mrb[0].mxu0
        %2360 = vmatprep.mubr.bf16.mxu0 %v700
        %2361 = vmatmul.mubr.bf16.gmra.mrb[0].mxu0 %v699
        %v2362 = vpop.f32.mrb[0].mxu0
        %v2363 = vadd.f32 %v2074, %v2362
        %v2364 = vpop.f32.mrb[0].mxu0
        %v2365 = vpop.f32.mrb[0].mxu0
        %v2366 = vadd.f32 %v2077, %v2365
        %v2367 = vpop.f32.mrb[0].mxu0
        %2368 = vmatprep.mubr.bf16.mxu0 %v708
        %2369 = vmatmul.mubr.bf16.gmra.mrb[0].mxu0 %v707
        %v2370 = vpop.f32.mrb[0].mxu0
        %v2371 = vadd.f32 %v2082, %v2370
        %v2372 = vpop.f32.mrb[0].mxu0
        %v2373 = vpop.f32.mrb[0].mxu0
        %v2374 = vadd.f32 %v2085, %v2373
        %v2375 = vpop.f32.mrb[0].mxu0
        %2376 = vmatprep.mubr.bf16.mxu0 %v716
        %2377 = vmatmul.mubr.bf16.gmra.mrb[0].mxu0 %v715
        %v2378 = vpop.f32.mrb[0].mxu0
        %v2379 = vadd.f32 %v2090, %v2378
        %v2380 = vpop.f32.mrb[0].mxu0
        %v2381 = vpop.f32.mrb[0].mxu0
        %v2382 = vadd.f32 %v2093, %v2381
        %v2383 = vpop.f32.mrb[0].mxu0
        %2384 = vmatprep.mubr.bf16.mxu0 %v724
        %2385 = vmatmul.mubr.bf16.gmra.mrb[0].mxu0 %v723
        %v2386 = vpop.f32.mrb[0].mxu0
        %v2387 = vadd.f32 %v2098, %v2386
        %v2388 = vpop.f32.mrb[0].mxu0
        %v2389 = vpop.f32.mrb[0].mxu0
        %v2390 = vadd.f32 %v2101, %v2389
        %v2391 = vpop.f32.mrb[0].mxu0
        %2392 = vmatprep.mubr.bf16.mxu0 %v732
        %2393 = vmatmul.mubr.bf16.gmra.mrb[0].mxu0 %v731
        %v2394 = vpop.f32.mrb[0].mxu0
        %v2395 = vadd.f32 %v2106, %v2394
        %v2396 = vpop.f32.mrb[0].mxu0
        %v2397 = vpop.f32.mrb[0].mxu0
        %v2398 = vadd.f32 %v2109, %v2397
        %v2399 = vpop.f32.mrb[0].mxu0
        %2400 = vmatprep.mubr.bf16.mxu0 %v740
        %2401 = vmatmul.mubr.bf16.gmra.mrb[0].mxu0 %v739
        %v2402 = vpop.f32.mrb[0].mxu0
        %v2403 = vadd.f32 %v2114, %v2402
        %v2404 = vpop.f32.mrb[0].mxu0
        %v2405 = vpop.f32.mrb[0].mxu0
        %v2406 = vadd.f32 %v2117, %v2405
        %v2407 = vpop.f32.mrb[0].mxu0
        %2408 = vmatprep.mubr.bf16.mxu0 %v748
        %2409 = vmatmul.mubr.bf16.gmra.mrb[0].mxu0 %v747
        %v2410 = vpop.f32.mrb[0].mxu0
        %v2411 = vadd.f32 %v2122, %v2410
        %v2412 = vpop.f32.mrb[0].mxu0
        %v2413 = vpop.f32.mrb[0].mxu0
        %v2414 = vadd.f32 %v2125, %v2413
        %v2415 = vpop.f32.mrb[0].mxu0
        %2416 = vmatprep.mubr.bf16.mxu0 %v756
        %2417 = vmatmul.mubr.bf16.gmra.mrb[0].mxu0 %v755
        %v2418 = vpop.f32.mrb[0].mxu0
        %v2419 = vadd.f32 %v2130, %v2418
        %v2420 = vpop.f32.mrb[0].mxu0
        %v2421 = vpop.f32.mrb[0].mxu0
        %v2422 = vadd.f32 %v2133, %v2421
        %v2423 = vpop.f32.mrb[0].mxu0
        %2424 = vmatprep.mubr.bf16.mxu0 %v764
        %2425 = vmatmul.mubr.bf16.gmra.mrb[0].mxu0 %v763
        %v2426 = vpop.f32.mrb[0].mxu0
        %v2427 = vadd.f32 %v2138, %v2426
        %v2428 = vpop.f32.mrb[0].mxu0
        %v2429 = vpop.f32.mrb[0].mxu0
        %v2430 = vadd.f32 %v2141, %v2429
        %v2431 = vpop.f32.mrb[0].mxu0
        %2432 = vmatprep.mubr.bf16.mxu0 %v772
        %2433 = vmatmul.mubr.bf16.gmra.mrb[0].mxu0 %v771
        %v2434 = vpop.f32.mrb[0].mxu0
        %v2435 = vadd.f32 %v2146, %v2434
        %v2436 = vpop.f32.mrb[0].mxu0
        %v2437 = vpop.f32.mrb[0].mxu0
        %v2438 = vadd.f32 %v2149, %v2437
        %v2439 = vpop.f32.mrb[0].mxu0
        %2440 = vmatprep.mubr.bf16.mxu0 %v780
        %2441 = vmatmul.mubr.bf16.gmra.mrb[0].mxu0 %v779
        %v2442 = vpop.f32.mrb[0].mxu0
        %v2443 = vadd.f32 %v2154, %v2442
        %v2444 = vpop.f32.mrb[0].mxu0
        %v2445 = vpop.f32.mrb[0].mxu0
        %v2446 = vadd.f32 %v2157, %v2445
        %v2447 = vpop.f32.mrb[0].mxu0
        %2448 = vmatprep.mubr.bf16.mxu0 %v788
        %2449 = vmatmul.mubr.bf16.gmra.mrb[0].mxu0 %v787
        %v2450 = vpop.f32.mrb[0].mxu0
        %v2451 = vadd.f32 %v2162, %v2450
        %v2452 = vpop.f32.mrb[0].mxu0
        %v2453 = vpop.f32.mrb[0].mxu0
        %v2454 = vadd.f32 %v2165, %v2453
        %v2455 = vpop.f32.mrb[0].mxu0
        %2456 = vmatprep.mubr.bf16.mxu0 %v796
        %2457 = vmatmul.mubr.bf16.gmra.mrb[0].mxu0 %v795
        %v2458 = vpop.f32.mrb[0].mxu0
        %v2459 = vadd.f32 %v2170, %v2458
        %v2460 = vpop.f32.mrb[0].mxu0
        %v2461 = vpop.f32.mrb[0].mxu0
        %v2462 = vadd.f32 %v2173, %v2461
        %v2463 = vpop.f32.mrb[0].mxu0
        %2464 = vmatprep.mubr.bf16.mxu0 %v804
        %2465 = vmatmul.mubr.bf16.gmra.mrb[0].mxu0 %v803
        %v2466 = vpop.f32.mrb[0].mxu0
        %v2467 = vadd.f32 %v2178, %v2466
        %v2468 = vpop.f32.mrb[0].mxu0
        %v2469 = vpop.f32.mrb[0].mxu0
        %v2470 = vadd.f32 %v2181, %v2469
        %v2471 = vpop.f32.mrb[0].mxu0
        %2472 = vmatprep.mubr.bf16.mxu0 %v812
        %2473 = vmatmul.mubr.bf16.gmra.mrb[0].mxu0 %v811
        %v2474 = vpop.f32.mrb[0].mxu0
        %v2475 = vadd.f32 %v2186, %v2474
        %v2476 = vpop.f32.mrb[0].mxu0
        %v2477 = vpop.f32.mrb[0].mxu0
        %v2478 = vadd.f32 %v2189, %v2477
        %v2479 = vpop.f32.mrb[0].mxu0
        %2480 = vmatprep.mubr.bf16.mxu0 %v820
        %2481 = vmatmul.mubr.bf16.gmra.mrb[0].mxu0 %v819
        %v2482 = vpop.f32.mrb[0].mxu0
        %v2483 = vadd.f32 %v2194, %v2482
        %v2484 = vpop.f32.mrb[0].mxu0
        %v2485 = vpop.f32.mrb[0].mxu0
        %v2486 = vadd.f32 %v2197, %v2485
        %v2487 = vpop.f32.mrb[0].mxu0
        %2488 = vmatprep.mubr.bf16.mxu0 %v828
        %2489 = vmatmul.mubr.bf16.gmra.mrb[0].mxu0 %v827
        %v2490 = vpop.f32.mrb[0].mxu0
        %v2491 = vadd.f32 %v2202, %v2490
        %v2492 = vpop.f32.mrb[0].mxu0
        %v2493 = vpop.f32.mrb[0].mxu0
        %v2494 = vadd.f32 %v2205, %v2493
        %v2495 = vpop.f32.mrb[0].mxu0
        %2496 = vmatprep.mubr.bf16.mxu0 %v836
        %2497 = vmatmul.mubr.bf16.gmra.mrb[0].mxu0 %v835
        %v2498 = vpop.f32.mrb[0].mxu0
        %v2499 = vadd.f32 %v2210, %v2498
        %v2500 = vpop.f32.mrb[0].mxu0
        %v2501 = vpop.f32.mrb[0].mxu0
        %v2502 = vadd.f32 %v2213, %v2501
        %v2503 = vpop.f32.mrb[0].mxu0
        %2504 = vmatprep.mubr.bf16.mxu0 %v844
        %2505 = vmatmul.mubr.bf16.gmra.mrb[0].mxu0 %v843
        %v2506 = vpop.f32.mrb[0].mxu0
        %v2507 = vadd.f32 %v2218, %v2506
        %v2508 = vpop.f32.mrb[0].mxu0
        %v2509 = vpop.f32.mrb[0].mxu0
        %v2510 = vadd.f32 %v2221, %v2509
        %v2511 = vpop.f32.mrb[0].mxu0
        %2512 = vmatprep.mubr.bf16.mxu0 %v852
        %2513 = vmatmul.mubr.bf16.gmra.mrb[0].mxu0 %v851
        %v2514 = vpop.f32.mrb[0].mxu0
        %v2515 = vadd.f32 %v2226, %v2514
        %v2516 = vpop.f32.mrb[0].mxu0
        %v2517 = vpop.f32.mrb[0].mxu0
        %v2518 = vadd.f32 %v2229, %v2517
        %v2519 = vpop.f32.mrb[0].mxu0
        %2520 = vmatprep.mubr.bf16.mxu0 %v860
        %2521 = vmatmul.mubr.bf16.gmra.mrb[0].mxu0 %v859
        %v2522 = vpop.f32.mrb[0].mxu0
        %v2523 = vadd.f32 %v2234, %v2522
        %v2524 = vpop.f32.mrb[0].mxu0
        %v2525 = vpop.f32.mrb[0].mxu0
        %v2526 = vadd.f32 %v2237, %v2525
        %v2527 = vpop.f32.mrb[0].mxu0
        %2528 = vmatprep.mubr.bf16.mxu0 %v868
        %2529 = vmatmul.mubr.bf16.gmra.mrb[0].mxu0 %v867
        %v2530 = vpop.f32.mrb[0].mxu0
        %v2531 = vadd.f32 %v2242, %v2530
        %v2532 = vpop.f32.mrb[0].mxu0
        %v2533 = vpop.f32.mrb[0].mxu0
        %v2534 = vadd.f32 %v2245, %v2533
        %v2535 = vpop.f32.mrb[0].mxu0
        %2536 = vmatprep.mubr.bf16.mxu0 %v876
        %2537 = vmatmul.mubr.bf16.gmra.mrb[0].mxu0 %v875
        %v2538 = vpop.f32.mrb[0].mxu0
        %v2539 = vadd.f32 %v2250, %v2538
        %v2540 = vpop.f32.mrb[0].mxu0
        %v2541 = vpop.f32.mrb[0].mxu0
        %v2542 = vadd.f32 %v2253, %v2541
        %v2543 = vpop.f32.mrb[0].mxu0
        %2544 = vmatprep.mubr.bf16.mxu0 %v884
        %2545 = vmatmul.mubr.bf16.gmra.mrb[0].mxu0 %v883
        %v2546 = vpop.f32.mrb[0].mxu0
        %v2547 = vadd.f32 %v2258, %v2546
        %v2548 = vpop.f32.mrb[0].mxu0
        %v2549 = vpop.f32.mrb[0].mxu0
        %v2550 = vadd.f32 %v2261, %v2549
        %v2551 = vpop.f32.mrb[0].mxu0
        %2552 = vdwg.mxu0
        %v2553 = vld [vmem:[%s350] sm:$0xff]
        %v2554 = vld [vmem:[%s350 + $0x8] sm:$0xff]
        %v2555 = vld [vmem:[%s350 + $0x10] sm:$0xff]
        %v2556 = vld [vmem:[%s350 + $0x18] sm:$0xff]
        %v2557 = vld [vmem:[%s350 + $0x20] sm:$0xff]
        %v2558 = vld [vmem:[%s350 + $0x28] sm:$0xff]
        %v2559 = vld [vmem:[%s350 + $0x30] sm:$0xff]
        %v2560 = vld [vmem:[%s350 + $0x38] sm:$0xff]
        %v2561 = vld [vmem:[%s350 + $0x40] sm:$0xff]
        %v2562 = vld [vmem:[%s350 + $0x48] sm:$0xff]
        %v2563 = vld [vmem:[%s350 + $0x50] sm:$0xff]
        %v2564 = vld [vmem:[%s350 + $0x58] sm:$0xff]
        %v2565 = vld [vmem:[%s350 + $0x60] sm:$0xff]
        %v2566 = vld [vmem:[%s350 + $0x68] sm:$0xff]
        %v2567 = vld [vmem:[%s350 + $0x70] sm:$0xff]
        %v2568 = vld [vmem:[%s350 + $0x78] sm:$0xff]
        %v2569 = vld [vmem:[%s350 + $0x80] sm:$0xff]
        %v2570 = vld [vmem:[%s350 + $0x88] sm:$0xff]
        %v2571 = vld [vmem:[%s350 + $0x90] sm:$0xff]
        %v2572 = vld [vmem:[%s350 + $0x98] sm:$0xff]
        %v2573 = vld [vmem:[%s350 + $0xa0] sm:$0xff]
        %v2574 = vld [vmem:[%s350 + $0xa8] sm:$0xff]
        %v2575 = vld [vmem:[%s350 + $0xb0] sm:$0xff]
        %v2576 = vld [vmem:[%s350 + $0xb8] sm:$0xff]
        %v2577 = vld [vmem:[%s350 + $0xc0] sm:$0xff]
        %v2578 = vld [vmem:[%s350 + $0xc8] sm:$0xff]
        %v2579 = vld [vmem:[%s350 + $0xd0] sm:$0xff]
        %v2580 = vld [vmem:[%s350 + $0xd8] sm:$0xff]
        %v2581 = vld [vmem:[%s350 + $0xe0] sm:$0xff]
        %v2582 = vld [vmem:[%s350 + $0xe8] sm:$0xff]
        %v2583 = vld [vmem:[%s350 + $0xf0] sm:$0xff]
        %v2584 = vld [vmem:[%s350 + $0xf8] sm:$0xff]
        %v2585 = vld [vmem:[%s350 + $0x100] sm:$0xff]
        %v2586 = vld [vmem:[%s350 + $0x108] sm:$0xff]
        %v2587 = vld [vmem:[%s350 + $0x110] sm:$0xff]
        %v2588 = vld [vmem:[%s350 + $0x118] sm:$0xff]
        %v2589 = vld [vmem:[%s350 + $0x120] sm:$0xff]
        %v2590 = vld [vmem:[%s350 + $0x128] sm:$0xff]
        %v2591 = vld [vmem:[%s350 + $0x130] sm:$0xff]
        %v2592 = vld [vmem:[%s350 + $0x138] sm:$0xff]
        %v2593 = vld [vmem:[%s350 + $0x140] sm:$0xff]
        %v2594 = vld [vmem:[%s350 + $0x148] sm:$0xff]
        %v2595 = vld [vmem:[%s350 + $0x150] sm:$0xff]
        %v2596 = vld [vmem:[%s350 + $0x158] sm:$0xff]
        %v2597 = vld [vmem:[%s350 + $0x160] sm:$0xff]
        %v2598 = vld [vmem:[%s350 + $0x168] sm:$0xff]
        %v2599 = vld [vmem:[%s350 + $0x170] sm:$0xff]
        %v2600 = vld [vmem:[%s350 + $0x178] sm:$0xff]
        %v2601 = vld [vmem:[%s350 + $0x180] sm:$0xff]
        %v2602 = vld [vmem:[%s350 + $0x188] sm:$0xff]
        %v2603 = vld [vmem:[%s350 + $0x190] sm:$0xff]
        %v2604 = vld [vmem:[%s350 + $0x198] sm:$0xff]
        %v2605 = vld [vmem:[%s350 + $0x1a0] sm:$0xff]
        %v2606 = vld [vmem:[%s350 + $0x1a8] sm:$0xff]
        %v2607 = vld [vmem:[%s350 + $0x1b0] sm:$0xff]
        %v2608 = vld [vmem:[%s350 + $0x1b8] sm:$0xff]
        %v2609 = vld [vmem:[%s350 + $0x1c0] sm:$0xff]
        %v2610 = vld [vmem:[%s350 + $0x1c8] sm:$0xff]
        %v2611 = vld [vmem:[%s350 + $0x1d0] sm:$0xff]
        %v2612 = vld [vmem:[%s350 + $0x1d8] sm:$0xff]
        %v2613 = vld [vmem:[%s350 + $0x1e0] sm:$0xff]
        %v2614 = vld [vmem:[%s350 + $0x1e8] sm:$0xff]
        %v2615 = vld [vmem:[%s350 + $0x1f0] sm:$0xff]
        %v2616 = vld [vmem:[%s350 + $0x1f8] sm:$0xff]
        %v2617 = vld [vmem:[%s362] sm:$0xff]
        %v2618 = vld [vmem:[%s362 + $0x8] sm:$0xff]
        %v2619 = vld [vmem:[%s362 + $0x10] sm:$0xff]
        %v2620 = vld [vmem:[%s362 + $0x18] sm:$0xff]
        %v2621 = vld [vmem:[%s362 + $0x20] sm:$0xff]
        %v2622 = vld [vmem:[%s362 + $0x28] sm:$0xff]
        %v2623 = vld [vmem:[%s362 + $0x30] sm:$0xff]
        %v2624 = vld [vmem:[%s362 + $0x38] sm:$0xff]
        %v2625 = vld [vmem:[%s362 + $0x40] sm:$0xff]
        %v2626 = vld [vmem:[%s362 + $0x48] sm:$0xff]
        %v2627 = vld [vmem:[%s362 + $0x50] sm:$0xff]
        %v2628 = vld [vmem:[%s362 + $0x58] sm:$0xff]
        %v2629 = vld [vmem:[%s362 + $0x60] sm:$0xff]
        %v2630 = vld [vmem:[%s362 + $0x68] sm:$0xff]
        %v2631 = vld [vmem:[%s362 + $0x70] sm:$0xff]
        %v2632 = vld [vmem:[%s362 + $0x78] sm:$0xff]
        %v2633 = vld [vmem:[%s362 + $0x80] sm:$0xff]
        %v2634 = vld [vmem:[%s362 + $0x88] sm:$0xff]
        %v2635 = vld [vmem:[%s362 + $0x90] sm:$0xff]
        %v2636 = vld [vmem:[%s362 + $0x98] sm:$0xff]
        %v2637 = vld [vmem:[%s362 + $0xa0] sm:$0xff]
        %v2638 = vld [vmem:[%s362 + $0xa8] sm:$0xff]
        %v2639 = vld [vmem:[%s362 + $0xb0] sm:$0xff]
        %v2640 = vld [vmem:[%s362 + $0xb8] sm:$0xff]
        %v2641 = vld [vmem:[%s362 + $0xc0] sm:$0xff]
        %v2642 = vld [vmem:[%s362 + $0xc8] sm:$0xff]
        %v2643 = vld [vmem:[%s362 + $0xd0] sm:$0xff]
        %v2644 = vld [vmem:[%s362 + $0xd8] sm:$0xff]
        %v2645 = vld [vmem:[%s362 + $0xe0] sm:$0xff]
        %v2646 = vld [vmem:[%s362 + $0xe8] sm:$0xff]
        %v2647 = vld [vmem:[%s362 + $0xf0] sm:$0xff]
        %v2648 = vld [vmem:[%s362 + $0xf8] sm:$0xff]
        %v2649 = vld [vmem:[%s362 + $0x100] sm:$0xff]
        %v2650 = vld [vmem:[%s362 + $0x108] sm:$0xff]
        %v2651 = vld [vmem:[%s362 + $0x110] sm:$0xff]
        %v2652 = vld [vmem:[%s362 + $0x118] sm:$0xff]
        %v2653 = vld [vmem:[%s362 + $0x120] sm:$0xff]
        %v2654 = vld [vmem:[%s362 + $0x128] sm:$0xff]
        %v2655 = vld [vmem:[%s362 + $0x130] sm:$0xff]
        %v2656 = vld [vmem:[%s362 + $0x138] sm:$0xff]
        %v2657 = vld [vmem:[%s362 + $0x140] sm:$0xff]
        %v2658 = vld [vmem:[%s362 + $0x148] sm:$0xff]
        %v2659 = vld [vmem:[%s362 + $0x150] sm:$0xff]
        %v2660 = vld [vmem:[%s362 + $0x158] sm:$0xff]
        %v2661 = vld [vmem:[%s362 + $0x160] sm:$0xff]
        %v2662 = vld [vmem:[%s362 + $0x168] sm:$0xff]
        %v2663 = vld [vmem:[%s362 + $0x170] sm:$0xff]
        %v2664 = vld [vmem:[%s362 + $0x178] sm:$0xff]
        %v2665 = vld [vmem:[%s362 + $0x180] sm:$0xff]
        %v2666 = vld [vmem:[%s362 + $0x188] sm:$0xff]
        %v2667 = vld [vmem:[%s362 + $0x190] sm:$0xff]
        %v2668 = vld [vmem:[%s362 + $0x198] sm:$0xff]
        %v2669 = vld [vmem:[%s362 + $0x1a0] sm:$0xff]
        %v2670 = vld [vmem:[%s362 + $0x1a8] sm:$0xff]
        %v2671 = vld [vmem:[%s362 + $0x1b0] sm:$0xff]
        %v2672 = vld [vmem:[%s362 + $0x1b8] sm:$0xff]
        %v2673 = vld [vmem:[%s362 + $0x1c0] sm:$0xff]
        %v2674 = vld [vmem:[%s362 + $0x1c8] sm:$0xff]
        %v2675 = vld [vmem:[%s362 + $0x1d0] sm:$0xff]
        %v2676 = vld [vmem:[%s362 + $0x1d8] sm:$0xff]
        %v2677 = vld [vmem:[%s362 + $0x1e0] sm:$0xff]
        %v2678 = vld [vmem:[%s362 + $0x1e8] sm:$0xff]
        %v2679 = vld [vmem:[%s362 + $0x1f0] sm:$0xff]
        %v2680 = vld [vmem:[%s362 + $0x1f8] sm:$0xff]
        %2682 = vset.pattern.permute.xlu0 0
        %2683 = vperm.xlu0 %2682, %v2617
        %v2684 = vpop.permute.xlu0 %2683
        %2687 = vset.pattern.permute.xlu0 0
        %2688 = vperm.xlu0 %2687, %v2618
        %v2689 = vpop.permute.xlu0 %2688
        %2692 = vset.pattern.permute.xlu0 0
        %2693 = vperm.xlu0 %2692, %v2619
        %v2694 = vpop.permute.xlu0 %2693
        %2697 = vset.pattern.permute.xlu0 0
        %2698 = vperm.xlu0 %2697, %v2620
        %v2699 = vpop.permute.xlu0 %2698
        %2702 = vset.pattern.permute.xlu0 0
        %2703 = vperm.xlu0 %2702, %v2621
        %v2704 = vpop.permute.xlu0 %2703
        %2707 = vset.pattern.permute.xlu0 0
        %2708 = vperm.xlu0 %2707, %v2622
        %v2709 = vpop.permute.xlu0 %2708
        %2712 = vset.pattern.permute.xlu0 0
        %2713 = vperm.xlu0 %2712, %v2623
        %v2714 = vpop.permute.xlu0 %2713
        %2717 = vset.pattern.permute.xlu0 0
        %2718 = vperm.xlu0 %2717, %v2624
        %v2719 = vpop.permute.xlu0 %2718
        %2722 = vset.pattern.permute.xlu0 0
        %2723 = vperm.xlu0 %2722, %v2625
        %v2724 = vpop.permute.xlu0 %2723
        %2727 = vset.pattern.permute.xlu0 0
        %2728 = vperm.xlu0 %2727, %v2626
        %v2729 = vpop.permute.xlu0 %2728
        %2732 = vset.pattern.permute.xlu0 0
        %2733 = vperm.xlu0 %2732, %v2627
        %v2734 = vpop.permute.xlu0 %2733
        %2737 = vset.pattern.permute.xlu0 0
        %2738 = vperm.xlu0 %2737, %v2628
        %v2739 = vpop.permute.xlu0 %2738
        %2742 = vset.pattern.permute.xlu0 0
        %2743 = vperm.xlu0 %2742, %v2629
        %v2744 = vpop.permute.xlu0 %2743
        %2747 = vset.pattern.permute.xlu0 0
        %2748 = vperm.xlu0 %2747, %v2630
        %v2749 = vpop.permute.xlu0 %2748
        %2752 = vset.pattern.permute.xlu0 0
        %2753 = vperm.xlu0 %2752, %v2631
        %v2754 = vpop.permute.xlu0 %2753
        %2757 = vset.pattern.permute.xlu0 0
        %2758 = vperm.xlu0 %2757, %v2632
        %v2759 = vpop.permute.xlu0 %2758
        %2762 = vset.pattern.permute.xlu0 0
        %2763 = vperm.xlu0 %2762, %v2633
        %v2764 = vpop.permute.xlu0 %2763
        %2767 = vset.pattern.permute.xlu0 0
        %2768 = vperm.xlu0 %2767, %v2634
        %v2769 = vpop.permute.xlu0 %2768
        %2772 = vset.pattern.permute.xlu0 0
        %2773 = vperm.xlu0 %2772, %v2635
        %v2774 = vpop.permute.xlu0 %2773
        %2777 = vset.pattern.permute.xlu0 0
        %2778 = vperm.xlu0 %2777, %v2636
        %v2779 = vpop.permute.xlu0 %2778
        %2782 = vset.pattern.permute.xlu0 0
        %2783 = vperm.xlu0 %2782, %v2637
        %v2784 = vpop.permute.xlu0 %2783
        %2787 = vset.pattern.permute.xlu0 0
        %2788 = vperm.xlu0 %2787, %v2638
        %v2789 = vpop.permute.xlu0 %2788
        %2792 = vset.pattern.permute.xlu0 0
        %2793 = vperm.xlu0 %2792, %v2639
        %v2794 = vpop.permute.xlu0 %2793
        %2797 = vset.pattern.permute.xlu0 0
        %2798 = vperm.xlu0 %2797, %v2640
        %v2799 = vpop.permute.xlu0 %2798
        %2802 = vset.pattern.permute.xlu0 0
        %2803 = vperm.xlu0 %2802, %v2641
        %v2804 = vpop.permute.xlu0 %2803
        %2807 = vset.pattern.permute.xlu0 0
        %2808 = vperm.xlu0 %2807, %v2642
        %v2809 = vpop.permute.xlu0 %2808
        %2812 = vset.pattern.permute.xlu0 0
        %2813 = vperm.xlu0 %2812, %v2643
        %v2814 = vpop.permute.xlu0 %2813
        %2817 = vset.pattern.permute.xlu0 0
        %2818 = vperm.xlu0 %2817, %v2644
        %v2819 = vpop.permute.xlu0 %2818
        %2822 = vset.pattern.permute.xlu0 0
        %2823 = vperm.xlu0 %2822, %v2645
        %v2824 = vpop.permute.xlu0 %2823
        %2827 = vset.pattern.permute.xlu0 0
        %2828 = vperm.xlu0 %2827, %v2646
        %v2829 = vpop.permute.xlu0 %2828
        %2832 = vset.pattern.permute.xlu0 0
        %2833 = vperm.xlu0 %2832, %v2647
        %v2834 = vpop.permute.xlu0 %2833
        %2837 = vset.pattern.permute.xlu0 0
        %2838 = vperm.xlu0 %2837, %v2648
        %v2839 = vpop.permute.xlu0 %2838
        %2842 = vset.pattern.permute.xlu0 0
        %2843 = vperm.xlu0 %2842, %v2649
        %v2844 = vpop.permute.xlu0 %2843
        %2847 = vset.pattern.permute.xlu0 0
        %2848 = vperm.xlu0 %2847, %v2650
        %v2849 = vpop.permute.xlu0 %2848
        %2852 = vset.pattern.permute.xlu0 0
        %2853 = vperm.xlu0 %2852, %v2651
        %v2854 = vpop.permute.xlu0 %2853
        %2857 = vset.pattern.permute.xlu0 0
        %2858 = vperm.xlu0 %2857, %v2652
        %v2859 = vpop.permute.xlu0 %2858
        %2862 = vset.pattern.permute.xlu0 0
        %2863 = vperm.xlu0 %2862, %v2653
        %v2864 = vpop.permute.xlu0 %2863
        %2867 = vset.pattern.permute.xlu0 0
        %2868 = vperm.xlu0 %2867, %v2654
        %v2869 = vpop.permute.xlu0 %2868
        %2872 = vset.pattern.permute.xlu0 0
        %2873 = vperm.xlu0 %2872, %v2655
        %v2874 = vpop.permute.xlu0 %2873
        %2877 = vset.pattern.permute.xlu0 0
        %2878 = vperm.xlu0 %2877, %v2656
        %v2879 = vpop.permute.xlu0 %2878
        %2882 = vset.pattern.permute.xlu0 0
        %2883 = vperm.xlu0 %2882, %v2657
        %v2884 = vpop.permute.xlu0 %2883
        %2887 = vset.pattern.permute.xlu0 0
        %2888 = vperm.xlu0 %2887, %v2658
        %v2889 = vpop.permute.xlu0 %2888
        %2892 = vset.pattern.permute.xlu0 0
        %2893 = vperm.xlu0 %2892, %v2659
        %v2894 = vpop.permute.xlu0 %2893
        %2897 = vset.pattern.permute.xlu0 0
        %2898 = vperm.xlu0 %2897, %v2660
        %v2899 = vpop.permute.xlu0 %2898
        %2902 = vset.pattern.permute.xlu0 0
        %2903 = vperm.xlu0 %2902, %v2661
        %v2904 = vpop.permute.xlu0 %2903
        %2907 = vset.pattern.permute.xlu0 0
        %2908 = vperm.xlu0 %2907, %v2662
        %v2909 = vpop.permute.xlu0 %2908
        %2912 = vset.pattern.permute.xlu0 0
        %2913 = vperm.xlu0 %2912, %v2663
        %v2914 = vpop.permute.xlu0 %2913
        %2917 = vset.pattern.permute.xlu0 0
        %2918 = vperm.xlu0 %2917, %v2664
        %v2919 = vpop.permute.xlu0 %2918
        %2922 = vset.pattern.permute.xlu0 0
        %2923 = vperm.xlu0 %2922, %v2665
        %v2924 = vpop.permute.xlu0 %2923
        %2927 = vset.pattern.permute.xlu0 0
        %2928 = vperm.xlu0 %2927, %v2666
        %v2929 = vpop.permute.xlu0 %2928
        %2932 = vset.pattern.permute.xlu0 0
        %2933 = vperm.xlu0 %2932, %v2667
        %v2934 = vpop.permute.xlu0 %2933
        %2937 = vset.pattern.permute.xlu0 0
        %2938 = vperm.xlu0 %2937, %v2668
        %v2939 = vpop.permute.xlu0 %2938
        %2942 = vset.pattern.permute.xlu0 0
        %2943 = vperm.xlu0 %2942, %v2669
        %v2944 = vpop.permute.xlu0 %2943
        %2947 = vset.pattern.permute.xlu0 0
        %2948 = vperm.xlu0 %2947, %v2670
        %v2949 = vpop.permute.xlu0 %2948
        %2952 = vset.pattern.permute.xlu0 0
        %2953 = vperm.xlu0 %2952, %v2671
        %v2954 = vpop.permute.xlu0 %2953
        %2957 = vset.pattern.permute.xlu0 0
        %2958 = vperm.xlu0 %2957, %v2672
        %v2959 = vpop.permute.xlu0 %2958
        %2962 = vset.pattern.permute.xlu0 0
        %2963 = vperm.xlu0 %2962, %v2673
        %v2964 = vpop.permute.xlu0 %2963
        %2967 = vset.pattern.permute.xlu0 0
        %2968 = vperm.xlu0 %2967, %v2674
        %v2969 = vpop.permute.xlu0 %2968
        %2972 = vset.pattern.permute.xlu0 0
        %2973 = vperm.xlu0 %2972, %v2675
        %v2974 = vpop.permute.xlu0 %2973
        %2977 = vset.pattern.permute.xlu0 0
        %2978 = vperm.xlu0 %2977, %v2676
        %v2979 = vpop.permute.xlu0 %2978
        %2982 = vset.pattern.permute.xlu0 0
        %2983 = vperm.xlu0 %2982, %v2677
        %v2984 = vpop.permute.xlu0 %2983
        %2987 = vset.pattern.permute.xlu0 0
        %2988 = vperm.xlu0 %2987, %v2678
        %v2989 = vpop.permute.xlu0 %2988
        %2992 = vset.pattern.permute.xlu0 0
        %2993 = vperm.xlu0 %2992, %v2679
        %v2994 = vpop.permute.xlu0 %2993
        %2997 = vset.pattern.permute.xlu0 0
        %2998 = vperm.xlu0 %2997, %v2680
        %v2999 = vpop.permute.xlu0 %2998
        %v3001 = vmul.f32 %v2299, %v2684
        %v3002 = vmul.f32 %v2302, %v2689
        %v3003 = vmul.f32 %v2307, %v2694
        %v3004 = vmul.f32 %v2310, %v2699
        %v3005 = vmul.f32 %v2315, %v2704
        %v3006 = vmul.f32 %v2318, %v2709
        %v3007 = vmul.f32 %v2323, %v2714
        %v3008 = vmul.f32 %v2326, %v2719
        %v3009 = vmul.f32 %v2331, %v2724
        %v3010 = vmul.f32 %v2334, %v2729
        %v3011 = vmul.f32 %v2339, %v2734
        %v3012 = vmul.f32 %v2342, %v2739
        %v3013 = vmul.f32 %v2347, %v2744
        %v3014 = vmul.f32 %v2350, %v2749
        %v3015 = vmul.f32 %v2355, %v2754
        %v3016 = vmul.f32 %v2358, %v2759
        %v3017 = vmul.f32 %v2363, %v2764
        %v3018 = vmul.f32 %v2366, %v2769
        %v3019 = vmul.f32 %v2371, %v2774
        %v3020 = vmul.f32 %v2374, %v2779
        %v3021 = vmul.f32 %v2379, %v2784
        %v3022 = vmul.f32 %v2382, %v2789
        %v3023 = vmul.f32 %v2387, %v2794
        %v3024 = vmul.f32 %v2390, %v2799
        %v3025 = vmul.f32 %v2395, %v2804
        %v3026 = vmul.f32 %v2398, %v2809
        %v3027 = vmul.f32 %v2403, %v2814
        %v3028 = vmul.f32 %v2406, %v2819
        %v3029 = vmul.f32 %v2411, %v2824
        %v3030 = vmul.f32 %v2414, %v2829
        %v3031 = vmul.f32 %v2419, %v2834
        %v3032 = vmul.f32 %v2422, %v2839
        %v3033 = vmul.f32 %v2427, %v2844
        %v3034 = vmul.f32 %v2430, %v2849
        %v3035 = vmul.f32 %v2435, %v2854
        %v3036 = vmul.f32 %v2438, %v2859
        %v3037 = vmul.f32 %v2443, %v2864
        %v3038 = vmul.f32 %v2446, %v2869
        %v3039 = vmul.f32 %v2451, %v2874
        %v3040 = vmul.f32 %v2454, %v2879
        %v3041 = vmul.f32 %v2459, %v2884
        %v3042 = vmul.f32 %v2462, %v2889
        %v3043 = vmul.f32 %v2467, %v2894
        %v3044 = vmul.f32 %v2470, %v2899
        %v3045 = vmul.f32 %v2475, %v2904
        %v3046 = vmul.f32 %v2478, %v2909
        %v3047 = vmul.f32 %v2483, %v2914
        %v3048 = vmul.f32 %v2486, %v2919
        %v3049 = vmul.f32 %v2491, %v2924
        %v3050 = vmul.f32 %v2494, %v2929
        %v3051 = vmul.f32 %v2499, %v2934
        %v3052 = vmul.f32 %v2502, %v2939
        %v3053 = vmul.f32 %v2507, %v2944
        %v3054 = vmul.f32 %v2510, %v2949
        %v3055 = vmul.f32 %v2515, %v2954
        %v3056 = vmul.f32 %v2518, %v2959
        %v3057 = vmul.f32 %v2523, %v2964
        %v3058 = vmul.f32 %v2526, %v2969
        %v3059 = vmul.f32 %v2531, %v2974
        %v3060 = vmul.f32 %v2534, %v2979
        %v3061 = vmul.f32 %v2539, %v2984
        %v3062 = vmul.f32 %v2542, %v2989
        %v3063 = vmul.f32 %v2547, %v2994
        %v3064 = vmul.f32 %v2550, %v2999
        %v3065 = vadd.f32 %v2553, %v3001
        %v3066 = vadd.f32 %v2554, %v3002
        %v3067 = vadd.f32 %v2555, %v3003
        %v3068 = vadd.f32 %v2556, %v3004
        %v3069 = vadd.f32 %v2557, %v3005
        %v3070 = vadd.f32 %v2558, %v3006
        %v3071 = vadd.f32 %v2559, %v3007
        %v3072 = vadd.f32 %v2560, %v3008
        %v3073 = vadd.f32 %v2561, %v3009
        %v3074 = vadd.f32 %v2562, %v3010
        %v3075 = vadd.f32 %v2563, %v3011
        %v3076 = vadd.f32 %v2564, %v3012
        %v3077 = vadd.f32 %v2565, %v3013
        %v3078 = vadd.f32 %v2566, %v3014
        %v3079 = vadd.f32 %v2567, %v3015
        %v3080 = vadd.f32 %v2568, %v3016
        %v3081 = vadd.f32 %v2569, %v3017
        %v3082 = vadd.f32 %v2570, %v3018
        %v3083 = vadd.f32 %v2571, %v3019
        %v3084 = vadd.f32 %v2572, %v3020
        %v3085 = vadd.f32 %v2573, %v3021
        %v3086 = vadd.f32 %v2574, %v3022
        %v3087 = vadd.f32 %v2575, %v3023
        %v3088 = vadd.f32 %v2576, %v3024
        %v3089 = vadd.f32 %v2577, %v3025
        %v3090 = vadd.f32 %v2578, %v3026
        %v3091 = vadd.f32 %v2579, %v3027
        %v3092 = vadd.f32 %v2580, %v3028
        %v3093 = vadd.f32 %v2581, %v3029
        %v3094 = vadd.f32 %v2582, %v3030
        %v3095 = vadd.f32 %v2583, %v3031
        %v3096 = vadd.f32 %v2584, %v3032
        %v3097 = vadd.f32 %v2585, %v3033
        %v3098 = vadd.f32 %v2586, %v3034
        %v3099 = vadd.f32 %v2587, %v3035
        %v3100 = vadd.f32 %v2588, %v3036
        %v3101 = vadd.f32 %v2589, %v3037
        %v3102 = vadd.f32 %v2590, %v3038
        %v3103 = vadd.f32 %v2591, %v3039
        %v3104 = vadd.f32 %v2592, %v3040
        %v3105 = vadd.f32 %v2593, %v3041
        %v3106 = vadd.f32 %v2594, %v3042
        %v3107 = vadd.f32 %v2595, %v3043
        %v3108 = vadd.f32 %v2596, %v3044
        %v3109 = vadd.f32 %v2597, %v3045
        %v3110 = vadd.f32 %v2598, %v3046
        %v3111 = vadd.f32 %v2599, %v3047
        %v3112 = vadd.f32 %v2600, %v3048
        %v3113 = vadd.f32 %v2601, %v3049
        %v3114 = vadd.f32 %v2602, %v3050
        %v3115 = vadd.f32 %v2603, %v3051
        %v3116 = vadd.f32 %v2604, %v3052
        %v3117 = vadd.f32 %v2605, %v3053
        %v3118 = vadd.f32 %v2606, %v3054
        %v3119 = vadd.f32 %v2607, %v3055
        %v3120 = vadd.f32 %v2608, %v3056
        %v3121 = vadd.f32 %v2609, %v3057
        %v3122 = vadd.f32 %v2610, %v3058
        %v3123 = vadd.f32 %v2611, %v3059
        %v3124 = vadd.f32 %v2612, %v3060
        %v3125 = vadd.f32 %v2613, %v3061
        %v3126 = vadd.f32 %v2614, %v3062
        %v3127 = vadd.f32 %v2615, %v3063
        %v3128 = vadd.f32 %v2616, %v3064
        %3129 = vst [vmem:[%s350] sm:$0xff] %v3065
        %3130 = vst [vmem:[%s350 + $0x8] sm:$0xff] %v3066
        %3131 = vst [vmem:[%s350 + $0x10] sm:$0xff] %v3067
        %3132 = vst [vmem:[%s350 + $0x18] sm:$0xff] %v3068
        %3133 = vst [vmem:[%s350 + $0x20] sm:$0xff] %v3069
        %3134 = vst [vmem:[%s350 + $0x28] sm:$0xff] %v3070
        %3135 = vst [vmem:[%s350 + $0x30] sm:$0xff] %v3071
        %3136 = vst [vmem:[%s350 + $0x38] sm:$0xff] %v3072
        %3137 = vst [vmem:[%s350 + $0x40] sm:$0xff] %v3073
        %3138 = vst [vmem:[%s350 + $0x48] sm:$0xff] %v3074
        %3139 = vst [vmem:[%s350 + $0x50] sm:$0xff] %v3075
        %3140 = vst [vmem:[%s350 + $0x58] sm:$0xff] %v3076
        %3141 = vst [vmem:[%s350 + $0x60] sm:$0xff] %v3077
        %3142 = vst [vmem:[%s350 + $0x68] sm:$0xff] %v3078
        %3143 = vst [vmem:[%s350 + $0x70] sm:$0xff] %v3079
        %3144 = vst [vmem:[%s350 + $0x78] sm:$0xff] %v3080
        %3145 = vst [vmem:[%s350 + $0x80] sm:$0xff] %v3081
        %3146 = vst [vmem:[%s350 + $0x88] sm:$0xff] %v3082
        %3147 = vst [vmem:[%s350 + $0x90] sm:$0xff] %v3083
        %3148 = vst [vmem:[%s350 + $0x98] sm:$0xff] %v3084
        %3149 = vst [vmem:[%s350 + $0xa0] sm:$0xff] %v3085
        %3150 = vst [vmem:[%s350 + $0xa8] sm:$0xff] %v3086
        %3151 = vst [vmem:[%s350 + $0xb0] sm:$0xff] %v3087
        %3152 = vst [vmem:[%s350 + $0xb8] sm:$0xff] %v3088
        %3153 = vst [vmem:[%s350 + $0xc0] sm:$0xff] %v3089
        %3154 = vst [vmem:[%s350 + $0xc8] sm:$0xff] %v3090
        %3155 = vst [vmem:[%s350 + $0xd0] sm:$0xff] %v3091
        %3156 = vst [vmem:[%s350 + $0xd8] sm:$0xff] %v3092
        %3157 = vst [vmem:[%s350 + $0xe0] sm:$0xff] %v3093
        %3158 = vst [vmem:[%s350 + $0xe8] sm:$0xff] %v3094
        %3159 = vst [vmem:[%s350 + $0xf0] sm:$0xff] %v3095
        %3160 = vst [vmem:[%s350 + $0xf8] sm:$0xff] %v3096
        %3161 = vst [vmem:[%s350 + $0x100] sm:$0xff] %v3097
        %3162 = vst [vmem:[%s350 + $0x108] sm:$0xff] %v3098
        %3163 = vst [vmem:[%s350 + $0x110] sm:$0xff] %v3099
        %3164 = vst [vmem:[%s350 + $0x118] sm:$0xff] %v3100
        %3165 = vst [vmem:[%s350 + $0x120] sm:$0xff] %v3101
        %3166 = vst [vmem:[%s350 + $0x128] sm:$0xff] %v3102
        %3167 = vst [vmem:[%s350 + $0x130] sm:$0xff] %v3103
        %3168 = vst [vmem:[%s350 + $0x138] sm:$0xff] %v3104
        %3169 = vst [vmem:[%s350 + $0x140] sm:$0xff] %v3105
        %3170 = vst [vmem:[%s350 + $0x148] sm:$0xff] %v3106
        %3171 = vst [vmem:[%s350 + $0x150] sm:$0xff] %v3107
        %3172 = vst [vmem:[%s350 + $0x158] sm:$0xff] %v3108
        %3173 = vst [vmem:[%s350 + $0x160] sm:$0xff] %v3109
        %3174 = vst [vmem:[%s350 + $0x168] sm:$0xff] %v3110
        %3175 = vst [vmem:[%s350 + $0x170] sm:$0xff] %v3111
        %3176 = vst [vmem:[%s350 + $0x178] sm:$0xff] %v3112
        %3177 = vst [vmem:[%s350 + $0x180] sm:$0xff] %v3113
        %3178 = vst [vmem:[%s350 + $0x188] sm:$0xff] %v3114
        %3179 = vst [vmem:[%s350 + $0x190] sm:$0xff] %v3115
        %3180 = vst [vmem:[%s350 + $0x198] sm:$0xff] %v3116
        %3181 = vst [vmem:[%s350 + $0x1a0] sm:$0xff] %v3117
        %3182 = vst [vmem:[%s350 + $0x1a8] sm:$0xff] %v3118
        %3183 = vst [vmem:[%s350 + $0x1b0] sm:$0xff] %v3119
        %3184 = vst [vmem:[%s350 + $0x1b8] sm:$0xff] %v3120
        %3185 = vst [vmem:[%s350 + $0x1c0] sm:$0xff] %v3121
        %3186 = vst [vmem:[%s350 + $0x1c8] sm:$0xff] %v3122
        %3187 = vst [vmem:[%s350 + $0x1d0] sm:$0xff] %v3123
        %3188 = vst [vmem:[%s350 + $0x1d8] sm:$0xff] %v3124
        %3189 = vst [vmem:[%s350 + $0x1e0] sm:$0xff] %v3125
        %3190 = vst [vmem:[%s350 + $0x1e8] sm:$0xff] %v3126
        %3191 = vst [vmem:[%s350 + $0x1f0] sm:$0xff] %v3127
        %3192 = vst [vmem:[%s350 + $0x1f8] sm:$0xff] %v3128
        %p3193 = scmp.eq.s32.totalorder %s30, 2
        %p3194 = pnand %p3193, %p368
        %p3195 = pneg %p3194
        // Predicated region
        $region53: #{tpu_custom_call.1} parent=35 // pred_check
          _
        $region54: #{tpu_custom_call.1} parent=35 // pred_check_branch
          %3197 = sbr.rel (%p3194) target = $region56
        $region55: #{tpu_custom_call.1} parent=35 // pred_region
          %v3198 = vld [vmem:[%s350] sm:$0xff]
          %v3199 = vld [vmem:[%s350 + $0x8] sm:$0xff]
          %v3200 = vld [vmem:[%s350 + $0x10] sm:$0xff]
          %v3201 = vld [vmem:[%s350 + $0x18] sm:$0xff]
          %v3202 = vld [vmem:[%s350 + $0x20] sm:$0xff]
          %v3203 = vld [vmem:[%s350 + $0x28] sm:$0xff]
          %v3204 = vld [vmem:[%s350 + $0x30] sm:$0xff]
          %v3205 = vld [vmem:[%s350 + $0x38] sm:$0xff]
          %v3206 = vld [vmem:[%s350 + $0x40] sm:$0xff]
          %v3207 = vld [vmem:[%s350 + $0x48] sm:$0xff]
          %v3208 = vld [vmem:[%s350 + $0x50] sm:$0xff]
          %v3209 = vld [vmem:[%s350 + $0x58] sm:$0xff]
          %v3210 = vld [vmem:[%s350 + $0x60] sm:$0xff]
          %v3211 = vld [vmem:[%s350 + $0x68] sm:$0xff]
          %v3212 = vld [vmem:[%s350 + $0x70] sm:$0xff]
          %v3213 = vld [vmem:[%s350 + $0x78] sm:$0xff]
          %v3214 = vld [vmem:[%s350 + $0x80] sm:$0xff]
          %v3215 = vld [vmem:[%s350 + $0x88] sm:$0xff]
          %v3216 = vld [vmem:[%s350 + $0x90] sm:$0xff]
          %v3217 = vld [vmem:[%s350 + $0x98] sm:$0xff]
          %v3218 = vld [vmem:[%s350 + $0xa0] sm:$0xff]
          %v3219 = vld [vmem:[%s350 + $0xa8] sm:$0xff]
          %v3220 = vld [vmem:[%s350 + $0xb0] sm:$0xff]
          %v3221 = vld [vmem:[%s350 + $0xb8] sm:$0xff]
          %v3222 = vld [vmem:[%s350 + $0xc0] sm:$0xff]
          %v3223 = vld [vmem:[%s350 + $0xc8] sm:$0xff]
          %v3224 = vld [vmem:[%s350 + $0xd0] sm:$0xff]
          %v3225 = vld [vmem:[%s350 + $0xd8] sm:$0xff]
          %v3226 = vld [vmem:[%s350 + $0xe0] sm:$0xff]
          %v3227 = vld [vmem:[%s350 + $0xe8] sm:$0xff]
          %v3228 = vld [vmem:[%s350 + $0xf0] sm:$0xff]
          %v3229 = vld [vmem:[%s350 + $0xf8] sm:$0xff]
          %v3230 = vld [vmem:[%s350 + $0x100] sm:$0xff]
          %v3231 = vld [vmem:[%s350 + $0x108] sm:$0xff]
          %v3232 = vld [vmem:[%s350 + $0x110] sm:$0xff]
          %v3233 = vld [vmem:[%s350 + $0x118] sm:$0xff]
          %v3234 = vld [vmem:[%s350 + $0x120] sm:$0xff]
          %v3235 = vld [vmem:[%s350 + $0x128] sm:$0xff]
          %v3236 = vld [vmem:[%s350 + $0x130] sm:$0xff]
          %v3237 = vld [vmem:[%s350 + $0x138] sm:$0xff]
          %v3238 = vld [vmem:[%s350 + $0x140] sm:$0xff]
          %v3239 = vld [vmem:[%s350 + $0x148] sm:$0xff]
          %v3240 = vld [vmem:[%s350 + $0x150] sm:$0xff]
          %v3241 = vld [vmem:[%s350 + $0x158] sm:$0xff]
          %v3242 = vld [vmem:[%s350 + $0x160] sm:$0xff]
          %v3243 = vld [vmem:[%s350 + $0x168] sm:$0xff]
          %v3244 = vld [vmem:[%s350 + $0x170] sm:$0xff]
          %v3245 = vld [vmem:[%s350 + $0x178] sm:$0xff]
          %v3246 = vld [vmem:[%s350 + $0x180] sm:$0xff]
          %v3247 = vld [vmem:[%s350 + $0x188] sm:$0xff]
          %v3248 = vld [vmem:[%s350 + $0x190] sm:$0xff]
          %v3249 = vld [vmem:[%s350 + $0x198] sm:$0xff]
          %v3250 = vld [vmem:[%s350 + $0x1a0] sm:$0xff]
          %v3251 = vld [vmem:[%s350 + $0x1a8] sm:$0xff]
          %v3252 = vld [vmem:[%s350 + $0x1b0] sm:$0xff]
          %v3253 = vld [vmem:[%s350 + $0x1b8] sm:$0xff]
          %v3254 = vld [vmem:[%s350 + $0x1c0] sm:$0xff]
          %v3255 = vld [vmem:[%s350 + $0x1c8] sm:$0xff]
          %v3256 = vld [vmem:[%s350 + $0x1d0] sm:$0xff]
          %v3257 = vld [vmem:[%s350 + $0x1d8] sm:$0xff]
          %v3258 = vld [vmem:[%s350 + $0x1e0] sm:$0xff]
          %v3259 = vld [vmem:[%s350 + $0x1e8] sm:$0xff]
          %v3260 = vld [vmem:[%s350 + $0x1f0] sm:$0xff]
          %v3261 = vld [vmem:[%s350 + $0x1f8] sm:$0xff]
          %v3262 = vmax.f32 %v3198, 0.0
          %v3263 = vmax.f32 %v3199, 0.0
          %v3264 = vmax.f32 %v3200, 0.0
          %v3265 = vmax.f32 %v3201, 0.0
          %v3266 = vmax.f32 %v3202, 0.0
          %v3267 = vmax.f32 %v3203, 0.0
          %v3268 = vmax.f32 %v3204, 0.0
          %v3269 = vmax.f32 %v3205, 0.0
          %v3270 = vmax.f32 %v3206, 0.0
          %v3271 = vmax.f32 %v3207, 0.0
          %v3272 = vmax.f32 %v3208, 0.0
          %v3273 = vmax.f32 %v3209, 0.0
          %v3274 = vmax.f32 %v3210, 0.0
          %v3275 = vmax.f32 %v3211, 0.0
          %v3276 = vmax.f32 %v3212, 0.0
          %v3277 = vmax.f32 %v3213, 0.0
          %v3278 = vmax.f32 %v3214, 0.0
          %v3279 = vmax.f32 %v3215, 0.0
          %v3280 = vmax.f32 %v3216, 0.0
          %v3281 = vmax.f32 %v3217, 0.0
          %v3282 = vmax.f32 %v3218, 0.0
          %v3283 = vmax.f32 %v3219, 0.0
          %v3284 = vmax.f32 %v3220, 0.0
          %v3285 = vmax.f32 %v3221, 0.0
          %v3286 = vmax.f32 %v3222, 0.0
          %v3287 = vmax.f32 %v3223, 0.0
          %v3288 = vmax.f32 %v3224, 0.0
          %v3289 = vmax.f32 %v3225, 0.0
          %v3290 = vmax.f32 %v3226, 0.0
          %v3291 = vmax.f32 %v3227, 0.0
          %v3292 = vmax.f32 %v3228, 0.0
          %v3293 = vmax.f32 %v3229, 0.0
          %v3294 = vmax.f32 %v3230, 0.0
          %v3295 = vmax.f32 %v3231, 0.0
          %v3296 = vmax.f32 %v3232, 0.0
          %v3297 = vmax.f32 %v3233, 0.0
          %v3298 = vmax.f32 %v3234, 0.0
          %v3299 = vmax.f32 %v3235, 0.0
          %v3300 = vmax.f32 %v3236, 0.0
          %v3301 = vmax.f32 %v3237, 0.0
          %v3302 = vmax.f32 %v3238, 0.0
          %v3303 = vmax.f32 %v3239, 0.0
          %v3304 = vmax.f32 %v3240, 0.0
          %v3305 = vmax.f32 %v3241, 0.0
          %v3306 = vmax.f32 %v3242, 0.0
          %v3307 = vmax.f32 %v3243, 0.0
          %v3308 = vmax.f32 %v3244, 0.0
          %v3309 = vmax.f32 %v3245, 0.0
          %v3310 = vmax.f32 %v3246, 0.0
          %v3311 = vmax.f32 %v3247, 0.0
          %v3312 = vmax.f32 %v3248, 0.0
          %v3313 = vmax.f32 %v3249, 0.0
          %v3314 = vmax.f32 %v3250, 0.0
          %v3315 = vmax.f32 %v3251, 0.0
          %v3316 = vmax.f32 %v3252, 0.0
          %v3317 = vmax.f32 %v3253, 0.0
          %v3318 = vmax.f32 %v3254, 0.0
          %v3319 = vmax.f32 %v3255, 0.0
          %v3320 = vmax.f32 %v3256, 0.0
          %v3321 = vmax.f32 %v3257, 0.0
          %v3322 = vmax.f32 %v3258, 0.0
          %v3323 = vmax.f32 %v3259, 0.0
          %v3324 = vmax.f32 %v3260, 0.0
          %v3325 = vmax.f32 %v3261, 0.0
          %3326 = vst [vmem:[%s350] sm:$0xff] %v3262
          %3327 = vst [vmem:[%s350 + $0x8] sm:$0xff] %v3263
          %3328 = vst [vmem:[%s350 + $0x10] sm:$0xff] %v3264
          %3329 = vst [vmem:[%s350 + $0x18] sm:$0xff] %v3265
          %3330 = vst [vmem:[%s350 + $0x20] sm:$0xff] %v3266
          %3331 = vst [vmem:[%s350 + $0x28] sm:$0xff] %v3267
          %3332 = vst [vmem:[%s350 + $0x30] sm:$0xff] %v3268
          %3333 = vst [vmem:[%s350 + $0x38] sm:$0xff] %v3269
          %3334 = vst [vmem:[%s350 + $0x40] sm:$0xff] %v3270
          %3335 = vst [vmem:[%s350 + $0x48] sm:$0xff] %v3271
          %3336 = vst [vmem:[%s350 + $0x50] sm:$0xff] %v3272
          %3337 = vst [vmem:[%s350 + $0x58] sm:$0xff] %v3273
          %3338 = vst [vmem:[%s350 + $0x60] sm:$0xff] %v3274
          %3339 = vst [vmem:[%s350 + $0x68] sm:$0xff] %v3275
          %3340 = vst [vmem:[%s350 + $0x70] sm:$0xff] %v3276
          %3341 = vst [vmem:[%s350 + $0x78] sm:$0xff] %v3277
          %3342 = vst [vmem:[%s350 + $0x80] sm:$0xff] %v3278
          %3343 = vst [vmem:[%s350 + $0x88] sm:$0xff] %v3279
          %3344 = vst [vmem:[%s350 + $0x90] sm:$0xff] %v3280
          %3345 = vst [vmem:[%s350 + $0x98] sm:$0xff] %v3281
          %3346 = vst [vmem:[%s350 + $0xa0] sm:$0xff] %v3282
          %3347 = vst [vmem:[%s350 + $0xa8] sm:$0xff] %v3283
          %3348 = vst [vmem:[%s350 + $0xb0] sm:$0xff] %v3284
          %3349 = vst [vmem:[%s350 + $0xb8] sm:$0xff] %v3285
          %3350 = vst [vmem:[%s350 + $0xc0] sm:$0xff] %v3286
          %3351 = vst [vmem:[%s350 + $0xc8] sm:$0xff] %v3287
          %3352 = vst [vmem:[%s350 + $0xd0] sm:$0xff] %v3288
          %3353 = vst [vmem:[%s350 + $0xd8] sm:$0xff] %v3289
          %3354 = vst [vmem:[%s350 + $0xe0] sm:$0xff] %v3290
          %3355 = vst [vmem:[%s350 + $0xe8] sm:$0xff] %v3291
          %3356 = vst [vmem:[%s350 + $0xf0] sm:$0xff] %v3292
          %3357 = vst [vmem:[%s350 + $0xf8] sm:$0xff] %v3293
          %3358 = vst [vmem:[%s350 + $0x100] sm:$0xff] %v3294
          %3359 = vst [vmem:[%s350 + $0x108] sm:$0xff] %v3295
          %3360 = vst [vmem:[%s350 + $0x110] sm:$0xff] %v3296
          %3361 = vst [vmem:[%s350 + $0x118] sm:$0xff] %v3297
          %3362 = vst [vmem:[%s350 + $0x120] sm:$0xff] %v3298
          %3363 = vst [vmem:[%s350 + $0x128] sm:$0xff] %v3299
          %3364 = vst [vmem:[%s350 + $0x130] sm:$0xff] %v3300
          %3365 = vst [vmem:[%s350 + $0x138] sm:$0xff] %v3301
          %3366 = vst [vmem:[%s350 + $0x140] sm:$0xff] %v3302
          %3367 = vst [vmem:[%s350 + $0x148] sm:$0xff] %v3303
          %3368 = vst [vmem:[%s350 + $0x150] sm:$0xff] %v3304
          %3369 = vst [vmem:[%s350 + $0x158] sm:$0xff] %v3305
          %3370 = vst [vmem:[%s350 + $0x160] sm:$0xff] %v3306
          %3371 = vst [vmem:[%s350 + $0x168] sm:$0xff] %v3307
          %3372 = vst [vmem:[%s350 + $0x170] sm:$0xff] %v3308
          %3373 = vst [vmem:[%s350 + $0x178] sm:$0xff] %v3309
          %3374 = vst [vmem:[%s350 + $0x180] sm:$0xff] %v3310
          %3375 = vst [vmem:[%s350 + $0x188] sm:$0xff] %v3311
          %3376 = vst [vmem:[%s350 + $0x190] sm:$0xff] %v3312
          %3377 = vst [vmem:[%s350 + $0x198] sm:$0xff] %v3313
          %3378 = vst [vmem:[%s350 + $0x1a0] sm:$0xff] %v3314
          %3379 = vst [vmem:[%s350 + $0x1a8] sm:$0xff] %v3315
          %3380 = vst [vmem:[%s350 + $0x1b0] sm:$0xff] %v3316
          %3381 = vst [vmem:[%s350 + $0x1b8] sm:$0xff] %v3317
          %3382 = vst [vmem:[%s350 + $0x1c0] sm:$0xff] %v3318
          %3383 = vst [vmem:[%s350 + $0x1c8] sm:$0xff] %v3319
          %3384 = vst [vmem:[%s350 + $0x1d0] sm:$0xff] %v3320
          %3385 = vst [vmem:[%s350 + $0x1d8] sm:$0xff] %v3321
          %3386 = vst [vmem:[%s350 + $0x1e0] sm:$0xff] %v3322
          %3387 = vst [vmem:[%s350 + $0x1e8] sm:$0xff] %v3323
          %3388 = vst [vmem:[%s350 + $0x1f0] sm:$0xff] %v3324
          %3389 = vst [vmem:[%s350 + $0x1f8] sm:$0xff] %v3325
        $region56: #{tpu_custom_call.1} parent=35 // pred_fallthru
          _
        %s3390 = sand.u32 %s163, 1
        %s3391 = scalar_lea.sflag [#allocation4], %s3390
        %s3392 = sand.u32 %s163, 1
        %s3393 = smul.addr %s3392, 512
        %s3394 = scalar_lea.vmem [#allocation8], %s3393
        // Predicated region
        $region57: #{tpu_custom_call.1} parent=35 // pred_check
          %p3395 = pneg %p173
        $region58: #{tpu_custom_call.1} parent=35 // pred_check_branch
          %3397 = sbr.rel (%p3395) target = $region60
        $region59: #{tpu_custom_call.1} parent=35 // pred_region
          %s3398 = smul.u32 64, %s29
          %s3400 = ssub.s32 8192, 8192
          %3401 = vsyncadd %s3391, %s3400
          %s3402 = smul.addr %s3398, 128
          %s3403 = scalar_lea.hbm %s4, %s3402
          %s3404 = sshll.u32 %s3394, 4
          %s3405 = int_to_ptr.vmem [resolvable:$true] %s3404
          %3410 = dma.vmem_to_hbm [thread:$0]  %s3405, 8192, %s3403, %s3391, 128, 128, 8
        $region60: #{tpu_custom_call.1} parent=35 // pred_fallthru
          _
      $region36: #{tpu_custom_call.1} parent=5 // pred_fallthru
        _
      %p3411 = scmp.le.s32.totalorder 2, %s19
      // Predicated region
      $region61: #{tpu_custom_call.1} parent=5 // pred_check
        %p3412 = pneg %p3411
      $region62: #{tpu_custom_call.1} parent=5 // pred_check_branch
        %3414 = sbr.rel (%p3412) target = $region64
      $region63: #{tpu_custom_call.1} parent=5 // pred_region
        %s3415 = ssub.s32 %s19, 2
        // Predicated region
        $region65: #{tpu_custom_call.1} parent=63 // pred_check
          %p3416 = pneg %p179
        $region66: #{tpu_custom_call.1} parent=63 // pred_check_branch
          %3418 = sbr.rel (%p3416) target = $region68
        $region67: #{tpu_custom_call.1} parent=63 // pred_region
          %s3419 = sand.u32 %s164, 1
          %s3420 = scalar_lea.sflag [#allocation4], %s3419
          %s3421 = sand.u32 %s164, 1
          %s3422 = smul.addr %s3421, 512
          %s3423 = scalar_lea.vmem [#allocation8], %s3422
          %3424 = dma.done %s3420, 8192
        $region68: #{tpu_custom_call.1} parent=63 // pred_fallthru
          _
      $region64: #{tpu_custom_call.1} parent=5 // pred_fallthru
        _
    $region6: #{tpu_custom_call.1} parent=1 // loop_footer
      %s23 = sadd.s32 1, %s19
    $region7: #{tpu_custom_call.1} parent=1 // loop_footer_branch
      %18 = sbr.rel target = $region3
    $region8: #{tpu_custom_call.1} parent=1 // loop_exit
      _
    %3425 = vsyncpa [#allocation3], 1
    %s3426 = scalar_lea.sflag [#allocation3], 1
    %3427 = vsyncpa %s3426, 1
    %3428 = vsyncpa [#allocation6], 1
    %s3429 = scalar_lea.sflag [#allocation6], 1
    %3430 = vsyncpa %s3429, 1
    %3431 = vsyncpa [#allocation4], 1
    %s3432 = scalar_lea.sflag [#allocation4], 1
    %3433 = vsyncpa %s3432, 1

</llo_original>
